<compile_context>
chip_gen: v6e
topology: v6e:2x2x1
jax: 0.10.0
libtpu: 0.0.40
codegen_flags: <defaults>
</compile_context>

<pallas_src>
import functools

import numpy as np
import jax
import jax.numpy as jnp
from jax import lax
from jax.experimental import pallas as pl
from jax.experimental.pallas import tpu as pltpu

LANE = 128  # TPU lane width; Cout is padded to this so the output store is lane-dense.


def _graph_conv_kernel(tile_idx_ref, cnt_ref,              # scalar prefetch (SMEM)
                       g_ref, dest_ref, ef_ref,             # streamed edge tiles
                       w3_ref, invdeg_ref,                   # small resident params
                       out_ref, acc_ref,                     # output + scratch
                       *, chunk):
    b = pl.program_id(0)            # destination-node block   ("parallel")
    t = pl.program_id(1)            # edge-tile chunk in block  ("arbitrary")

    tile_n, lane = out_ref.shape
    tile_e, f1 = ef_ref.shape       # f1 = F + 1 (bias column folded into edge feats)
    cin = g_ref.shape[1]
    n_sub = tile_e // chunk

    @pl.when(t == 0)
    def _init():
        acc_ref[...] = jnp.zeros_like(acc_ref)

    # Chunks past this block's edge range get a clamped (already-seen) edge tile,
    # so they must be skipped to avoid double counting.
    @pl.when(t < cnt_ref[b])
    def _accumulate():
        # Static unroll over sub-chunks: tiny per-iteration live set
        # (each matmul result is immediately folded into acc_ref).
        for s in range(n_sub):
            lo = s * chunk
            g = g_ref[lo:lo + chunk, :]                     # (chunk, cin)
            ef = ef_ref[lo:lo + chunk, :]                   # (chunk, F+1), last col = 1

            # Segment selection against THIS destination-node block only.
            # Edges of other blocks / padding (dest = -1) give 0 rows.
            rel = dest_ref[:, lo:lo + chunk] - b * tile_n   # (1, chunk) int32
            row = lax.broadcasted_iota(jnp.int32, (tile_n, chunk), 0)
            sel = (row == rel).astype(jnp.float32)          # (tile_n, chunk)

            # acc[c, n, f'] += sum_e sel[n, e] * g[e, c] * ef_aug[e, f']   (MXU)
            for c in range(cin):
                zc = g[:, c:c + 1] * ef                     # (chunk, F+1)  VPU
                acc_ref[c] = acc_ref[c] + jnp.dot(
                    sel, zc, preferred_element_type=jnp.float32)

    @pl.when(t == pl.num_programs(1) - 1)
    def _finalize():
        # out[n, o] = (1/deg_n) * sum_c acc[c, n, :] @ w3[c, :, o]
        # (the filter Linear + per-edge mat-vec applied once per block, by linearity).
        res = jnp.zeros((tile_n, lane), jnp.float32)
        for c in range(cin):
            res = res + jnp.dot(acc_ref[c], w3_ref[c],
                                preferred_element_type=jnp.float32)
        # mean == sum * (1/deg); invdeg is 0 where deg == 0 (matches output.fill_(0)).
        out_ref[...] = res * invdeg_ref[...]


def graph_conv_forward(x, edgefeats, idxn, degs, wf, bf,
                       in_channels, out_channels, *,
                       tile_n=32, tile_e=512, chunk=128):
    """GraphConvModule forward.

    x: (N, Cin) f32; edgefeats: (E, F) f32; idxn: (E,) int (source node per edge,
    edges stored consecutively per destination node); degs: (Nout,) int; wf/bf:
    the filter_net Linear parameters (F, Cin*Cout) / (Cin*Cout,).
    """
    x = np.asarray(x, np.float32)
    edgefeats = np.asarray(edgefeats, np.float32)
    idxn = np.asarray(idxn, np.int64)
    degs = np.asarray(degs, np.int64)
    wf = np.asarray(wf, np.float32)
    bf = np.asarray(bf, np.float32)

    N, cin = x.shape
    E, F = edgefeats.shape
    Nout = degs.shape[0]
    assert cin == in_channels
    assert wf.shape == (F, in_channels * out_channels)
    assert bf.shape == (in_channels * out_channels,)
    assert int(degs.sum()) == E and idxn.shape == (E,)
    if E:
        assert idxn.min() >= 0 and idxn.max() < N  # torch.index_select would raise
    assert tile_e % chunk == 0 and chunk % 8 == 0 and tile_e % 128 == 0
    assert tile_n % 8 == 0
    F1 = F + 1

    # ---------------- host-side tiling / padding -----------------------------
    n_blocks = max(1, -(-Nout // tile_n))
    nout_pad = n_blocks * tile_n
    n_etiles = max(1, -(-E // tile_e))
    e_pad = n_etiles * tile_e

    cum = np.concatenate([[0], np.cumsum(degs)]).astype(np.int64)       # (Nout+1,)
    blk = np.arange(n_blocks)
    starts = cum[np.minimum(blk * tile_n, Nout)]
    ends = cum[np.minimum((blk + 1) * tile_n, Nout)]
    first_t = starts // tile_e
    last_t = np.where(ends > starts, (ends - 1) // tile_e, first_t)
    cnt = np.where(ends > starts, last_t - first_t + 1, 0).astype(np.int32)
    max_chunks = max(1, int(cnt.max()))
    tile_idx = np.minimum(first_t[:, None] + np.arange(max_chunks)[None, :],
                          last_t[:, None])
    tile_idx = np.clip(tile_idx, 0, n_etiles - 1).astype(np.int32)

    dest = np.repeat(np.arange(Nout, dtype=np.int32), degs)             # (E,)
    dest_p = np.full((e_pad,), -1, np.int32)
    dest_p[:E] = dest

    # Pre-gathered source-node rows, kept at the true Cin width (narrow stream).
    g_p = np.zeros((e_pad, cin), np.float32)
    if E:
        g_p[:E] = x[idxn]

    # Edge features with a constant 1 column so the filter_net bias is folded
    # into the same per-channel contraction.
    ef_p = np.zeros((e_pad, F1), np.float32)
    ef_p[:E, :F] = edgefeats
    ef_p[:E, F] = 1.0

    # filter_net weights reshaped once into (Cin, F+1, LANE):
    #   w3[c, f, o] = wf[f, c*Cout + o],  w3[c, F, o] = bf[c*Cout + o]
    w3 = np.zeros((cin, F1, LANE), np.float32)
    w3[:, :F, :out_channels] = wf.reshape(F, cin, out_channels).transpose(1, 0, 2)
    w3[:, F, :out_channels] = bf.reshape(cin, out_channels)

    invdeg = np.zeros((nout_pad, 1), np.float32)
    invdeg[:Nout, 0] = np.where(degs > 0, 1.0 / np.maximum(degs, 1), 0.0)

    tile_idx_j = jnp.asarray(tile_idx)
    cnt_j = jnp.asarray(cnt)
    g_j = jnp.asarray(g_p)
    dest_2d = jnp.asarray(dest_p.reshape(n_etiles, tile_e))
    ef_j = jnp.asarray(ef_p)
    w3_j = jnp.asarray(w3)
    inv_j = jnp.asarray(invdeg)

    edge_map = lambda b, t, ti, cn: (ti[b, t], 0)

    flops = (2 * E * cin * F1 * (tile_n + 1)
             + 2 * nout_pad * cin * F1 * LANE)
    bytes_accessed = (g_p.nbytes + ef_p.nbytes + dest_p.nbytes + w3.nbytes
                      + invdeg.nbytes + nout_pad * LANE * 4)
    cost = pl.CostEstimate(flops=flops, transcendentals=0,
                           bytes_accessed=bytes_accessed)

    grid_spec = pltpu.PrefetchScalarGridSpec(
        num_scalar_prefetch=2,
        grid=(n_blocks, max_chunks),
        in_specs=[
            pl.BlockSpec((tile_e, cin), edge_map),                      # gathered x rows
            pl.BlockSpec((1, tile_e), edge_map),                        # dest node ids
            pl.BlockSpec((tile_e, F1), edge_map),                       # edge feats (+1)
            pl.BlockSpec((cin, F1, LANE), lambda b, t, ti, cn: (0, 0, 0)),  # weight slab
            pl.BlockSpec((tile_n, 1), lambda b, t, ti, cn: (b, 0)),     # 1/deg
        ],
        out_specs=pl.BlockSpec((tile_n, LANE), lambda b, t, ti, cn: (b, 0)),
        scratch_shapes=[pltpu.VMEM((cin, tile_n, F1), jnp.float32)],
    )

    kernel = functools.partial(_graph_conv_kernel, chunk=chunk)
    out = pl.pallas_call(
        kernel,
        out_shape=jax.ShapeDtypeStruct((nout_pad, LANE), jnp.float32),
        grid_spec=grid_spec,
        compiler_params=pltpu.CompilerParams(
            dimension_semantics=("parallel", "arbitrary")),
        cost_estimate=cost,
    )(tile_idx_j, cnt_j, g_j, dest_2d, ef_j, w3_j, inv_j)

    return out[:Nout, :out_channels]


def reference_forward(x, edgefeats, idxn, degs, wf, bf, in_channels, out_channels):
    """Pure-numpy reference mirroring GraphConvFunction.forward (CPU branch)."""
    w = np.asarray(edgefeats) @ np.asarray(wf) + np.asarray(bf)          # (E, Cin*Cout)
    w = w.reshape(-1, in_channels, out_channels)
    gathered = np.asarray(x)[np.asarray(idxn)]                           # (E, Cin)
    prod = np.einsum('ec,eco->eo', gathered, w)                          # (E, Cout)
    out = np.zeros((len(degs), out_channels), np.float32)
    k = 0
    for i, d in enumerate(degs):
        d = int(d)
        if d > 0:
            out[i] = prod[k:k + d].mean(0)
        k += d
    return out


if __name__ == "__main__":
    in_channels, out_channels, edge_feat_dim = 4, 6, 5
    n_nodes = 200

    key = jax.random.PRNGKey(0)
    k_deg, k_x, k_ef, k_idx, k_wf, k_bf = jax.random.split(key, 6)

    # Per-destination-node in-degrees (edges stored consecutively per node);
    # includes zero-degree nodes to exercise the output.fill_(0) branch.
    degs = np.asarray(jax.random.randint(k_deg, (n_nodes,), 0, 5), np.int32)
    n_edges = int(degs.sum())

    x = jax.random.normal(k_x, (n_nodes, in_channels), dtype=jnp.float32)
    edgefeats = jax.random.normal(k_ef, (n_edges, edge_feat_dim), dtype=jnp.float32)
    idxn = jax.random.randint(k_idx, (n_edges,), 0, n_nodes, dtype=jnp.int32)

    # filter_net: single Linear(edge_feat_dim -> Cin*Cout), synthetic weights.
    wf = 0.1 * jax.random.normal(k_wf, (edge_feat_dim, in_channels * out_channels),
                                 dtype=jnp.float32)
    bf = 0.05 * jax.random.normal(k_bf, (in_channels * out_channels,),
                                  dtype=jnp.float32)

    out = graph_conv_forward(np.asarray(x), np.asarray(edgefeats), np.asarray(idxn),
                             degs, np.asarray(wf), np.asarray(bf),
                             in_channels, out_channels,
                             tile_n=32, tile_e=512, chunk=128)
    out = jax.block_until_ready(out)

    ref = reference_forward(np.asarray(x), np.asarray(edgefeats), np.asarray(idxn),
                            degs, np.asarray(wf), np.asarray(bf),
                            in_channels, out_channels)
    np.testing.assert_allclose(np.asarray(out), ref, rtol=1e-4, atol=1e-5)
    print("KERNEL_OK")
</pallas_src>

<mosaic_0001>
module attributes {stable_mosaic.version = 11 : i64} {
  func.func @_graph_conv_kernel(%arg0: i32, %arg1: i32, %arg2: memref<7x1xi32, #tpu.memory_space<smem>>, %arg3: memref<7xi32, #tpu.memory_space<smem>>, %arg4: memref<512x4xf32, #tpu.memory_space<vmem>>, %arg5: memref<1x512xi32, #tpu.memory_space<vmem>>, %arg6: memref<512x6xf32, #tpu.memory_space<vmem>>, %arg7: memref<4x6x128xf32, #tpu.memory_space<vmem>>, %arg8: memref<32x1xf32, #tpu.memory_space<vmem>>, %arg9: memref<32x128xf32, #tpu.memory_space<vmem>>, %arg10: memref<4x32x6xf32, #tpu.memory_space<vmem>>) attributes {dimension_semantics = [#tpu.dimension_semantics<parallel>, #tpu.dimension_semantics<arbitrary>], iteration_bounds = array<i64: 7, 1>, scalar_prefetch = 2 : i64, scratch_operands = 1 : i64, tpu.core_type = #tpu.core_type<tc>, window_params = [{transform_indices = @transform_0, window_bounds = array<i64: 512, 4>}, {transform_indices = @transform_1, window_bounds = array<i64: 1, 512>}, {transform_indices = @transform_2, window_bounds = array<i64: 512, 6>}, {pipeline_mode = #tpu.pipeline_mode<synchronous>, transform_indices = @transform_3, window_bounds = array<i64: 4, 6, 128>}, {transform_indices = @transform_4, window_bounds = array<i64: 32, 1>}, {transform_indices = @transform_5, window_bounds = array<i64: 32, 128>}]} {
    %c0_i32 = arith.constant 0 : i32
    %0 = arith.cmpi eq, %arg1, %c0_i32 : i32
    %1 = arith.extui %0 : i1 to i32
    %c0_i32_0 = arith.constant 0 : i32
    %2 = arith.cmpi ne, %1, %c0_i32_0 : i32
    scf.if %2 {
      %cst = arith.constant 0.000000e+00 : f32
      %11 = vector.broadcast %cst : f32 to vector<4x32x6xf32>
      %c0 = arith.constant 0 : index
      %c0_4 = arith.constant 0 : index
      %c0_5 = arith.constant 0 : index
      %12 = vector.load %arg10[%c0, %c0_4, %c0_5] : memref<4x32x6xf32, #tpu.memory_space<vmem>>, vector<4x32x6xf32>
      tpu.vector_store %arg10[%c0, %c0_4, %c0_5], %11 {strides = array<i32>} : memref<4x32x6xf32, #tpu.memory_space<vmem>>, vector<4x32x6xf32>,
    } else {
    }
    %3 = arith.index_cast %arg0 : i32 to index
    %4 = memref.load %arg3[%3] : memref<7xi32, #tpu.memory_space<smem>>
    %5 = arith.cmpi slt, %arg1, %4 : i32
    %6 = arith.extui %5 : i1 to i32
    %c0_i32_1 = arith.constant 0 : i32
    %7 = arith.cmpi ne, %6, %c0_i32_1 : i32
    scf.if %7 {
      %c0 = arith.constant 0 : index
      %c0_4 = arith.constant 0 : index
      %11 = vector.load %arg4[%c0, %c0_4] : memref<512x4xf32, #tpu.memory_space<vmem>>, vector<128x4xf32>
      %c0_5 = arith.constant 0 : index
      %c0_6 = arith.constant 0 : index
      %12 = vector.load %arg6[%c0_5, %c0_6] : memref<512x6xf32, #tpu.memory_space<vmem>>, vector<128x6xf32>
      %c0_7 = arith.constant 0 : index
      %c0_8 = arith.constant 0 : index
      %13 = vector.load %arg5[%c0_7, %c0_8] : memref<1x512xi32, #tpu.memory_space<vmem>>, vector<1x128xi32>
      %c32_i32 = arith.constant 32 : i32
      %14 = arith.muli %arg0, %c32_i32 : i32
      %15 = vector.broadcast %14 : i32 to vector<1x128xi32>
      %16 = arith.subi %13, %15 : vector<1x128xi32>
      %17 = tpu.iota {dimensions = array<i32: 0>} : vector<32x128xi32>
      %18 = vector.broadcast %16 : vector<1x128xi32> to vector<32x128xi32>
      %19 = arith.cmpi eq, %17, %18 : vector<32x128xi32>
      %20 = arith.extui %19 : vector<32x128xi1> to vector<32x128xi32>
      %21 = arith.sitofp %20 : vector<32x128xi32> to vector<32x128xf32>
      %22 = vector.extract_strided_slice %11 {offsets = [0, 0], sizes = [128, 1], strides = [1, 1]} : vector<128x4xf32> to vector<128x1xf32>
      %23 = vector.broadcast %22 : vector<128x1xf32> to vector<128x6xf32>
      %24 = arith.mulf %23, %12 : vector<128x6xf32>
      %c0_9 = arith.constant 0 : index
      %c0_10 = arith.constant 0 : index
      %c0_11 = arith.constant 0 : index
      %25 = vector.load %arg10[%c0_9, %c0_10, %c0_11] : memref<4x32x6xf32, #tpu.memory_space<vmem>>, vector<1x32x6xf32>
      %26 = vector.shape_cast %25 : vector<1x32x6xf32> to vector<32x6xf32>
      %cst = arith.constant dense<0.000000e+00> : vector<32x6xf32>
      %27 = tpu.matmul %21, %24, %cst {dimension_numbers = #tpu.dot_dimension_numbers<[1], [0], [0], [1], [0, 0, 1, 1], [], []>} : vector<32x128xf32>, vector<128x6xf32>, vector<32x6xf32> -> vector<32x6xf32>
      %28 = arith.addf %26, %27 : vector<32x6xf32>
      %c0_12 = arith.constant 0 : index
      %c0_13 = arith.constant 0 : index
      %c0_14 = arith.constant 0 : index
      %29 = vector.load %arg10[%c0_12, %c0_13, %c0_14] : memref<4x32x6xf32, #tpu.memory_space<vmem>>, vector<1x32x6xf32>
      %30 = vector.shape_cast %29 : vector<1x32x6xf32> to vector<32x6xf32>
      %31 = vector.shape_cast %28 : vector<32x6xf32> to vector<1x32x6xf32>
      tpu.vector_store %arg10[%c0_12, %c0_13, %c0_14], %31 {strides = array<i32>} : memref<4x32x6xf32, #tpu.memory_space<vmem>>, vector<1x32x6xf32>,
      %32 = vector.extract_strided_slice %11 {offsets = [0, 1], sizes = [128, 1], strides = [1, 1]} : vector<128x4xf32> to vector<128x1xf32>
      %33 = vector.broadcast %32 : vector<128x1xf32> to vector<128x6xf32>
      %34 = arith.mulf %33, %12 : vector<128x6xf32>
      %c1 = arith.constant 1 : index
      %c0_15 = arith.constant 0 : index
      %c0_16 = arith.constant 0 : index
      %35 = vector.load %arg10[%c1, %c0_15, %c0_16] : memref<4x32x6xf32, #tpu.memory_space<vmem>>, vector<1x32x6xf32>
      %36 = vector.shape_cast %35 : vector<1x32x6xf32> to vector<32x6xf32>
      %cst_17 = arith.constant dense<0.000000e+00> : vector<32x6xf32>
      %37 = tpu.matmul %21, %34, %cst_17 {dimension_numbers = #tpu.dot_dimension_numbers<[1], [0], [0], [1], [0, 0, 1, 1], [], []>} : vector<32x128xf32>, vector<128x6xf32>, vector<32x6xf32> -> vector<32x6xf32>
      %38 = arith.addf %36, %37 : vector<32x6xf32>
      %c1_18 = arith.constant 1 : index
      %c0_19 = arith.constant 0 : index
      %c0_20 = arith.constant 0 : index
      %39 = vector.load %arg10[%c1_18, %c0_19, %c0_20] : memref<4x32x6xf32, #tpu.memory_space<vmem>>, vector<1x32x6xf32>
      %40 = vector.shape_cast %39 : vector<1x32x6xf32> to vector<32x6xf32>
      %41 = vector.shape_cast %38 : vector<32x6xf32> to vector<1x32x6xf32>
      tpu.vector_store %arg10[%c1_18, %c0_19, %c0_20], %41 {strides = array<i32>} : memref<4x32x6xf32, #tpu.memory_space<vmem>>, vector<1x32x6xf32>,
      %42 = vector.extract_strided_slice %11 {offsets = [0, 2], sizes = [128, 1], strides = [1, 1]} : vector<128x4xf32> to vector<128x1xf32>
      %43 = vector.broadcast %42 : vector<128x1xf32> to vector<128x6xf32>
      %44 = arith.mulf %43, %12 : vector<128x6xf32>
      %c2 = arith.constant 2 : index
      %c0_21 = arith.constant 0 : index
      %c0_22 = arith.constant 0 : index
      %45 = vector.load %arg10[%c2, %c0_21, %c0_22] : memref<4x32x6xf32, #tpu.memory_space<vmem>>, vector<1x32x6xf32>
      %46 = vector.shape_cast %45 : vector<1x32x6xf32> to vector<32x6xf32>
      %cst_23 = arith.constant dense<0.000000e+00> : vector<32x6xf32>
      %47 = tpu.matmul %21, %44, %cst_23 {dimension_numbers = #tpu.dot_dimension_numbers<[1], [0], [0], [1], [0, 0, 1, 1], [], []>} : vector<32x128xf32>, vector<128x6xf32>, vector<32x6xf32> -> vector<32x6xf32>
      %48 = arith.addf %46, %47 : vector<32x6xf32>
      %c2_24 = arith.constant 2 : index
      %c0_25 = arith.constant 0 : index
      %c0_26 = arith.constant 0 : index
      %49 = vector.load %arg10[%c2_24, %c0_25, %c0_26] : memref<4x32x6xf32, #tpu.memory_space<vmem>>, vector<1x32x6xf32>
      %50 = vector.shape_cast %49 : vector<1x32x6xf32> to vector<32x6xf32>
      %51 = vector.shape_cast %48 : vector<32x6xf32> to vector<1x32x6xf32>
      tpu.vector_store %arg10[%c2_24, %c0_25, %c0_26], %51 {strides = array<i32>} : memref<4x32x6xf32, #tpu.memory_space<vmem>>, vector<1x32x6xf32>,
      %52 = vector.extract_strided_slice %11 {offsets = [0, 3], sizes = [128, 1], strides = [1, 1]} : vector<128x4xf32> to vector<128x1xf32>
      %53 = vector.broadcast %52 : vector<128x1xf32> to vector<128x6xf32>
      %54 = arith.mulf %53, %12 : vector<128x6xf32>
      %c3 = arith.constant 3 : index
      %c0_27 = arith.constant 0 : index
      %c0_28 = arith.constant 0 : index
      %55 = vector.load %arg10[%c3, %c0_27, %c0_28] : memref<4x32x6xf32, #tpu.memory_space<vmem>>, vector<1x32x6xf32>
      %56 = vector.shape_cast %55 : vector<1x32x6xf32> to vector<32x6xf32>
      %cst_29 = arith.constant dense<0.000000e+00> : vector<32x6xf32>
      %57 = tpu.matmul %21, %54, %cst_29 {dimension_numbers = #tpu.dot_dimension_numbers<[1], [0], [0], [1], [0, 0, 1, 1], [], []>} : vector<32x128xf32>, vector<128x6xf32>, vector<32x6xf32> -> vector<32x6xf32>
      %58 = arith.addf %56, %57 : vector<32x6xf32>
      %c3_30 = arith.constant 3 : index
      %c0_31 = arith.constant 0 : index
      %c0_32 = arith.constant 0 : index
      %59 = vector.load %arg10[%c3_30, %c0_31, %c0_32] : memref<4x32x6xf32, #tpu.memory_space<vmem>>, vector<1x32x6xf32>
      %60 = vector.shape_cast %59 : vector<1x32x6xf32> to vector<32x6xf32>
      %61 = vector.shape_cast %58 : vector<32x6xf32> to vector<1x32x6xf32>
      tpu.vector_store %arg10[%c3_30, %c0_31, %c0_32], %61 {strides = array<i32>} : memref<4x32x6xf32, #tpu.memory_space<vmem>>, vector<1x32x6xf32>,
      %c128 = arith.constant 128 : index
      %c0_33 = arith.constant 0 : index
      %62 = vector.load %arg4[%c128, %c0_33] : memref<512x4xf32, #tpu.memory_space<vmem>>, vector<128x4xf32>
      %c128_34 = arith.constant 128 : index
      %c0_35 = arith.constant 0 : index
      %63 = vector.load %arg6[%c128_34, %c0_35] : memref<512x6xf32, #tpu.memory_space<vmem>>, vector<128x6xf32>
      %c0_36 = arith.constant 0 : index
      %c128_37 = arith.constant 128 : index
      %64 = vector.load %arg5[%c0_36, %c128_37] : memref<1x512xi32, #tpu.memory_space<vmem>>, vector<1x128xi32>
      %c32_i32_38 = arith.constant 32 : i32
      %65 = arith.muli %arg0, %c32_i32_38 : i32
      %66 = vector.broadcast %65 : i32 to vector<1x128xi32>
      %67 = arith.subi %64, %66 : vector<1x128xi32>
      %68 = tpu.iota {dimensions = array<i32: 0>} : vector<32x128xi32>
      %69 = vector.broadcast %67 : vector<1x128xi32> to vector<32x128xi32>
      %70 = arith.cmpi eq, %68, %69 : vector<32x128xi32>
      %71 = arith.extui %70 : vector<32x128xi1> to vector<32x128xi32>
      %72 = arith.sitofp %71 : vector<32x128xi32> to vector<32x128xf32>
      %73 = vector.extract_strided_slice %62 {offsets = [0, 0], sizes = [128, 1], strides = [1, 1]} : vector<128x4xf32> to vector<128x1xf32>
      %74 = vector.broadcast %73 : vector<128x1xf32> to vector<128x6xf32>
      %75 = arith.mulf %74, %63 : vector<128x6xf32>
      %c0_39 = arith.constant 0 : index
      %c0_40 = arith.constant 0 : index
      %c0_41 = arith.constant 0 : index
      %76 = vector.load %arg10[%c0_39, %c0_40, %c0_41] : memref<4x32x6xf32, #tpu.memory_space<vmem>>, vector<1x32x6xf32>
      %77 = vector.shape_cast %76 : vector<1x32x6xf32> to vector<32x6xf32>
      %cst_42 = arith.constant dense<0.000000e+00> : vector<32x6xf32>
      %78 = tpu.matmul %72, %75, %cst_42 {dimension_numbers = #tpu.dot_dimension_numbers<[1], [0], [0], [1], [0, 0, 1, 1], [], []>} : vector<32x128xf32>, vector<128x6xf32>, vector<32x6xf32> -> vector<32x6xf32>
      %79 = arith.addf %77, %78 : vector<32x6xf32>
      %c0_43 = arith.constant 0 : index
      %c0_44 = arith.constant 0 : index
      %c0_45 = arith.constant 0 : index
      %80 = vector.load %arg10[%c0_43, %c0_44, %c0_45] : memref<4x32x6xf32, #tpu.memory_space<vmem>>, vector<1x32x6xf32>
      %81 = vector.shape_cast %80 : vector<1x32x6xf32> to vector<32x6xf32>
      %82 = vector.shape_cast %79 : vector<32x6xf32> to vector<1x32x6xf32>
      tpu.vector_store %arg10[%c0_43, %c0_44, %c0_45], %82 {strides = array<i32>} : memref<4x32x6xf32, #tpu.memory_space<vmem>>, vector<1x32x6xf32>,
      %83 = vector.extract_strided_slice %62 {offsets = [0, 1], sizes = [128, 1], strides = [1, 1]} : vector<128x4xf32> to vector<128x1xf32>
      %84 = vector.broadcast %83 : vector<128x1xf32> to vector<128x6xf32>
      %85 = arith.mulf %84, %63 : vector<128x6xf32>
      %c1_46 = arith.constant 1 : index
      %c0_47 = arith.constant 0 : index
      %c0_48 = arith.constant 0 : index
      %86 = vector.load %arg10[%c1_46, %c0_47, %c0_48] : memref<4x32x6xf32, #tpu.memory_space<vmem>>, vector<1x32x6xf32>
      %87 = vector.shape_cast %86 : vector<1x32x6xf32> to vector<32x6xf32>
      %cst_49 = arith.constant dense<0.000000e+00> : vector<32x6xf32>
      %88 = tpu.matmul %72, %85, %cst_49 {dimension_numbers = #tpu.dot_dimension_numbers<[1], [0], [0], [1], [0, 0, 1, 1], [], []>} : vector<32x128xf32>, vector<128x6xf32>, vector<32x6xf32> -> vector<32x6xf32>
      %89 = arith.addf %87, %88 : vector<32x6xf32>
      %c1_50 = arith.constant 1 : index
      %c0_51 = arith.constant 0 : index
      %c0_52 = arith.constant 0 : index
      %90 = vector.load %arg10[%c1_50, %c0_51, %c0_52] : memref<4x32x6xf32, #tpu.memory_space<vmem>>, vector<1x32x6xf32>
      %91 = vector.shape_cast %90 : vector<1x32x6xf32> to vector<32x6xf32>
      %92 = vector.shape_cast %89 : vector<32x6xf32> to vector<1x32x6xf32>
      tpu.vector_store %arg10[%c1_50, %c0_51, %c0_52], %92 {strides = array<i32>} : memref<4x32x6xf32, #tpu.memory_space<vmem>>, vector<1x32x6xf32>,
      %93 = vector.extract_strided_slice %62 {offsets = [0, 2], sizes = [128, 1], strides = [1, 1]} : vector<128x4xf32> to vector<128x1xf32>
      %94 = vector.broadcast %93 : vector<128x1xf32> to vector<128x6xf32>
      %95 = arith.mulf %94, %63 : vector<128x6xf32>
      %c2_53 = arith.constant 2 : index
      %c0_54 = arith.constant 0 : index
      %c0_55 = arith.constant 0 : index
      %96 = vector.load %arg10[%c2_53, %c0_54, %c0_55] : memref<4x32x6xf32, #tpu.memory_space<vmem>>, vector<1x32x6xf32>
      %97 = vector.shape_cast %96 : vector<1x32x6xf32> to vector<32x6xf32>
      %cst_56 = arith.constant dense<0.000000e+00> : vector<32x6xf32>
      %98 = tpu.matmul %72, %95, %cst_56 {dimension_numbers = #tpu.dot_dimension_numbers<[1], [0], [0], [1], [0, 0, 1, 1], [], []>} : vector<32x128xf32>, vector<128x6xf32>, vector<32x6xf32> -> vector<32x6xf32>
      %99 = arith.addf %97, %98 : vector<32x6xf32>
      %c2_57 = arith.constant 2 : index
      %c0_58 = arith.constant 0 : index
      %c0_59 = arith.constant 0 : index
      %100 = vector.load %arg10[%c2_57, %c0_58, %c0_59] : memref<4x32x6xf32, #tpu.memory_space<vmem>>, vector<1x32x6xf32>
      %101 = vector.shape_cast %100 : vector<1x32x6xf32> to vector<32x6xf32>
      %102 = vector.shape_cast %99 : vector<32x6xf32> to vector<1x32x6xf32>
      tpu.vector_store %arg10[%c2_57, %c0_58, %c0_59], %102 {strides = array<i32>} : memref<4x32x6xf32, #tpu.memory_space<vmem>>, vector<1x32x6xf32>,
      %103 = vector.extract_strided_slice %62 {offsets = [0, 3], sizes = [128, 1], strides = [1, 1]} : vector<128x4xf32> to vector<128x1xf32>
      %104 = vector.broadcast %103 : vector<128x1xf32> to vector<128x6xf32>
      %105 = arith.mulf %104, %63 : vector<128x6xf32>
      %c3_60 = arith.constant 3 : index
      %c0_61 = arith.constant 0 : index
      %c0_62 = arith.constant 0 : index
      %106 = vector.load %arg10[%c3_60, %c0_61, %c0_62] : memref<4x32x6xf32, #tpu.memory_space<vmem>>, vector<1x32x6xf32>
      %107 = vector.shape_cast %106 : vector<1x32x6xf32> to vector<32x6xf32>
      %cst_63 = arith.constant dense<0.000000e+00> : vector<32x6xf32>
      %108 = tpu.matmul %72, %105, %cst_63 {dimension_numbers = #tpu.dot_dimension_numbers<[1], [0], [0], [1], [0, 0, 1, 1], [], []>} : vector<32x128xf32>, vector<128x6xf32>, vector<32x6xf32> -> vector<32x6xf32>
      %109 = arith.addf %107, %108 : vector<32x6xf32>
      %c3_64 = arith.constant 3 : index
      %c0_65 = arith.constant 0 : index
      %c0_66 = arith.constant 0 : index
      %110 = vector.load %arg10[%c3_64, %c0_65, %c0_66] : memref<4x32x6xf32, #tpu.memory_space<vmem>>, vector<1x32x6xf32>
      %111 = vector.shape_cast %110 : vector<1x32x6xf32> to vector<32x6xf32>
      %112 = vector.shape_cast %109 : vector<32x6xf32> to vector<1x32x6xf32>
      tpu.vector_store %arg10[%c3_64, %c0_65, %c0_66], %112 {strides = array<i32>} : memref<4x32x6xf32, #tpu.memory_space<vmem>>, vector<1x32x6xf32>,
      %c256 = arith.constant 256 : index
      %c0_67 = arith.constant 0 : index
      %113 = vector.load %arg4[%c256, %c0_67] : memref<512x4xf32, #tpu.memory_space<vmem>>, vector<128x4xf32>
      %c256_68 = arith.constant 256 : index
      %c0_69 = arith.constant 0 : index
      %114 = vector.load %arg6[%c256_68, %c0_69] : memref<512x6xf32, #tpu.memory_space<vmem>>, vector<128x6xf32>
      %c0_70 = arith.constant 0 : index
      %c256_71 = arith.constant 256 : index
      %115 = vector.load %arg5[%c0_70, %c256_71] : memref<1x512xi32, #tpu.memory_space<vmem>>, vector<1x128xi32>
      %c32_i32_72 = arith.constant 32 : i32
      %116 = arith.muli %arg0, %c32_i32_72 : i32
      %117 = vector.broadcast %116 : i32 to vector<1x128xi32>
      %118 = arith.subi %115, %117 : vector<1x128xi32>
      %119 = tpu.iota {dimensions = array<i32: 0>} : vector<32x128xi32>
      %120 = vector.broadcast %118 : vector<1x128xi32> to vector<32x128xi32>
      %121 = arith.cmpi eq, %119, %120 : vector<32x128xi32>
      %122 = arith.extui %121 : vector<32x128xi1> to vector<32x128xi32>
      %123 = arith.sitofp %122 : vector<32x128xi32> to vector<32x128xf32>
      %124 = vector.extract_strided_slice %113 {offsets = [0, 0], sizes = [128, 1], strides = [1, 1]} : vector<128x4xf32> to vector<128x1xf32>
      %125 = vector.broadcast %124 : vector<128x1xf32> to vector<128x6xf32>
      %126 = arith.mulf %125, %114 : vector<128x6xf32>
      %c0_73 = arith.constant 0 : index
      %c0_74 = arith.constant 0 : index
      %c0_75 = arith.constant 0 : index
      %127 = vector.load %arg10[%c0_73, %c0_74, %c0_75] : memref<4x32x6xf32, #tpu.memory_space<vmem>>, vector<1x32x6xf32>
      %128 = vector.shape_cast %127 : vector<1x32x6xf32> to vector<32x6xf32>
      %cst_76 = arith.constant dense<0.000000e+00> : vector<32x6xf32>
      %129 = tpu.matmul %123, %126, %cst_76 {dimension_numbers = #tpu.dot_dimension_numbers<[1], [0], [0], [1], [0, 0, 1, 1], [], []>} : vector<32x128xf32>, vector<128x6xf32>, vector<32x6xf32> -> vector<32x6xf32>
      %130 = arith.addf %128, %129 : vector<32x6xf32>
      %c0_77 = arith.constant 0 : index
      %c0_78 = arith.constant 0 : index
      %c0_79 = arith.constant 0 : index
      %131 = vector.load %arg10[%c0_77, %c0_78, %c0_79] : memref<4x32x6xf32, #tpu.memory_space<vmem>>, vector<1x32x6xf32>
      %132 = vector.shape_cast %131 : vector<1x32x6xf32> to vector<32x6xf32>
      %133 = vector.shape_cast %130 : vector<32x6xf32> to vector<1x32x6xf32>
      tpu.vector_store %arg10[%c0_77, %c0_78, %c0_79], %133 {strides = array<i32>} : memref<4x32x6xf32, #tpu.memory_space<vmem>>, vector<1x32x6xf32>,
      %134 = vector.extract_strided_slice %113 {offsets = [0, 1], sizes = [128, 1], strides = [1, 1]} : vector<128x4xf32> to vector<128x1xf32>
      %135 = vector.broadcast %134 : vector<128x1xf32> to vector<128x6xf32>
      %136 = arith.mulf %135, %114 : vector<128x6xf32>
      %c1_80 = arith.constant 1 : index
      %c0_81 = arith.constant 0 : index
      %c0_82 = arith.constant 0 : index
      %137 = vector.load %arg10[%c1_80, %c0_81, %c0_82] : memref<4x32x6xf32, #tpu.memory_space<vmem>>, vector<1x32x6xf32>
      %138 = vector.shape_cast %137 : vector<1x32x6xf32> to vector<32x6xf32>
      %cst_83 = arith.constant dense<0.000000e+00> : vector<32x6xf32>
      %139 = tpu.matmul %123, %136, %cst_83 {dimension_numbers = #tpu.dot_dimension_numbers<[1], [0], [0], [1], [0, 0, 1, 1], [], []>} : vector<32x128xf32>, vector<128x6xf32>, vector<32x6xf32> -> vector<32x6xf32>
      %140 = arith.addf %138, %139 : vector<32x6xf32>
      %c1_84 = arith.constant 1 : index
      %c0_85 = arith.constant 0 : index
      %c0_86 = arith.constant 0 : index
      %141 = vector.load %arg10[%c1_84, %c0_85, %c0_86] : memref<4x32x6xf32, #tpu.memory_space<vmem>>, vector<1x32x6xf32>
      %142 = vector.shape_cast %141 : vector<1x32x6xf32> to vector<32x6xf32>
      %143 = vector.shape_cast %140 : vector<32x6xf32> to vector<1x32x6xf32>
      tpu.vector_store %arg10[%c1_84, %c0_85, %c0_86], %143 {strides = array<i32>} : memref<4x32x6xf32, #tpu.memory_space<vmem>>, vector<1x32x6xf32>,
      %144 = vector.extract_strided_slice %113 {offsets = [0, 2], sizes = [128, 1], strides = [1, 1]} : vector<128x4xf32> to vector<128x1xf32>
      %145 = vector.broadcast %144 : vector<128x1xf32> to vector<128x6xf32>
      %146 = arith.mulf %145, %114 : vector<128x6xf32>
      %c2_87 = arith.constant 2 : index
      %c0_88 = arith.constant 0 : index
      %c0_89 = arith.constant 0 : index
      %147 = vector.load %arg10[%c2_87, %c0_88, %c0_89] : memref<4x32x6xf32, #tpu.memory_space<vmem>>, vector<1x32x6xf32>
      %148 = vector.shape_cast %147 : vector<1x32x6xf32> to vector<32x6xf32>
      %cst_90 = arith.constant dense<0.000000e+00> : vector<32x6xf32>
      %149 = tpu.matmul %123, %146, %cst_90 {dimension_numbers = #tpu.dot_dimension_numbers<[1], [0], [0], [1], [0, 0, 1, 1], [], []>} : vector<32x128xf32>, vector<128x6xf32>, vector<32x6xf32> -> vector<32x6xf32>
      %150 = arith.addf %148, %149 : vector<32x6xf32>
      %c2_91 = arith.constant 2 : index
      %c0_92 = arith.constant 0 : index
      %c0_93 = arith.constant 0 : index
      %151 = vector.load %arg10[%c2_91, %c0_92, %c0_93] : memref<4x32x6xf32, #tpu.memory_space<vmem>>, vector<1x32x6xf32>
      %152 = vector.shape_cast %151 : vector<1x32x6xf32> to vector<32x6xf32>
      %153 = vector.shape_cast %150 : vector<32x6xf32> to vector<1x32x6xf32>
      tpu.vector_store %arg10[%c2_91, %c0_92, %c0_93], %153 {strides = array<i32>} : memref<4x32x6xf32, #tpu.memory_space<vmem>>, vector<1x32x6xf32>,
      %154 = vector.extract_strided_slice %113 {offsets = [0, 3], sizes = [128, 1], strides = [1, 1]} : vector<128x4xf32> to vector<128x1xf32>
      %155 = vector.broadcast %154 : vector<128x1xf32> to vector<128x6xf32>
      %156 = arith.mulf %155, %114 : vector<128x6xf32>
      %c3_94 = arith.constant 3 : index
      %c0_95 = arith.constant 0 : index
      %c0_96 = arith.constant 0 : index
      %157 = vector.load %arg10[%c3_94, %c0_95, %c0_96] : memref<4x32x6xf32, #tpu.memory_space<vmem>>, vector<1x32x6xf32>
      %158 = vector.shape_cast %157 : vector<1x32x6xf32> to vector<32x6xf32>
      %cst_97 = arith.constant dense<0.000000e+00> : vector<32x6xf32>
      %159 = tpu.matmul %123, %156, %cst_97 {dimension_numbers = #tpu.dot_dimension_numbers<[1], [0], [0], [1], [0, 0, 1, 1], [], []>} : vector<32x128xf32>, vector<128x6xf32>, vector<32x6xf32> -> vector<32x6xf32>
      %160 = arith.addf %158, %159 : vector<32x6xf32>
      %c3_98 = arith.constant 3 : index
      %c0_99 = arith.constant 0 : index
      %c0_100 = arith.constant 0 : index
      %161 = vector.load %arg10[%c3_98, %c0_99, %c0_100] : memref<4x32x6xf32, #tpu.memory_space<vmem>>, vector<1x32x6xf32>
      %162 = vector.shape_cast %161 : vector<1x32x6xf32> to vector<32x6xf32>
      %163 = vector.shape_cast %160 : vector<32x6xf32> to vector<1x32x6xf32>
      tpu.vector_store %arg10[%c3_98, %c0_99, %c0_100], %163 {strides = array<i32>} : memref<4x32x6xf32, #tpu.memory_space<vmem>>, vector<1x32x6xf32>,
      %c384 = arith.constant 384 : index
      %c0_101 = arith.constant 0 : index
      %164 = vector.load %arg4[%c384, %c0_101] : memref<512x4xf32, #tpu.memory_space<vmem>>, vector<128x4xf32>
      %c384_102 = arith.constant 384 : index
      %c0_103 = arith.constant 0 : index
      %165 = vector.load %arg6[%c384_102, %c0_103] : memref<512x6xf32, #tpu.memory_space<vmem>>, vector<128x6xf32>
      %c0_104 = arith.constant 0 : index
      %c384_105 = arith.constant 384 : index
      %166 = vector.load %arg5[%c0_104, %c384_105] : memref<1x512xi32, #tpu.memory_space<vmem>>, vector<1x128xi32>
      %c32_i32_106 = arith.constant 32 : i32
      %167 = arith.muli %arg0, %c32_i32_106 : i32
      %168 = vector.broadcast %167 : i32 to vector<1x128xi32>
      %169 = arith.subi %166, %168 : vector<1x128xi32>
      %170 = tpu.iota {dimensions = array<i32: 0>} : vector<32x128xi32>
      %171 = vector.broadcast %169 : vector<1x128xi32> to vector<32x128xi32>
      %172 = arith.cmpi eq, %170, %171 : vector<32x128xi32>
      %173 = arith.extui %172 : vector<32x128xi1> to vector<32x128xi32>
      %174 = arith.sitofp %173 : vector<32x128xi32> to vector<32x128xf32>
      %175 = vector.extract_strided_slice %164 {offsets = [0, 0], sizes = [128, 1], strides = [1, 1]} : vector<128x4xf32> to vector<128x1xf32>
      %176 = vector.broadcast %175 : vector<128x1xf32> to vector<128x6xf32>
      %177 = arith.mulf %176, %165 : vector<128x6xf32>
      %c0_107 = arith.constant 0 : index
      %c0_108 = arith.constant 0 : index
      %c0_109 = arith.constant 0 : index
      %178 = vector.load %arg10[%c0_107, %c0_108, %c0_109] : memref<4x32x6xf32, #tpu.memory_space<vmem>>, vector<1x32x6xf32>
      %179 = vector.shape_cast %178 : vector<1x32x6xf32> to vector<32x6xf32>
      %cst_110 = arith.constant dense<0.000000e+00> : vector<32x6xf32>
      %180 = tpu.matmul %174, %177, %cst_110 {dimension_numbers = #tpu.dot_dimension_numbers<[1], [0], [0], [1], [0, 0, 1, 1], [], []>} : vector<32x128xf32>, vector<128x6xf32>, vector<32x6xf32> -> vector<32x6xf32>
      %181 = arith.addf %179, %180 : vector<32x6xf32>
      %c0_111 = arith.constant 0 : index
      %c0_112 = arith.constant 0 : index
      %c0_113 = arith.constant 0 : index
      %182 = vector.load %arg10[%c0_111, %c0_112, %c0_113] : memref<4x32x6xf32, #tpu.memory_space<vmem>>, vector<1x32x6xf32>
      %183 = vector.shape_cast %182 : vector<1x32x6xf32> to vector<32x6xf32>
      %184 = vector.shape_cast %181 : vector<32x6xf32> to vector<1x32x6xf32>
      tpu.vector_store %arg10[%c0_111, %c0_112, %c0_113], %184 {strides = array<i32>} : memref<4x32x6xf32, #tpu.memory_space<vmem>>, vector<1x32x6xf32>,
      %185 = vector.extract_strided_slice %164 {offsets = [0, 1], sizes = [128, 1], strides = [1, 1]} : vector<128x4xf32> to vector<128x1xf32>
      %186 = vector.broadcast %185 : vector<128x1xf32> to vector<128x6xf32>
      %187 = arith.mulf %186, %165 : vector<128x6xf32>
      %c1_114 = arith.constant 1 : index
      %c0_115 = arith.constant 0 : index
      %c0_116 = arith.constant 0 : index
      %188 = vector.load %arg10[%c1_114, %c0_115, %c0_116] : memref<4x32x6xf32, #tpu.memory_space<vmem>>, vector<1x32x6xf32>
      %189 = vector.shape_cast %188 : vector<1x32x6xf32> to vector<32x6xf32>
      %cst_117 = arith.constant dense<0.000000e+00> : vector<32x6xf32>
      %190 = tpu.matmul %174, %187, %cst_117 {dimension_numbers = #tpu.dot_dimension_numbers<[1], [0], [0], [1], [0, 0, 1, 1], [], []>} : vector<32x128xf32>, vector<128x6xf32>, vector<32x6xf32> -> vector<32x6xf32>
      %191 = arith.addf %189, %190 : vector<32x6xf32>
      %c1_118 = arith.constant 1 : index
      %c0_119 = arith.constant 0 : index
      %c0_120 = arith.constant 0 : index
      %192 = vector.load %arg10[%c1_118, %c0_119, %c0_120] : memref<4x32x6xf32, #tpu.memory_space<vmem>>, vector<1x32x6xf32>
      %193 = vector.shape_cast %192 : vector<1x32x6xf32> to vector<32x6xf32>
      %194 = vector.shape_cast %191 : vector<32x6xf32> to vector<1x32x6xf32>
      tpu.vector_store %arg10[%c1_118, %c0_119, %c0_120], %194 {strides = array<i32>} : memref<4x32x6xf32, #tpu.memory_space<vmem>>, vector<1x32x6xf32>,
      %195 = vector.extract_strided_slice %164 {offsets = [0, 2], sizes = [128, 1], strides = [1, 1]} : vector<128x4xf32> to vector<128x1xf32>
      %196 = vector.broadcast %195 : vector<128x1xf32> to vector<128x6xf32>
      %197 = arith.mulf %196, %165 : vector<128x6xf32>
      %c2_121 = arith.constant 2 : index
      %c0_122 = arith.constant 0 : index
      %c0_123 = arith.constant 0 : index
      %198 = vector.load %arg10[%c2_121, %c0_122, %c0_123] : memref<4x32x6xf32, #tpu.memory_space<vmem>>, vector<1x32x6xf32>
      %199 = vector.shape_cast %198 : vector<1x32x6xf32> to vector<32x6xf32>
      %cst_124 = arith.constant dense<0.000000e+00> : vector<32x6xf32>
      %200 = tpu.matmul %174, %197, %cst_124 {dimension_numbers = #tpu.dot_dimension_numbers<[1], [0], [0], [1], [0, 0, 1, 1], [], []>} : vector<32x128xf32>, vector<128x6xf32>, vector<32x6xf32> -> vector<32x6xf32>
      %201 = arith.addf %199, %200 : vector<32x6xf32>
      %c2_125 = arith.constant 2 : index
      %c0_126 = arith.constant 0 : index
      %c0_127 = arith.constant 0 : index
      %202 = vector.load %arg10[%c2_125, %c0_126, %c0_127] : memref<4x32x6xf32, #tpu.memory_space<vmem>>, vector<1x32x6xf32>
      %203 = vector.shape_cast %202 : vector<1x32x6xf32> to vector<32x6xf32>
      %204 = vector.shape_cast %201 : vector<32x6xf32> to vector<1x32x6xf32>
      tpu.vector_store %arg10[%c2_125, %c0_126, %c0_127], %204 {strides = array<i32>} : memref<4x32x6xf32, #tpu.memory_space<vmem>>, vector<1x32x6xf32>,
      %205 = vector.extract_strided_slice %164 {offsets = [0, 3], sizes = [128, 1], strides = [1, 1]} : vector<128x4xf32> to vector<128x1xf32>
      %206 = vector.broadcast %205 : vector<128x1xf32> to vector<128x6xf32>
      %207 = arith.mulf %206, %165 : vector<128x6xf32>
      %c3_128 = arith.constant 3 : index
      %c0_129 = arith.constant 0 : index
      %c0_130 = arith.constant 0 : index
      %208 = vector.load %arg10[%c3_128, %c0_129, %c0_130] : memref<4x32x6xf32, #tpu.memory_space<vmem>>, vector<1x32x6xf32>
      %209 = vector.shape_cast %208 : vector<1x32x6xf32> to vector<32x6xf32>
      %cst_131 = arith.constant dense<0.000000e+00> : vector<32x6xf32>
      %210 = tpu.matmul %174, %207, %cst_131 {dimension_numbers = #tpu.dot_dimension_numbers<[1], [0], [0], [1], [0, 0, 1, 1], [], []>} : vector<32x128xf32>, vector<128x6xf32>, vector<32x6xf32> -> vector<32x6xf32>
      %211 = arith.addf %209, %210 : vector<32x6xf32>
      %c3_132 = arith.constant 3 : index
      %c0_133 = arith.constant 0 : index
      %c0_134 = arith.constant 0 : index
      %212 = vector.load %arg10[%c3_132, %c0_133, %c0_134] : memref<4x32x6xf32, #tpu.memory_space<vmem>>, vector<1x32x6xf32>
      %213 = vector.shape_cast %212 : vector<1x32x6xf32> to vector<32x6xf32>
      %214 = vector.shape_cast %211 : vector<32x6xf32> to vector<1x32x6xf32>
      tpu.vector_store %arg10[%c3_132, %c0_133, %c0_134], %214 {strides = array<i32>} : memref<4x32x6xf32, #tpu.memory_space<vmem>>, vector<1x32x6xf32>,
    } else {
    }
    %c0_i32_2 = arith.constant 0 : i32
    %8 = arith.cmpi eq, %arg1, %c0_i32_2 : i32
    %9 = arith.extui %8 : i1 to i32
    %c0_i32_3 = arith.constant 0 : i32
    %10 = arith.cmpi ne, %9, %c0_i32_3 : i32
    scf.if %10 {
      %cst = arith.constant 0.000000e+00 : f32
      %11 = vector.broadcast %cst : f32 to vector<32x128xf32>
      %c0 = arith.constant 0 : index
      %c0_4 = arith.constant 0 : index
      %c0_5 = arith.constant 0 : index
      %12 = vector.load %arg10[%c0, %c0_4, %c0_5] : memref<4x32x6xf32, #tpu.memory_space<vmem>>, vector<1x32x6xf32>
      %13 = vector.shape_cast %12 : vector<1x32x6xf32> to vector<32x6xf32>
      %c0_6 = arith.constant 0 : index
      %c0_7 = arith.constant 0 : index
      %c0_8 = arith.constant 0 : index
      %14 = vector.load %arg7[%c0_6, %c0_7, %c0_8] : memref<4x6x128xf32, #tpu.memory_space<vmem>>, vector<1x6x128xf32>
      %15 = vector.shape_cast %14 : vector<1x6x128xf32> to vector<6x128xf32>
      %cst_9 = arith.constant dense<0.000000e+00> : vector<32x128xf32>
      %16 = tpu.matmul %13, %15, %cst_9 {dimension_numbers = #tpu.dot_dimension_numbers<[1], [0], [0], [1], [0, 0, 1, 1], [], []>} : vector<32x6xf32>, vector<6x128xf32>, vector<32x128xf32> -> vector<32x128xf32>
      %17 = arith.addf %11, %16 : vector<32x128xf32>
      %c1 = arith.constant 1 : index
      %c0_10 = arith.constant 0 : index
      %c0_11 = arith.constant 0 : index
      %18 = vector.load %arg10[%c1, %c0_10, %c0_11] : memref<4x32x6xf32, #tpu.memory_space<vmem>>, vector<1x32x6xf32>
      %19 = vector.shape_cast %18 : vector<1x32x6xf32> to vector<32x6xf32>
      %c1_12 = arith.constant 1 : index
      %c0_13 = arith.constant 0 : index
      %c0_14 = arith.constant 0 : index
      %20 = vector.load %arg7[%c1_12, %c0_13, %c0_14] : memref<4x6x128xf32, #tpu.memory_space<vmem>>, vector<1x6x128xf32>
      %21 = vector.shape_cast %20 : vector<1x6x128xf32> to vector<6x128xf32>
      %cst_15 = arith.constant dense<0.000000e+00> : vector<32x128xf32>
      %22 = tpu.matmul %19, %21, %cst_15 {dimension_numbers = #tpu.dot_dimension_numbers<[1], [0], [0], [1], [0, 0, 1, 1], [], []>} : vector<32x6xf32>, vector<6x128xf32>, vector<32x128xf32> -> vector<32x128xf32>
      %23 = arith.addf %17, %22 : vector<32x128xf32>
      %c2 = arith.constant 2 : index
      %c0_16 = arith.constant 0 : index
      %c0_17 = arith.constant 0 : index
      %24 = vector.load %arg10[%c2, %c0_16, %c0_17] : memref<4x32x6xf32, #tpu.memory_space<vmem>>, vector<1x32x6xf32>
      %25 = vector.shape_cast %24 : vector<1x32x6xf32> to vector<32x6xf32>
      %c2_18 = arith.constant 2 : index
      %c0_19 = arith.constant 0 : index
      %c0_20 = arith.constant 0 : index
      %26 = vector.load %arg7[%c2_18, %c0_19, %c0_20] : memref<4x6x128xf32, #tpu.memory_space<vmem>>, vector<1x6x128xf32>
      %27 = vector.shape_cast %26 : vector<1x6x128xf32> to vector<6x128xf32>
      %cst_21 = arith.constant dense<0.000000e+00> : vector<32x128xf32>
      %28 = tpu.matmul %25, %27, %cst_21 {dimension_numbers = #tpu.dot_dimension_numbers<[1], [0], [0], [1], [0, 0, 1, 1], [], []>} : vector<32x6xf32>, vector<6x128xf32>, vector<32x128xf32> -> vector<32x128xf32>
      %29 = arith.addf %23, %28 : vector<32x128xf32>
      %c3 = arith.constant 3 : index
      %c0_22 = arith.constant 0 : index
      %c0_23 = arith.constant 0 : index
      %30 = vector.load %arg10[%c3, %c0_22, %c0_23] : memref<4x32x6xf32, #tpu.memory_space<vmem>>, vector<1x32x6xf32>
      %31 = vector.shape_cast %30 : vector<1x32x6xf32> to vector<32x6xf32>
      %c3_24 = arith.constant 3 : index
      %c0_25 = arith.constant 0 : index
      %c0_26 = arith.constant 0 : index
      %32 = vector.load %arg7[%c3_24, %c0_25, %c0_26] : memref<4x6x128xf32, #tpu.memory_space<vmem>>, vector<1x6x128xf32>
      %33 = vector.shape_cast %32 : vector<1x6x128xf32> to vector<6x128xf32>
      %cst_27 = arith.constant dense<0.000000e+00> : vector<32x128xf32>
      %34 = tpu.matmul %31, %33, %cst_27 {dimension_numbers = #tpu.dot_dimension_numbers<[1], [0], [0], [1], [0, 0, 1, 1], [], []>} : vector<32x6xf32>, vector<6x128xf32>, vector<32x128xf32> -> vector<32x128xf32>
      %35 = arith.addf %29, %34 : vector<32x128xf32>
      %c0_28 = arith.constant 0 : index
      %c0_29 = arith.constant 0 : index
      %36 = vector.load %arg8[%c0_28, %c0_29] : memref<32x1xf32, #tpu.memory_space<vmem>>, vector<32x1xf32>
      %37 = vector.broadcast %36 : vector<32x1xf32> to vector<32x128xf32>
      %38 = arith.mulf %35, %37 : vector<32x128xf32>
      %c0_30 = arith.constant 0 : index
      %c0_31 = arith.constant 0 : index
      %39 = vector.load %arg9[%c0_30, %c0_31] : memref<32x128xf32, #tpu.memory_space<vmem>>, vector<32x128xf32>
      tpu.vector_store %arg9[%c0_30, %c0_31], %38 {strides = array<i32>} : memref<32x128xf32, #tpu.memory_space<vmem>>, vector<32x128xf32>,
    } else {
    }
    return
  }
  func.func @transform_0(%arg0: i32, %arg1: i32, %arg2: memref<7x1xi32, #tpu.memory_space<smem>>, %arg3: memref<7xi32, #tpu.memory_space<smem>>) -> (i32, i32) {
    %0 = arith.index_cast %arg0 : i32 to index
    %1 = arith.index_cast %arg1 : i32 to index
    %2 = memref.load %arg2[%0, %1] : memref<7x1xi32, #tpu.memory_space<smem>>
    %c0_i32 = arith.constant 0 : i32
    %c0_i32_0 = arith.constant 0 : i32
    return %2, %c0_i32 : i32, i32
  }
  func.func @transform_1(%arg0: i32, %arg1: i32, %arg2: memref<7x1xi32, #tpu.memory_space<smem>>, %arg3: memref<7xi32, #tpu.memory_space<smem>>) -> (i32, i32) {
    %0 = arith.index_cast %arg0 : i32 to index
    %1 = arith.index_cast %arg1 : i32 to index
    %2 = memref.load %arg2[%0, %1] : memref<7x1xi32, #tpu.memory_space<smem>>
    %c0_i32 = arith.constant 0 : i32
    %c0_i32_0 = arith.constant 0 : i32
    return %2, %c0_i32 : i32, i32
  }
  func.func @transform_2(%arg0: i32, %arg1: i32, %arg2: memref<7x1xi32, #tpu.memory_space<smem>>, %arg3: memref<7xi32, #tpu.memory_space<smem>>) -> (i32, i32) {
    %0 = arith.index_cast %arg0 : i32 to index
    %1 = arith.index_cast %arg1 : i32 to index
    %2 = memref.load %arg2[%0, %1] : memref<7x1xi32, #tpu.memory_space<smem>>
    %c0_i32 = arith.constant 0 : i32
    %c0_i32_0 = arith.constant 0 : i32
    return %2, %c0_i32 : i32, i32
  }
  func.func @transform_3(%arg0: i32, %arg1: i32, %arg2: memref<7x1xi32, #tpu.memory_space<smem>>, %arg3: memref<7xi32, #tpu.memory_space<smem>>) -> (i32, i32, i32) {
    %c0_i32 = arith.constant 0 : i32
    %c0_i32_0 = arith.constant 0 : i32
    %c0_i32_1 = arith.constant 0 : i32
    %c0_i32_2 = arith.constant 0 : i32
    return %c0_i32, %c0_i32_0, %c0_i32_1 : i32, i32, i32
  }
  func.func @transform_4(%arg0: i32, %arg1: i32, %arg2: memref<7x1xi32, #tpu.memory_space<smem>>, %arg3: memref<7xi32, #tpu.memory_space<smem>>) -> (i32, i32) {
    %c0_i32 = arith.constant 0 : i32
    %c0_i32_0 = arith.constant 0 : i32
    return %arg0, %c0_i32 : i32, i32
  }
  func.func @transform_5(%arg0: i32, %arg1: i32, %arg2: memref<7x1xi32, #tpu.memory_space<smem>>, %arg3: memref<7xi32, #tpu.memory_space<smem>>) -> (i32, i32) {
    %c0_i32 = arith.constant 0 : i32
    %c0_i32_0 = arith.constant 0 : i32
    return %arg0, %c0_i32 : i32, i32
  }
}

</mosaic_0001>

<llo_original>
// kernel: tpu_custom_call.1
$region0: #{tpu_custom_call.1}
  #allocation0 [shape = 'u32[]', space=smem, size = 0x4, offset = 0x4, fixed_abs, tag = 'smem constant byte address 0x4 - core index']
  #allocation1 [shape = 'u32[144,128]{1,0:T(1,128)}', space=vmem, size = 0x12000, scoped, tag = 'internal scratch']
  #allocation2 [shape = 'f32[4,32,6]{2,1,0:T(8,128)}', space=vmem, size = 0x10000, scoped, tag = 'scratch operand']
  #allocation3 [shape = 's32[1]{0}', space=sflag, size = 0x4, scoped, tag = 'scoped memory for tpu_custom_call.1']
  #allocation4 [shape = 'u8[4096]{0}', space=smem, size = 0x1000, scoped, tag = 'prefetched SMEM operand 0']
  #allocation5 [shape = 'u8[512]{0}', space=smem, size = 0x200, scoped, tag = 'prefetched SMEM operand 1']
  %s0 = inlined_call_operand.vmem [shape: s32[7,1], index: 0, kind: input, shape index: {}]
  %s1 = inlined_call_operand.vmem [shape: s32[7], index: 1, kind: input, shape index: {}]
  %s2 = inlined_call_operand.vmem [shape: f32[512,4], index: 2, kind: input, shape index: {}]
  %s3 = inlined_call_operand.vmem [shape: s32[1,512], index: 3, kind: input, shape index: {}]
  %s4 = inlined_call_operand.vmem [shape: f32[512,6], index: 4, kind: input, shape index: {}]
  %s5 = inlined_call_operand.vmem [shape: f32[4,6,128], index: 5, kind: input, shape index: {}]
  %s6 = inlined_call_operand.vmem [shape: f32[224,1], index: 6, kind: input, shape index: {}]
  %s7 = inlined_call_operand.hbm [shape: f32[224,128], index: 7, kind: output, shape index: {}]
  %s8 = sld [smem:[#allocation0]]
  $region65: #{tpu_custom_call.1} parent=0
    _
  %s10 = ssub.s32 1, %s8
  %s11 = scalar_select 0, %s10, %s8
  %s12 = sshll.u32 %s0, 4
  %s13 = int_to_ptr.vmem [resolvable:$true] %s12
  %15 = dma.vmem_to_smem %s13, 128, [#allocation4], [#allocation3]
  %s16 = sshll.u32 %s1, 4
  %s17 = int_to_ptr.vmem [resolvable:$true] %s16
  %19 = dma.vmem_to_smem %s17, 16, [#allocation5], [#allocation3]
  %20 = dma.done [#allocation3], 144
  %21 = sfence
  $region1: #{tpu_custom_call.1} parent=0
    #allocation6 [shape = 'u8[32768]{0}', space=vmem, size = 0x8000, scoped, tag = 'output window, operand 0']
    #allocation7 [shape = 's32[2]{0}', space=sflag, size = 0x8, scoped, tag = 'scoped memory for tpu_custom_call.1']
    %22 = vsyncpa [#allocation7], 0
    %s23 = scalar_lea.sflag [#allocation7], 1
    %24 = vsyncpa %s23, 0
    loop: start=0, step=1, limit=9
    $region2: #{tpu_custom_call.1} parent=1 // loop_pre_header
      _
    $region3: #{tpu_custom_call.1} parent=1 // loop_header
      %s26 = sphi 0, %s30
      %p27 = scmp.ge.s32.totalorder %s26, 9
      %s33 = sphi 0, %s45
      %s34 = sphi 0, %s41
      %s35 = sphi 0, %s33
      %s36 = sphi 0, %s34
      %s37 = sphi 0, %s35
      %s38 = sphi 0, %s36
      %s64 = sphi 0, %s66
      %s67 = sphi 0, %s64
      %s68 = sphi 0, %s67
      %s84 = sphi 0, %s68
      %s106 = sphi 0, %s108
      %s109 = sphi 0, %s106
      %s110 = sphi 0, %s109
      %s126 = sphi 0, %s110
      %s148 = sphi 0, %s150
      %s151 = sphi 0, %s148
      %s152 = sphi 0, %s151
      %s168 = sphi 0, %s152
      %s172 = sphi 0, %s172
      %s174 = sphi 0, %s172
      %s175 = sphi 0, %s174
      %s189 = sphi 0, %s175
      %s195 = sphi 0, %s197
      %s198 = sphi 0, %s195
      %s199 = sphi 0, %s198
      %s215 = sphi 0, %s199
      %s221 = sphi 0, %s223
      %s224 = sphi 0, %s221
      %s225 = sphi 0, %s224
      %s241 = sphi 0, %s225
    $region4: #{tpu_custom_call.1} parent=1 // loop_header_branch
      %29 = sbr.rel (%p27) target = $region8
    $region5: #{tpu_custom_call.1} parent=1 // loop_body
      %s31 = ssub.s32 %s26, 1
      %s32 = ssub.s32 %s26, 2
      %s39 = sadd.s32 1, %s34
      %p40 = scmp.ge.s32.totalorder %s39, 1
      %s41 = scalar_select %p40, 0, %s39
      %s42 = sadd.s32 1, %s33
      %s43 = scalar_select %p40, %s42, %s33
      %p44 = scmp.ge.s32.totalorder %s43, 7
      %s45 = scalar_select %p44, 0, %s43
      %s46 = sshra.s32 %s34, 7
      %s47 = sand.u32 %s34, 127
      %s48 = sadd.s32 %s46, %s33
      %s49 = smul.u32 %s48, 128
      %s50 = sshra.s32 %s34, 7
      %s51 = sand.u32 %s34, 127
      %s52 = sadd.s32 %s49, %s51
      %s53 = sld [smem:[#allocation4 + %s52]]
      %s54 = sshra.s32 %s41, 7
      %s55 = sand.u32 %s41, 127
      %s56 = sadd.s32 %s54, %s45
      %s57 = smul.u32 %s56, 128
      %s58 = sshra.s32 %s41, 7
      %s59 = sand.u32 %s41, 127
      %s60 = sadd.s32 %s57, %s59
      %s61 = sld [smem:[#allocation4 + %s60]]
      %s62 = ssub.s32 %s53, %s61
      %p63 = scmp.eq.s32.totalorder %s62, 0
      %s65 = sadd.s32 %s64, 1
      %s66 = scalar_select %p63, %s64, %s65
      %p69 = pneg %p63
      %p70 = scmp.eq.s32.totalorder %s26, 6
      %p71 = por %p69, %p70
      %p72 = scmp.ne.s32.totalorder %s64, %s67
      %p73 = scmp.eq.s32.totalorder %s26, 0
      %p74 = por %p72, %p73
      %p75 = scmp.ne.s32.totalorder %s64, %s67
      %p76 = scmp.eq.s32.totalorder %s31, 6
      %p77 = por %p75, %p76
      %p78 = scmp.ne.s32.totalorder %s67, %s68
      %p79 = scmp.eq.s32.totalorder %s31, 0
      %p80 = por %p78, %p79
      %p81 = scmp.ne.s32.totalorder %s67, %s68
      %p82 = scmp.eq.s32.totalorder %s32, 6
      %p83 = por %p81, %p82
      %p85 = scmp.ne.s32.totalorder %s68, %s84
      %p86 = scmp.eq.s32.totalorder %s32, 0
      %p87 = por %p85, %p86
      %s88 = sshra.s32 %s34, 7
      %s89 = sand.u32 %s34, 127
      %s90 = sadd.s32 %s88, %s33
      %s91 = smul.u32 %s90, 128
      %s92 = sshra.s32 %s34, 7
      %s93 = sand.u32 %s34, 127
      %s94 = sadd.s32 %s91, %s93
      %s95 = sld [smem:[#allocation4 + %s94]]
      %s96 = sshra.s32 %s41, 7
      %s97 = sand.u32 %s41, 127
      %s98 = sadd.s32 %s96, %s45
      %s99 = smul.u32 %s98, 128
      %s100 = sshra.s32 %s41, 7
      %s101 = sand.u32 %s41, 127
      %s102 = sadd.s32 %s99, %s101
      %s103 = sld [smem:[#allocation4 + %s102]]
      %s104 = ssub.s32 %s95, %s103
      %p105 = scmp.eq.s32.totalorder %s104, 0
      %s107 = sadd.s32 %s106, 1
      %s108 = scalar_select %p105, %s106, %s107
      %p111 = pneg %p105
      %p112 = scmp.eq.s32.totalorder %s26, 6
      %p113 = por %p111, %p112
      %p114 = scmp.ne.s32.totalorder %s106, %s109
      %p115 = scmp.eq.s32.totalorder %s26, 0
      %p116 = por %p114, %p115
      %p117 = scmp.ne.s32.totalorder %s106, %s109
      %p118 = scmp.eq.s32.totalorder %s31, 6
      %p119 = por %p117, %p118
      %p120 = scmp.ne.s32.totalorder %s109, %s110
      %p121 = scmp.eq.s32.totalorder %s31, 0
      %p122 = por %p120, %p121
      %p123 = scmp.ne.s32.totalorder %s109, %s110
      %p124 = scmp.eq.s32.totalorder %s32, 6
      %p125 = por %p123, %p124
      %p127 = scmp.ne.s32.totalorder %s110, %s126
      %p128 = scmp.eq.s32.totalorder %s32, 0
      %p129 = por %p127, %p128
      %s130 = sshra.s32 %s34, 7
      %s131 = sand.u32 %s34, 127
      %s132 = sadd.s32 %s130, %s33
      %s133 = smul.u32 %s132, 128
      %s134 = sshra.s32 %s34, 7
      %s135 = sand.u32 %s34, 127
      %s136 = sadd.s32 %s133, %s135
      %s137 = sld [smem:[#allocation4 + %s136]]
      %s138 = sshra.s32 %s41, 7
      %s139 = sand.u32 %s41, 127
      %s140 = sadd.s32 %s138, %s45
      %s141 = smul.u32 %s140, 128
      %s142 = sshra.s32 %s41, 7
      %s143 = sand.u32 %s41, 127
      %s144 = sadd.s32 %s141, %s143
      %s145 = sld [smem:[#allocation4 + %s144]]
      %s146 = ssub.s32 %s137, %s145
      %p147 = scmp.eq.s32.totalorder %s146, 0
      %s149 = sadd.s32 %s148, 1
      %s150 = scalar_select %p147, %s148, %s149
      %p153 = pneg %p147
      %p154 = scmp.eq.s32.totalorder %s26, 6
      %p155 = por %p153, %p154
      %p156 = scmp.ne.s32.totalorder %s148, %s151
      %p157 = scmp.eq.s32.totalorder %s26, 0
      %p158 = por %p156, %p157
      %p159 = scmp.ne.s32.totalorder %s148, %s151
      %p160 = scmp.eq.s32.totalorder %s31, 6
      %p161 = por %p159, %p160
      %p162 = scmp.ne.s32.totalorder %s151, %s152
      %p163 = scmp.eq.s32.totalorder %s31, 0
      %p164 = por %p162, %p163
      %p165 = scmp.ne.s32.totalorder %s151, %s152
      %p166 = scmp.eq.s32.totalorder %s32, 6
      %p167 = por %p165, %p166
      %p169 = scmp.ne.s32.totalorder %s152, %s168
      %p170 = scmp.eq.s32.totalorder %s32, 0
      %p171 = por %p169, %p170
      %s173 = sadd.s32 %s172, 1
      %p176 = scmp.eq.s32.totalorder %s26, 6
      %p177 = scmp.ne.s32.totalorder %s172, %s174
      %p178 = scmp.eq.s32.totalorder %s26, 0
      %p179 = por %p177, %p178
      %p180 = scmp.ne.s32.totalorder %s172, %s174
      %p181 = scmp.eq.s32.totalorder %s31, 6
      %p182 = por %p180, %p181
      %p183 = scmp.ne.s32.totalorder %s174, %s175
      %p184 = scmp.eq.s32.totalorder %s31, 0
      %p185 = por %p183, %p184
      %p186 = scmp.ne.s32.totalorder %s174, %s175
      %p187 = scmp.eq.s32.totalorder %s32, 6
      %p188 = por %p186, %p187
      %p190 = scmp.ne.s32.totalorder %s175, %s189
      %p191 = scmp.eq.s32.totalorder %s32, 0
      %p192 = por %p190, %p191
      %s193 = ssub.s32 %s33, %s45
      %p194 = scmp.eq.s32.totalorder %s193, 0
      %s196 = sadd.s32 %s195, 1
      %s197 = scalar_select %p194, %s195, %s196
      %p200 = pneg %p194
      %p201 = scmp.eq.s32.totalorder %s26, 6
      %p202 = por %p200, %p201
      %p203 = scmp.ne.s32.totalorder %s195, %s198
      %p204 = scmp.eq.s32.totalorder %s26, 0
      %p205 = por %p203, %p204
      %p206 = scmp.ne.s32.totalorder %s195, %s198
      %p207 = scmp.eq.s32.totalorder %s31, 6
      %p208 = por %p206, %p207
      %p209 = scmp.ne.s32.totalorder %s198, %s199
      %p210 = scmp.eq.s32.totalorder %s31, 0
      %p211 = por %p209, %p210
      %p212 = scmp.ne.s32.totalorder %s198, %s199
      %p213 = scmp.eq.s32.totalorder %s32, 6
      %p214 = por %p212, %p213
      %p216 = scmp.ne.s32.totalorder %s199, %s215
      %p217 = scmp.eq.s32.totalorder %s32, 0
      %p218 = por %p216, %p217
      %s219 = ssub.s32 %s33, %s45
      %p220 = scmp.eq.s32.totalorder %s219, 0
      %s222 = sadd.s32 %s221, 1
      %s223 = scalar_select %p220, %s221, %s222
      %p226 = pneg %p220
      %p227 = scmp.eq.s32.totalorder %s26, 6
      %p228 = por %p226, %p227
      %p229 = scmp.ne.s32.totalorder %s221, %s224
      %p230 = scmp.eq.s32.totalorder %s26, 0
      %p231 = por %p229, %p230
      %p232 = scmp.ne.s32.totalorder %s221, %s224
      %p233 = scmp.eq.s32.totalorder %s31, 6
      %p234 = por %p232, %p233
      %p235 = scmp.ne.s32.totalorder %s224, %s225
      %p236 = scmp.eq.s32.totalorder %s31, 0
      %p237 = por %p235, %p236
      %p238 = scmp.ne.s32.totalorder %s224, %s225
      %p239 = scmp.eq.s32.totalorder %s32, 6
      %p240 = por %p238, %p239
      %p242 = scmp.ne.s32.totalorder %s225, %s241
      %p243 = scmp.eq.s32.totalorder %s32, 0
      %p244 = por %p242, %p243
      %p245 = scmp.le.s32.totalorder 1, %s26
      %p246 = scmp.lt.s32.totalorder %s26, 8
      %p247 = pnand %p245, %p246
      %p248 = pneg %p247
      // Predicated region
      $region9: #{tpu_custom_call.1} parent=5 // pred_check
        _
      $region10: #{tpu_custom_call.1} parent=5 // pred_check_branch
        %250 = sbr.rel (%p247) target = $region12
      $region11: #{tpu_custom_call.1} parent=5 // pred_region
        %s251 = ssub.s32 %s26, 1
        // Predicated region
        $region13: #{tpu_custom_call.1} parent=11 // pred_check
          %p252 = pneg %p185
        $region14: #{tpu_custom_call.1} parent=11 // pred_check_branch
          %254 = sbr.rel (%p252) target = $region16
        $region15: #{tpu_custom_call.1} parent=11 // pred_region
          _
        $region16: #{tpu_custom_call.1} parent=11 // pred_fallthru
          _
      $region12: #{tpu_custom_call.1} parent=5 // pred_fallthru
        _
      %p255 = scmp.lt.s32.totalorder %s26, 7
      // Predicated region
      $region17: #{tpu_custom_call.1} parent=5 // pred_check
        %p256 = pneg %p255
      $region18: #{tpu_custom_call.1} parent=5 // pred_check_branch
        %258 = sbr.rel (%p256) target = $region20
      $region19: #{tpu_custom_call.1} parent=5 // pred_region
        // Predicated region
        $region21: #{tpu_custom_call.1} parent=19 // pred_check
          %p259 = pneg %p74
        $region22: #{tpu_custom_call.1} parent=19 // pred_check_branch
          %261 = sbr.rel (%p259) target = $region24
        $region23: #{tpu_custom_call.1} parent=19 // pred_region
          %s262 = sshra.s32 %s34, 7
          %s263 = sand.u32 %s34, 127
          %s264 = sadd.s32 %s262, %s33
          %s265 = smul.u32 %s264, 128
          %s266 = sshra.s32 %s34, 7
          %s267 = sand.u32 %s34, 127
          %s268 = sadd.s32 %s265, %s267
          %s269 = sld [smem:[#allocation4 + %s268]]
          %s270 = smul.u32 64, %s269
          %p271 = scmp.lt.s32.totalorder %s270, 63
          %s272 = scalar_select %p271, %s270, 63
          %s273 = smul.addr %s272, 8
          %s274 = scalar_lea.vmem %s2, %s273
          %s275 = sshra.s32 %s34, 7
          %s276 = sand.u32 %s34, 127
          %s277 = sadd.s32 %s275, %s33
          %s278 = smul.u32 %s277, 128
          %s279 = sshra.s32 %s34, 7
          %s280 = sand.u32 %s34, 127
          %s281 = sadd.s32 %s278, %s280
          %s282 = sld [smem:[#allocation4 + %s281]]
          %s283 = smul.u32 64, %s282
        $region24: #{tpu_custom_call.1} parent=19 // pred_fallthru
          _
        // Predicated region
        $region25: #{tpu_custom_call.1} parent=19 // pred_check
          %p284 = pneg %p116
        $region26: #{tpu_custom_call.1} parent=19 // pred_check_branch
          %286 = sbr.rel (%p284) target = $region28
        $region27: #{tpu_custom_call.1} parent=19 // pred_region
          %s287 = sshra.s32 %s34, 7
          %s288 = sand.u32 %s34, 127
          %s289 = sadd.s32 %s287, %s33
          %s290 = smul.u32 %s289, 128
          %s291 = sshra.s32 %s34, 7
          %s292 = sand.u32 %s34, 127
          %s293 = sadd.s32 %s290, %s292
          %s294 = sld [smem:[#allocation4 + %s293]]
          %p295 = scmp.lt.s32.totalorder %s294, 0
          %s296 = scalar_select %p295, %s294, 0
          %s297 = smul.addr %s296, 4
          %s298 = scalar_lea.vmem %s3, %s297
          %s299 = sshra.s32 %s34, 7
          %s300 = sand.u32 %s34, 127
          %s301 = sadd.s32 %s299, %s33
          %s302 = smul.u32 %s301, 128
          %s303 = sshra.s32 %s34, 7
          %s304 = sand.u32 %s34, 127
          %s305 = sadd.s32 %s302, %s304
          %s306 = sld [smem:[#allocation4 + %s305]]
        $region28: #{tpu_custom_call.1} parent=19 // pred_fallthru
          _
        // Predicated region
        $region29: #{tpu_custom_call.1} parent=19 // pred_check
          %p307 = pneg %p158
        $region30: #{tpu_custom_call.1} parent=19 // pred_check_branch
          %309 = sbr.rel (%p307) target = $region32
        $region31: #{tpu_custom_call.1} parent=19 // pred_region
          %s310 = sshra.s32 %s34, 7
          %s311 = sand.u32 %s34, 127
          %s312 = sadd.s32 %s310, %s33
          %s313 = smul.u32 %s312, 128
          %s314 = sshra.s32 %s34, 7
          %s315 = sand.u32 %s34, 127
          %s316 = sadd.s32 %s313, %s315
          %s317 = sld [smem:[#allocation4 + %s316]]
          %s318 = smul.u32 64, %s317
          %p319 = scmp.lt.s32.totalorder %s318, 63
          %s320 = scalar_select %p319, %s318, 63
          %s321 = smul.addr %s320, 8
          %s322 = scalar_lea.vmem %s4, %s321
          %s323 = sshra.s32 %s34, 7
          %s324 = sand.u32 %s34, 127
          %s325 = sadd.s32 %s323, %s33
          %s326 = smul.u32 %s325, 128
          %s327 = sshra.s32 %s34, 7
          %s328 = sand.u32 %s34, 127
          %s329 = sadd.s32 %s326, %s328
          %s330 = sld [smem:[#allocation4 + %s329]]
          %s331 = smul.u32 64, %s330
        $region32: #{tpu_custom_call.1} parent=19 // pred_fallthru
          _
        // Predicated region
        $region33: #{tpu_custom_call.1} parent=19 // pred_check
          %p332 = pneg %p205
        $region34: #{tpu_custom_call.1} parent=19 // pred_check_branch
          %334 = sbr.rel (%p332) target = $region36
        $region35: #{tpu_custom_call.1} parent=19 // pred_region
          %s335 = smul.u32 4, %s33
          %p336 = scmp.lt.s32.totalorder %s335, 27
          %s337 = scalar_select %p336, %s335, 27
          %s338 = smul.addr %s337, 8
          %s339 = scalar_lea.vmem %s6, %s338
          %s340 = smul.u32 4, %s33
        $region36: #{tpu_custom_call.1} parent=19 // pred_fallthru
          _
      $region20: #{tpu_custom_call.1} parent=5 // pred_fallthru
        _
      %p341 = scmp.le.s32.totalorder 1, %s26
      %p342 = scmp.lt.s32.totalorder %s26, 8
      %p343 = pnand %p341, %p342
      %p344 = pneg %p343
      // Predicated region
      $region37: #{tpu_custom_call.1} parent=5 // pred_check
        _
      $region38: #{tpu_custom_call.1} parent=5 // pred_check_branch
        %346 = sbr.rel (%p343) target = $region40
      $region39: #{tpu_custom_call.1} parent=5 // pred_region
        %s347 = ssub.s32 %s26, 1
        %s348 = sshra.s32 %s36, 7
        %s349 = sand.u32 %s36, 127
        %s350 = sadd.s32 %s348, %s35
        %s351 = smul.u32 %s350, 128
        %s352 = sshra.s32 %s36, 7
        %s353 = sand.u32 %s36, 127
        %s354 = sadd.s32 %s351, %s353
        %s355 = sld [smem:[#allocation4 + %s354]]
        %s356 = smul.u32 64, %s355
        %p357 = scmp.lt.s32.totalorder %s356, 63
        %s358 = scalar_select %p357, %s356, 63
        %s359 = smul.addr %s358, 8
        %s360 = scalar_lea.vmem %s2, %s359
        %p361 = pneg %p80
        %p362 = pneg %p77
        %s363 = sshra.s32 %s36, 7
        %s364 = sand.u32 %s36, 127
        %s365 = sadd.s32 %s363, %s35
        %s366 = smul.u32 %s365, 128
        %s367 = sshra.s32 %s36, 7
        %s368 = sand.u32 %s36, 127
        %s369 = sadd.s32 %s366, %s368
        %s370 = sld [smem:[#allocation4 + %s369]]
        %p371 = scmp.lt.s32.totalorder %s370, 0
        %s372 = scalar_select %p371, %s370, 0
        %s373 = smul.addr %s372, 4
        %s374 = scalar_lea.vmem %s3, %s373
        %p375 = pneg %p122
        %p376 = pneg %p119
        %s377 = sshra.s32 %s36, 7
        %s378 = sand.u32 %s36, 127
        %s379 = sadd.s32 %s377, %s35
        %s380 = smul.u32 %s379, 128
        %s381 = sshra.s32 %s36, 7
        %s382 = sand.u32 %s36, 127
        %s383 = sadd.s32 %s380, %s382
        %s384 = sld [smem:[#allocation4 + %s383]]
        %s385 = smul.u32 64, %s384
        %p386 = scmp.lt.s32.totalorder %s385, 63
        %s387 = scalar_select %p386, %s385, 63
        %s388 = smul.addr %s387, 8
        %s389 = scalar_lea.vmem %s4, %s388
        %p390 = pneg %p164
        %p391 = pneg %p161
        %p392 = pneg %p185
        %p393 = pneg %p182
        %s394 = smul.u32 4, %s35
        %p395 = scmp.lt.s32.totalorder %s394, 27
        %s396 = scalar_select %p395, %s394, 27
        %s397 = smul.addr %s396, 8
        %s398 = scalar_lea.vmem %s6, %s397
        %p399 = pneg %p211
        %p400 = pneg %p208
        %p401 = pneg %p237
        %p402 = pneg %p234
        %s403 = sand.u32 %s224, 1
        %s404 = scalar_lea.sflag [#allocation7], %s403
        %s405 = sand.u32 %s224, 1
        %s406 = smul.addr %s405, 32
        %s407 = scalar_lea.vmem [#allocation6], %s406
        %s408 = sshra.s32 %s36, 7
        %s409 = sand.u32 %s36, 127
        %s410 = sadd.s32 %s408, %s35
        %s411 = smul.u32 %s410, 128
        %s412 = sshra.s32 %s36, 7
        %s413 = sand.u32 %s36, 127
        %s414 = sadd.s32 %s411, %s413
        %s415 = sld [smem:[#allocation4 + %s414]]
        %s416 = smul.u32 64, %s415
        %p417 = scmp.lt.s32.totalorder %s416, 63
        %s418 = scalar_select %p417, %s416, 63
        %s419 = smul.addr %s418, 8
        %s420 = scalar_lea.vmem %s2, %s419
        %s421 = sshra.s32 %s36, 7
        %s422 = sand.u32 %s36, 127
        %s423 = sadd.s32 %s421, %s35
        %s424 = smul.u32 %s423, 128
        %s425 = sshra.s32 %s36, 7
        %s426 = sand.u32 %s36, 127
        %s427 = sadd.s32 %s424, %s426
        %s428 = sld [smem:[#allocation4 + %s427]]
        %s429 = smul.u32 64, %s428
        %s430 = sshra.s32 %s36, 7
        %s431 = sand.u32 %s36, 127
        %s432 = sadd.s32 %s430, %s35
        %s433 = smul.u32 %s432, 128
        %s434 = sshra.s32 %s36, 7
        %s435 = sand.u32 %s36, 127
        %s436 = sadd.s32 %s433, %s435
        %s437 = sld [smem:[#allocation4 + %s436]]
        %p438 = scmp.lt.s32.totalorder %s437, 0
        %s439 = scalar_select %p438, %s437, 0
        %s440 = smul.addr %s439, 4
        %s441 = scalar_lea.vmem %s3, %s440
        %s442 = sshra.s32 %s36, 7
        %s443 = sand.u32 %s36, 127
        %s444 = sadd.s32 %s442, %s35
        %s445 = smul.u32 %s444, 128
        %s446 = sshra.s32 %s36, 7
        %s447 = sand.u32 %s36, 127
        %s448 = sadd.s32 %s445, %s447
        %s449 = sld [smem:[#allocation4 + %s448]]
        %s450 = sshra.s32 %s36, 7
        %s451 = sand.u32 %s36, 127
        %s452 = sadd.s32 %s450, %s35
        %s453 = smul.u32 %s452, 128
        %s454 = sshra.s32 %s36, 7
        %s455 = sand.u32 %s36, 127
        %s456 = sadd.s32 %s453, %s455
        %s457 = sld [smem:[#allocation4 + %s456]]
        %s458 = smul.u32 64, %s457
        %p459 = scmp.lt.s32.totalorder %s458, 63
        %s460 = scalar_select %p459, %s458, 63
        %s461 = smul.addr %s460, 8
        %s462 = scalar_lea.vmem %s4, %s461
        %s463 = sshra.s32 %s36, 7
        %s464 = sand.u32 %s36, 127
        %s465 = sadd.s32 %s463, %s35
        %s466 = smul.u32 %s465, 128
        %s467 = sshra.s32 %s36, 7
        %s468 = sand.u32 %s36, 127
        %s469 = sadd.s32 %s466, %s468
        %s470 = sld [smem:[#allocation4 + %s469]]
        %s471 = smul.u32 64, %s470
        %s472 = smul.u32 4, %s35
        %p473 = scmp.lt.s32.totalorder %s472, 27
        %s474 = scalar_select %p473, %s472, 27
        %s475 = smul.addr %s474, 8
        %s476 = scalar_lea.vmem %s6, %s475
        %s477 = smul.u32 4, %s35
        %s478 = smul.u32 4, %s35
        %p479 = scmp.eq.s32.totalorder %s36, 0
        // Predicated region
        $region41: #{tpu_custom_call.1} parent=39 // pred_check
          %p480 = pneg %p479
        $region42: #{tpu_custom_call.1} parent=39 // pred_check_branch
          %482 = sbr.rel (%p480) target = $region44
        $region43: #{tpu_custom_call.1} parent=39 // pred_region
          %vm483 = vcmask 48128
          %484 = vst.msk [vmem:[#allocation2] sm:$0xff] %vm483, 0.0
          %485 = vst.msk [vmem:[#allocation2 + $0x8] sm:$0xff] %vm483, 0.0
          %486 = vst.msk [vmem:[#allocation2 + $0x10] sm:$0xff] %vm483, 0.0
          %487 = vst.msk [vmem:[#allocation2 + $0x18] sm:$0xff] %vm483, 0.0
          %488 = vst.msk [vmem:[#allocation2 + $0x20] sm:$0xff] %vm483, 0.0
          %489 = vst.msk [vmem:[#allocation2 + $0x28] sm:$0xff] %vm483, 0.0
          %490 = vst.msk [vmem:[#allocation2 + $0x30] sm:$0xff] %vm483, 0.0
          %491 = vst.msk [vmem:[#allocation2 + $0x38] sm:$0xff] %vm483, 0.0
          %492 = vst.msk [vmem:[#allocation2 + $0x40] sm:$0xff] %vm483, 0.0
          %493 = vst.msk [vmem:[#allocation2 + $0x48] sm:$0xff] %vm483, 0.0
          %494 = vst.msk [vmem:[#allocation2 + $0x50] sm:$0xff] %vm483, 0.0
          %495 = vst.msk [vmem:[#allocation2 + $0x58] sm:$0xff] %vm483, 0.0
          %496 = vst.msk [vmem:[#allocation2 + $0x60] sm:$0xff] %vm483, 0.0
          %497 = vst.msk [vmem:[#allocation2 + $0x68] sm:$0xff] %vm483, 0.0
          %498 = vst.msk [vmem:[#allocation2 + $0x70] sm:$0xff] %vm483, 0.0
          %499 = vst.msk [vmem:[#allocation2 + $0x78] sm:$0xff] %vm483, 0.0
        $region44: #{tpu_custom_call.1} parent=39 // pred_fallthru
          _
        %s500 = sld [smem:[#allocation5 + %s35]]
        %p501 = scmp.lt.s32.totalorder %s36, %s500
        // Predicated region
        $region45: #{tpu_custom_call.1} parent=39 // pred_check
          %p502 = pneg %p501
        $region46: #{tpu_custom_call.1} parent=39 // pred_check_branch
          %504 = sbr.rel (%p502) target = $region48
        $region47: #{tpu_custom_call.1} parent=39 // pred_region
          %v505 = vld [vmem:[%s420] sm:$0xff]
          %v506 = vld [vmem:[%s420 + $0x8] sm:$0xff]
          %v507 = vld [vmem:[%s420 + $0x10] sm:$0xff]
          %v508 = vld [vmem:[%s420 + $0x18] sm:$0xff]
          %v509 = vld [vmem:[%s420 + $0x20] sm:$0xff]
          %v510 = vld [vmem:[%s420 + $0x28] sm:$0xff]
          %v511 = vld [vmem:[%s420 + $0x30] sm:$0xff]
          %v512 = vld [vmem:[%s420 + $0x38] sm:$0xff]
          %v513 = vld [vmem:[%s420 + $0x40] sm:$0xff]
          %v514 = vld [vmem:[%s420 + $0x48] sm:$0xff]
          %v515 = vld [vmem:[%s420 + $0x50] sm:$0xff]
          %v516 = vld [vmem:[%s420 + $0x58] sm:$0xff]
          %v517 = vld [vmem:[%s420 + $0x60] sm:$0xff]
          %v518 = vld [vmem:[%s420 + $0x68] sm:$0xff]
          %v519 = vld [vmem:[%s420 + $0x70] sm:$0xff]
          %v520 = vld [vmem:[%s420 + $0x78] sm:$0xff]
          %v521 = vld [vmem:[%s462] sm:$0xff]
          %v522 = vld [vmem:[%s462 + $0x8] sm:$0xff]
          %v523 = vld [vmem:[%s462 + $0x10] sm:$0xff]
          %v524 = vld [vmem:[%s462 + $0x18] sm:$0xff]
          %v525 = vld [vmem:[%s462 + $0x20] sm:$0xff]
          %v526 = vld [vmem:[%s462 + $0x28] sm:$0xff]
          %v527 = vld [vmem:[%s462 + $0x30] sm:$0xff]
          %v528 = vld [vmem:[%s462 + $0x38] sm:$0xff]
          %v529 = vld [vmem:[%s462 + $0x40] sm:$0xff]
          %v530 = vld [vmem:[%s462 + $0x48] sm:$0xff]
          %v531 = vld [vmem:[%s462 + $0x50] sm:$0xff]
          %v532 = vld [vmem:[%s462 + $0x58] sm:$0xff]
          %v533 = vld [vmem:[%s462 + $0x60] sm:$0xff]
          %v534 = vld [vmem:[%s462 + $0x68] sm:$0xff]
          %v535 = vld [vmem:[%s462 + $0x70] sm:$0xff]
          %v536 = vld [vmem:[%s462 + $0x78] sm:$0xff]
          %v537 = vld [vmem:[%s441] sm:$0x1]
          %s538 = smul.u32 %s35, 32
          %v539 = vstv %s538
          %v540 = vsub.s32 %v537, %v539
          %v541 = vlaneseq
          %v542 = vshrl.u32 %v541, 7
          %v543 = vadd.s32 %v542, 8
          %v544 = vadd.s32 %v542, 16
          %v545 = vadd.s32 %v542, 24
          %v546 = vlaneseq
          %v547 = vshrl.u32 %v546, 7
          %v548 = vsub.s32 0, %v547
          %v549 = vrot.slane %v540, %v548
          %vm550 = vcmp.eq.s32.totalorder %v542, %v549
          %vm551 = vcmp.eq.s32.totalorder %v543, %v549
          %vm552 = vcmp.eq.s32.totalorder %v544, %v549
          %vm553 = vcmp.eq.s32.totalorder %v545, %v549
          %v554 = vsel %vm550, 1, 0
          %v555 = vsel %vm551, 1, 0
          %v556 = vsel %vm552, 1, 0
          %v557 = vsel %vm553, 1, 0
          %v558 = vcvt.s32.f32 %v554
          %v559 = vcvt.s32.f32 %v555
          %v560 = vcvt.s32.f32 %v556
          %v561 = vcvt.s32.f32 %v557
          %563 = vset.pattern.permute.xlu0 0
          %564 = vperm.xlu0 %563, %v505
          %v565 = vpop.permute.xlu0 %564
          %568 = vset.pattern.permute.xlu0 0
          %569 = vperm.xlu0 %568, %v506
          %v570 = vpop.permute.xlu0 %569
          %573 = vset.pattern.permute.xlu0 0
          %574 = vperm.xlu0 %573, %v507
          %v575 = vpop.permute.xlu0 %574
          %578 = vset.pattern.permute.xlu0 0
          %579 = vperm.xlu0 %578, %v508
          %v580 = vpop.permute.xlu0 %579
          %583 = vset.pattern.permute.xlu0 0
          %584 = vperm.xlu0 %583, %v509
          %v585 = vpop.permute.xlu0 %584
          %588 = vset.pattern.permute.xlu0 0
          %589 = vperm.xlu0 %588, %v510
          %v590 = vpop.permute.xlu0 %589
          %593 = vset.pattern.permute.xlu0 0
          %594 = vperm.xlu0 %593, %v511
          %v595 = vpop.permute.xlu0 %594
          %598 = vset.pattern.permute.xlu0 0
          %599 = vperm.xlu0 %598, %v512
          %v600 = vpop.permute.xlu0 %599
          %603 = vset.pattern.permute.xlu0 0
          %604 = vperm.xlu0 %603, %v513
          %v605 = vpop.permute.xlu0 %604
          %608 = vset.pattern.permute.xlu0 0
          %609 = vperm.xlu0 %608, %v514
          %v610 = vpop.permute.xlu0 %609
          %613 = vset.pattern.permute.xlu0 0
          %614 = vperm.xlu0 %613, %v515
          %v615 = vpop.permute.xlu0 %614
          %618 = vset.pattern.permute.xlu0 0
          %619 = vperm.xlu0 %618, %v516
          %v620 = vpop.permute.xlu0 %619
          %623 = vset.pattern.permute.xlu0 0
          %624 = vperm.xlu0 %623, %v517
          %v625 = vpop.permute.xlu0 %624
          %628 = vset.pattern.permute.xlu0 0
          %629 = vperm.xlu0 %628, %v518
          %v630 = vpop.permute.xlu0 %629
          %633 = vset.pattern.permute.xlu0 0
          %634 = vperm.xlu0 %633, %v519
          %v635 = vpop.permute.xlu0 %634
          %638 = vset.pattern.permute.xlu0 0
          %639 = vperm.xlu0 %638, %v520
          %v640 = vpop.permute.xlu0 %639
          %v642 = vmul.f32 %v565, %v521
          %v643 = vmul.f32 %v570, %v522
          %v644 = vmul.f32 %v575, %v523
          %v645 = vmul.f32 %v580, %v524
          %v646 = vmul.f32 %v585, %v525
          %v647 = vmul.f32 %v590, %v526
          %v648 = vmul.f32 %v595, %v527
          %v649 = vmul.f32 %v600, %v528
          %v650 = vmul.f32 %v605, %v529
          %v651 = vmul.f32 %v610, %v530
          %v652 = vmul.f32 %v615, %v531
          %v653 = vmul.f32 %v620, %v532
          %v654 = vmul.f32 %v625, %v533
          %v655 = vmul.f32 %v630, %v534
          %v656 = vmul.f32 %v635, %v535
          %v657 = vmul.f32 %v640, %v536
          %v658 = vld [vmem:[#allocation2] sm:$0xff]
          %v659 = vld [vmem:[#allocation2 + $0x8] sm:$0xff]
          %v660 = vld [vmem:[#allocation2 + $0x10] sm:$0xff]
          %v661 = vld [vmem:[#allocation2 + $0x18] sm:$0xff]
          %662 = vmatprep.subr.mxu0 0.0
          %663 = vmatpush1.msra.mxu0 %v657
          %664 = vmatprep.subr.mxu0 0.0
          %665 = vmatpush1.msra.mxu0 %v656
          %666 = vmatprep.subr.mxu0 0.0
          %667 = vmatpush1.msra.mxu0 %v655
          %668 = vmatprep.subr.mxu0 0.0
          %669 = vmatpush1.msra.mxu0 %v654
          %670 = vmatprep.subr.mxu0 0.0
          %671 = vmatpush1.msra.mxu0 %v653
          %672 = vmatprep.subr.mxu0 0.0
          %673 = vmatpush1.msra.mxu0 %v652
          %674 = vmatprep.subr.mxu0 0.0
          %675 = vmatpush1.msra.mxu0 %v651
          %676 = vmatprep.subr.mxu0 0.0
          %677 = vmatpush1.msra.mxu0 %v650
          %678 = vmatprep.subr.mxu0 0.0
          %679 = vmatpush1.msra.mxu0 %v649
          %680 = vmatprep.subr.mxu0 0.0
          %681 = vmatpush1.msra.mxu0 %v648
          %682 = vmatprep.subr.mxu0 0.0
          %683 = vmatpush1.msra.mxu0 %v647
          %684 = vmatprep.subr.mxu0 0.0
          %685 = vmatpush1.msra.mxu0 %v646
          %686 = vmatprep.subr.mxu0 0.0
          %687 = vmatpush1.msra.mxu0 %v645
          %688 = vmatprep.subr.mxu0 0.0
          %689 = vmatpush1.msra.mxu0 %v644
          %690 = vmatprep.subr.mxu0 0.0
          %691 = vmatpush1.msra.mxu0 %v643
          %692 = vmatprep.subr.mxu0 0.0
          %693 = vmatpush1.msra.mxu0 %v642
          %694 = vmatprep.subr.mxu0 0.0
          %695 = vmatpush2.msra.mxu0 0.0
          %696 = vmatprep.subr.mxu0 0.0
          %697 = vmatpush2.msra.mxu0 0.0
          %698 = vmatprep.subr.mxu0 0.0
          %699 = vmatpush2.msra.mxu0 0.0
          %700 = vmatprep.subr.mxu0 0.0
          %701 = vmatpush2.msra.mxu0 0.0
          %702 = vmatprep.subr.mxu0 0.0
          %703 = vmatpush2.msra.mxu0 0.0
          %704 = vmatprep.subr.mxu0 0.0
          %705 = vmatpush2.msra.mxu0 0.0
          %706 = vmatprep.subr.mxu0 0.0
          %707 = vmatpush2.msra.mxu0 0.0
          %708 = vmatprep.subr.mxu0 0.0
          %709 = vmatpush2.msra.mxu0 0.0
          %710 = vmatprep.subr.mxu0 0.0
          %711 = vmatpush2.msra.mxu0 0.0
          %712 = vmatprep.subr.mxu0 0.0
          %713 = vmatpush2.msra.mxu0 0.0
          %714 = vmatprep.subr.mxu0 0.0
          %715 = vmatpush2.msra.mxu0 0.0
          %716 = vmatprep.subr.mxu0 0.0
          %717 = vmatpush2.msra.mxu0 0.0
          %718 = vmatprep.subr.mxu0 0.0
          %719 = vmatpush2.msra.mxu0 0.0
          %720 = vmatprep.subr.mxu0 0.0
          %721 = vmatpush2.msra.mxu0 0.0
          %722 = vmatprep.subr.mxu0 0.0
          %723 = vmatpush2.msra.mxu0 0.0
          %724 = vmatprep.subr.mxu0 0.0
          %725 = vmatpush2.msra.mxu0 0.0
          %726 = vmatprep.mubr.f32.mxu0 0.0
          %727 = vmatmul.mubr.f32.gmra.mxu0 %v558
          %v728 = vpop.f32.mrf.mxu0
          %v729 = vadd.f32 0.0, %v728
          %v730 = vpop.f32.mrf.mxu0
          %731 = vmatprep.mubr.f32.mxu0 0.0
          %732 = vmatmul.mubr.f32.gmra.mxu0 %v559
          %v733 = vpop.f32.mrf.mxu0
          %v734 = vadd.f32 0.0, %v733
          %v735 = vpop.f32.mrf.mxu0
          %736 = vmatprep.mubr.f32.mxu0 0.0
          %737 = vmatmul.mubr.f32.gmra.mxu0 %v560
          %v738 = vpop.f32.mrf.mxu0
          %v739 = vadd.f32 0.0, %v738
          %v740 = vpop.f32.mrf.mxu0
          %741 = vmatprep.mubr.f32.mxu0 0.0
          %742 = vmatmul.mubr.f32.gmra.mxu0 %v561
          %v743 = vpop.f32.mrf.mxu0
          %v744 = vadd.f32 0.0, %v743
          %v745 = vpop.f32.mrf.mxu0
          %746 = vdwg.mxu0
          %v747 = vadd.f32 %v658, %v729
          %v748 = vadd.f32 %v659, %v734
          %v749 = vadd.f32 %v660, %v739
          %v750 = vadd.f32 %v661, %v744
          %vm751 = vcmask 48128
          %752 = vst.msk [vmem:[#allocation2] sm:$0xff] %vm751, %v747
          %753 = vst.msk [vmem:[#allocation2 + $0x8] sm:$0xff] %vm751, %v748
          %754 = vst.msk [vmem:[#allocation2 + $0x10] sm:$0xff] %vm751, %v749
          %755 = vst.msk [vmem:[#allocation2 + $0x18] sm:$0xff] %vm751, %v750
          %756 = vset.pattern.permute.xlu0 1
          %757 = vperm.xlu0 %756, %v505
          %v758 = vpop.permute.xlu0 %757
          %760 = vset.pattern.permute.xlu0 1
          %761 = vperm.xlu0 %760, %v506
          %v762 = vpop.permute.xlu0 %761
          %764 = vset.pattern.permute.xlu0 1
          %765 = vperm.xlu0 %764, %v507
          %v766 = vpop.permute.xlu0 %765
          %768 = vset.pattern.permute.xlu0 1
          %769 = vperm.xlu0 %768, %v508
          %v770 = vpop.permute.xlu0 %769
          %772 = vset.pattern.permute.xlu0 1
          %773 = vperm.xlu0 %772, %v509
          %v774 = vpop.permute.xlu0 %773
          %776 = vset.pattern.permute.xlu0 1
          %777 = vperm.xlu0 %776, %v510
          %v778 = vpop.permute.xlu0 %777
          %780 = vset.pattern.permute.xlu0 1
          %781 = vperm.xlu0 %780, %v511
          %v782 = vpop.permute.xlu0 %781
          %784 = vset.pattern.permute.xlu0 1
          %785 = vperm.xlu0 %784, %v512
          %v786 = vpop.permute.xlu0 %785
          %788 = vset.pattern.permute.xlu0 1
          %789 = vperm.xlu0 %788, %v513
          %v790 = vpop.permute.xlu0 %789
          %792 = vset.pattern.permute.xlu0 1
          %793 = vperm.xlu0 %792, %v514
          %v794 = vpop.permute.xlu0 %793
          %796 = vset.pattern.permute.xlu0 1
          %797 = vperm.xlu0 %796, %v515
          %v798 = vpop.permute.xlu0 %797
          %800 = vset.pattern.permute.xlu0 1
          %801 = vperm.xlu0 %800, %v516
          %v802 = vpop.permute.xlu0 %801
          %804 = vset.pattern.permute.xlu0 1
          %805 = vperm.xlu0 %804, %v517
          %v806 = vpop.permute.xlu0 %805
          %808 = vset.pattern.permute.xlu0 1
          %809 = vperm.xlu0 %808, %v518
          %v810 = vpop.permute.xlu0 %809
          %812 = vset.pattern.permute.xlu0 1
          %813 = vperm.xlu0 %812, %v519
          %v814 = vpop.permute.xlu0 %813
          %816 = vset.pattern.permute.xlu0 1
          %817 = vperm.xlu0 %816, %v520
          %v818 = vpop.permute.xlu0 %817
          %v820 = vmul.f32 %v758, %v521
          %v821 = vmul.f32 %v762, %v522
          %v822 = vmul.f32 %v766, %v523
          %v823 = vmul.f32 %v770, %v524
          %v824 = vmul.f32 %v774, %v525
          %v825 = vmul.f32 %v778, %v526
          %v826 = vmul.f32 %v782, %v527
          %v827 = vmul.f32 %v786, %v528
          %v828 = vmul.f32 %v790, %v529
          %v829 = vmul.f32 %v794, %v530
          %v830 = vmul.f32 %v798, %v531
          %v831 = vmul.f32 %v802, %v532
          %v832 = vmul.f32 %v806, %v533
          %v833 = vmul.f32 %v810, %v534
          %v834 = vmul.f32 %v814, %v535
          %v835 = vmul.f32 %v818, %v536
          %s836 = scalar_lea.vmem [#allocation2], 32
          %v837 = vld [vmem:[%s836] sm:$0xff]
          %v838 = vld [vmem:[%s836 + $0x8] sm:$0xff]
          %v839 = vld [vmem:[%s836 + $0x10] sm:$0xff]
          %v840 = vld [vmem:[%s836 + $0x18] sm:$0xff]
          %841 = vmatprep.subr.mxu0 0.0
          %842 = vmatpush1.msra.mxu0 %v835
          %843 = vmatprep.subr.mxu0 0.0
          %844 = vmatpush1.msra.mxu0 %v834
          %845 = vmatprep.subr.mxu0 0.0
          %846 = vmatpush1.msra.mxu0 %v833
          %847 = vmatprep.subr.mxu0 0.0
          %848 = vmatpush1.msra.mxu0 %v832
          %849 = vmatprep.subr.mxu0 0.0
          %850 = vmatpush1.msra.mxu0 %v831
          %851 = vmatprep.subr.mxu0 0.0
          %852 = vmatpush1.msra.mxu0 %v830
          %853 = vmatprep.subr.mxu0 0.0
          %854 = vmatpush1.msra.mxu0 %v829
          %855 = vmatprep.subr.mxu0 0.0
          %856 = vmatpush1.msra.mxu0 %v828
          %857 = vmatprep.subr.mxu0 0.0
          %858 = vmatpush1.msra.mxu0 %v827
          %859 = vmatprep.subr.mxu0 0.0
          %860 = vmatpush1.msra.mxu0 %v826
          %861 = vmatprep.subr.mxu0 0.0
          %862 = vmatpush1.msra.mxu0 %v825
          %863 = vmatprep.subr.mxu0 0.0
          %864 = vmatpush1.msra.mxu0 %v824
          %865 = vmatprep.subr.mxu0 0.0
          %866 = vmatpush1.msra.mxu0 %v823
          %867 = vmatprep.subr.mxu0 0.0
          %868 = vmatpush1.msra.mxu0 %v822
          %869 = vmatprep.subr.mxu0 0.0
          %870 = vmatpush1.msra.mxu0 %v821
          %871 = vmatprep.subr.mxu0 0.0
          %872 = vmatpush1.msra.mxu0 %v820
          %873 = vmatprep.subr.mxu0 0.0
          %874 = vmatpush2.msra.mxu0 0.0
          %875 = vmatprep.subr.mxu0 0.0
          %876 = vmatpush2.msra.mxu0 0.0
          %877 = vmatprep.subr.mxu0 0.0
          %878 = vmatpush2.msra.mxu0 0.0
          %879 = vmatprep.subr.mxu0 0.0
          %880 = vmatpush2.msra.mxu0 0.0
          %881 = vmatprep.subr.mxu0 0.0
          %882 = vmatpush2.msra.mxu0 0.0
          %883 = vmatprep.subr.mxu0 0.0
          %884 = vmatpush2.msra.mxu0 0.0
          %885 = vmatprep.subr.mxu0 0.0
          %886 = vmatpush2.msra.mxu0 0.0
          %887 = vmatprep.subr.mxu0 0.0
          %888 = vmatpush2.msra.mxu0 0.0
          %889 = vmatprep.subr.mxu0 0.0
          %890 = vmatpush2.msra.mxu0 0.0
          %891 = vmatprep.subr.mxu0 0.0
          %892 = vmatpush2.msra.mxu0 0.0
          %893 = vmatprep.subr.mxu0 0.0
          %894 = vmatpush2.msra.mxu0 0.0
          %895 = vmatprep.subr.mxu0 0.0
          %896 = vmatpush2.msra.mxu0 0.0
          %897 = vmatprep.subr.mxu0 0.0
          %898 = vmatpush2.msra.mxu0 0.0
          %899 = vmatprep.subr.mxu0 0.0
          %900 = vmatpush2.msra.mxu0 0.0
          %901 = vmatprep.subr.mxu0 0.0
          %902 = vmatpush2.msra.mxu0 0.0
          %903 = vmatprep.subr.mxu0 0.0
          %904 = vmatpush2.msra.mxu0 0.0
          %905 = vmatprep.mubr.f32.mxu0 0.0
          %906 = vmatmul.mubr.f32.gmra.mxu0 %v558
          %v907 = vpop.f32.mrf.mxu0
          %v908 = vadd.f32 0.0, %v907
          %v909 = vpop.f32.mrf.mxu0
          %910 = vmatprep.mubr.f32.mxu0 0.0
          %911 = vmatmul.mubr.f32.gmra.mxu0 %v559
          %v912 = vpop.f32.mrf.mxu0
          %v913 = vadd.f32 0.0, %v912
          %v914 = vpop.f32.mrf.mxu0
          %915 = vmatprep.mubr.f32.mxu0 0.0
          %916 = vmatmul.mubr.f32.gmra.mxu0 %v560
          %v917 = vpop.f32.mrf.mxu0
          %v918 = vadd.f32 0.0, %v917
          %v919 = vpop.f32.mrf.mxu0
          %920 = vmatprep.mubr.f32.mxu0 0.0
          %921 = vmatmul.mubr.f32.gmra.mxu0 %v561
          %v922 = vpop.f32.mrf.mxu0
          %v923 = vadd.f32 0.0, %v922
          %v924 = vpop.f32.mrf.mxu0
          %925 = vdwg.mxu0
          %v926 = vadd.f32 %v837, %v908
          %v927 = vadd.f32 %v838, %v913
          %v928 = vadd.f32 %v839, %v918
          %v929 = vadd.f32 %v840, %v923
          %930 = vst.msk [vmem:[%s836] sm:$0xff] %vm751, %v926
          %931 = vst.msk [vmem:[%s836 + $0x8] sm:$0xff] %vm751, %v927
          %932 = vst.msk [vmem:[%s836 + $0x10] sm:$0xff] %vm751, %v928
          %933 = vst.msk [vmem:[%s836 + $0x18] sm:$0xff] %vm751, %v929
          %934 = vset.pattern.permute.xlu0 2
          %935 = vperm.xlu0 %934, %v505
          %v936 = vpop.permute.xlu0 %935
          %938 = vset.pattern.permute.xlu0 2
          %939 = vperm.xlu0 %938, %v506
          %v940 = vpop.permute.xlu0 %939
          %942 = vset.pattern.permute.xlu0 2
          %943 = vperm.xlu0 %942, %v507
          %v944 = vpop.permute.xlu0 %943
          %946 = vset.pattern.permute.xlu0 2
          %947 = vperm.xlu0 %946, %v508
          %v948 = vpop.permute.xlu0 %947
          %950 = vset.pattern.permute.xlu0 2
          %951 = vperm.xlu0 %950, %v509
          %v952 = vpop.permute.xlu0 %951
          %954 = vset.pattern.permute.xlu0 2
          %955 = vperm.xlu0 %954, %v510
          %v956 = vpop.permute.xlu0 %955
          %958 = vset.pattern.permute.xlu0 2
          %959 = vperm.xlu0 %958, %v511
          %v960 = vpop.permute.xlu0 %959
          %962 = vset.pattern.permute.xlu0 2
          %963 = vperm.xlu0 %962, %v512
          %v964 = vpop.permute.xlu0 %963
          %966 = vset.pattern.permute.xlu0 2
          %967 = vperm.xlu0 %966, %v513
          %v968 = vpop.permute.xlu0 %967
          %970 = vset.pattern.permute.xlu0 2
          %971 = vperm.xlu0 %970, %v514
          %v972 = vpop.permute.xlu0 %971
          %974 = vset.pattern.permute.xlu0 2
          %975 = vperm.xlu0 %974, %v515
          %v976 = vpop.permute.xlu0 %975
          %978 = vset.pattern.permute.xlu0 2
          %979 = vperm.xlu0 %978, %v516
          %v980 = vpop.permute.xlu0 %979
          %982 = vset.pattern.permute.xlu0 2
          %983 = vperm.xlu0 %982, %v517
          %v984 = vpop.permute.xlu0 %983
          %986 = vset.pattern.permute.xlu0 2
          %987 = vperm.xlu0 %986, %v518
          %v988 = vpop.permute.xlu0 %987
          %990 = vset.pattern.permute.xlu0 2
          %991 = vperm.xlu0 %990, %v519
          %v992 = vpop.permute.xlu0 %991
          %994 = vset.pattern.permute.xlu0 2
          %995 = vperm.xlu0 %994, %v520
          %v996 = vpop.permute.xlu0 %995
          %v998 = vmul.f32 %v936, %v521
          %v999 = vmul.f32 %v940, %v522
          %v1000 = vmul.f32 %v944, %v523
          %v1001 = vmul.f32 %v948, %v524
          %v1002 = vmul.f32 %v952, %v525
          %v1003 = vmul.f32 %v956, %v526
          %v1004 = vmul.f32 %v960, %v527
          %v1005 = vmul.f32 %v964, %v528
          %v1006 = vmul.f32 %v968, %v529
          %v1007 = vmul.f32 %v972, %v530
          %v1008 = vmul.f32 %v976, %v531
          %v1009 = vmul.f32 %v980, %v532
          %v1010 = vmul.f32 %v984, %v533
          %v1011 = vmul.f32 %v988, %v534
          %v1012 = vmul.f32 %v992, %v535
          %v1013 = vmul.f32 %v996, %v536
          %s1014 = scalar_lea.vmem [#allocation2], 64
          %v1015 = vld [vmem:[%s1014] sm:$0xff]
          %v1016 = vld [vmem:[%s1014 + $0x8] sm:$0xff]
          %v1017 = vld [vmem:[%s1014 + $0x10] sm:$0xff]
          %v1018 = vld [vmem:[%s1014 + $0x18] sm:$0xff]
          %1019 = vmatprep.subr.mxu0 0.0
          %1020 = vmatpush1.msra.mxu0 %v1013
          %1021 = vmatprep.subr.mxu0 0.0
          %1022 = vmatpush1.msra.mxu0 %v1012
          %1023 = vmatprep.subr.mxu0 0.0
          %1024 = vmatpush1.msra.mxu0 %v1011
          %1025 = vmatprep.subr.mxu0 0.0
          %1026 = vmatpush1.msra.mxu0 %v1010
          %1027 = vmatprep.subr.mxu0 0.0
          %1028 = vmatpush1.msra.mxu0 %v1009
          %1029 = vmatprep.subr.mxu0 0.0
          %1030 = vmatpush1.msra.mxu0 %v1008
          %1031 = vmatprep.subr.mxu0 0.0
          %1032 = vmatpush1.msra.mxu0 %v1007
          %1033 = vmatprep.subr.mxu0 0.0
          %1034 = vmatpush1.msra.mxu0 %v1006
          %1035 = vmatprep.subr.mxu0 0.0
          %1036 = vmatpush1.msra.mxu0 %v1005
          %1037 = vmatprep.subr.mxu0 0.0
          %1038 = vmatpush1.msra.mxu0 %v1004
          %1039 = vmatprep.subr.mxu0 0.0
          %1040 = vmatpush1.msra.mxu0 %v1003
          %1041 = vmatprep.subr.mxu0 0.0
          %1042 = vmatpush1.msra.mxu0 %v1002
          %1043 = vmatprep.subr.mxu0 0.0
          %1044 = vmatpush1.msra.mxu0 %v1001
          %1045 = vmatprep.subr.mxu0 0.0
          %1046 = vmatpush1.msra.mxu0 %v1000
          %1047 = vmatprep.subr.mxu0 0.0
          %1048 = vmatpush1.msra.mxu0 %v999
          %1049 = vmatprep.subr.mxu0 0.0
          %1050 = vmatpush1.msra.mxu0 %v998
          %1051 = vmatprep.subr.mxu0 0.0
          %1052 = vmatpush2.msra.mxu0 0.0
          %1053 = vmatprep.subr.mxu0 0.0
          %1054 = vmatpush2.msra.mxu0 0.0
          %1055 = vmatprep.subr.mxu0 0.0
          %1056 = vmatpush2.msra.mxu0 0.0
          %1057 = vmatprep.subr.mxu0 0.0
          %1058 = vmatpush2.msra.mxu0 0.0
          %1059 = vmatprep.subr.mxu0 0.0
          %1060 = vmatpush2.msra.mxu0 0.0
          %1061 = vmatprep.subr.mxu0 0.0
          %1062 = vmatpush2.msra.mxu0 0.0
          %1063 = vmatprep.subr.mxu0 0.0
          %1064 = vmatpush2.msra.mxu0 0.0
          %1065 = vmatprep.subr.mxu0 0.0
          %1066 = vmatpush2.msra.mxu0 0.0
          %1067 = vmatprep.subr.mxu0 0.0
          %1068 = vmatpush2.msra.mxu0 0.0
          %1069 = vmatprep.subr.mxu0 0.0
          %1070 = vmatpush2.msra.mxu0 0.0
          %1071 = vmatprep.subr.mxu0 0.0
          %1072 = vmatpush2.msra.mxu0 0.0
          %1073 = vmatprep.subr.mxu0 0.0
          %1074 = vmatpush2.msra.mxu0 0.0
          %1075 = vmatprep.subr.mxu0 0.0
          %1076 = vmatpush2.msra.mxu0 0.0
          %1077 = vmatprep.subr.mxu0 0.0
          %1078 = vmatpush2.msra.mxu0 0.0
          %1079 = vmatprep.subr.mxu0 0.0
          %1080 = vmatpush2.msra.mxu0 0.0
          %1081 = vmatprep.subr.mxu0 0.0
          %1082 = vmatpush2.msra.mxu0 0.0
          %1083 = vmatprep.mubr.f32.mxu0 0.0
          %1084 = vmatmul.mubr.f32.gmra.mxu0 %v558
          %v1085 = vpop.f32.mrf.mxu0
          %v1086 = vadd.f32 0.0, %v1085
          %v1087 = vpop.f32.mrf.mxu0
          %1088 = vmatprep.mubr.f32.mxu0 0.0
          %1089 = vmatmul.mubr.f32.gmra.mxu0 %v559
          %v1090 = vpop.f32.mrf.mxu0
          %v1091 = vadd.f32 0.0, %v1090
          %v1092 = vpop.f32.mrf.mxu0
          %1093 = vmatprep.mubr.f32.mxu0 0.0
          %1094 = vmatmul.mubr.f32.gmra.mxu0 %v560
          %v1095 = vpop.f32.mrf.mxu0
          %v1096 = vadd.f32 0.0, %v1095
          %v1097 = vpop.f32.mrf.mxu0
          %1098 = vmatprep.mubr.f32.mxu0 0.0
          %1099 = vmatmul.mubr.f32.gmra.mxu0 %v561
          %v1100 = vpop.f32.mrf.mxu0
          %v1101 = vadd.f32 0.0, %v1100
          %v1102 = vpop.f32.mrf.mxu0
          %1103 = vdwg.mxu0
          %v1104 = vadd.f32 %v1015, %v1086
          %v1105 = vadd.f32 %v1016, %v1091
          %v1106 = vadd.f32 %v1017, %v1096
          %v1107 = vadd.f32 %v1018, %v1101
          %1108 = vst.msk [vmem:[%s1014] sm:$0xff] %vm751, %v1104
          %1109 = vst.msk [vmem:[%s1014 + $0x8] sm:$0xff] %vm751, %v1105
          %1110 = vst.msk [vmem:[%s1014 + $0x10] sm:$0xff] %vm751, %v1106
          %1111 = vst.msk [vmem:[%s1014 + $0x18] sm:$0xff] %vm751, %v1107
          %1112 = vset.pattern.permute.xlu0 3
          %1113 = vperm.xlu0 %1112, %v505
          %v1114 = vpop.permute.xlu0 %1113
          %1116 = vset.pattern.permute.xlu0 3
          %1117 = vperm.xlu0 %1116, %v506
          %v1118 = vpop.permute.xlu0 %1117
          %1120 = vset.pattern.permute.xlu0 3
          %1121 = vperm.xlu0 %1120, %v507
          %v1122 = vpop.permute.xlu0 %1121
          %1124 = vset.pattern.permute.xlu0 3
          %1125 = vperm.xlu0 %1124, %v508
          %v1126 = vpop.permute.xlu0 %1125
          %1128 = vset.pattern.permute.xlu0 3
          %1129 = vperm.xlu0 %1128, %v509
          %v1130 = vpop.permute.xlu0 %1129
          %1132 = vset.pattern.permute.xlu0 3
          %1133 = vperm.xlu0 %1132, %v510
          %v1134 = vpop.permute.xlu0 %1133
          %1136 = vset.pattern.permute.xlu0 3
          %1137 = vperm.xlu0 %1136, %v511
          %v1138 = vpop.permute.xlu0 %1137
          %1140 = vset.pattern.permute.xlu0 3
          %1141 = vperm.xlu0 %1140, %v512
          %v1142 = vpop.permute.xlu0 %1141
          %1144 = vset.pattern.permute.xlu0 3
          %1145 = vperm.xlu0 %1144, %v513
          %v1146 = vpop.permute.xlu0 %1145
          %1148 = vset.pattern.permute.xlu0 3
          %1149 = vperm.xlu0 %1148, %v514
          %v1150 = vpop.permute.xlu0 %1149
          %1152 = vset.pattern.permute.xlu0 3
          %1153 = vperm.xlu0 %1152, %v515
          %v1154 = vpop.permute.xlu0 %1153
          %1156 = vset.pattern.permute.xlu0 3
          %1157 = vperm.xlu0 %1156, %v516
          %v1158 = vpop.permute.xlu0 %1157
          %1160 = vset.pattern.permute.xlu0 3
          %1161 = vperm.xlu0 %1160, %v517
          %v1162 = vpop.permute.xlu0 %1161
          %1164 = vset.pattern.permute.xlu0 3
          %1165 = vperm.xlu0 %1164, %v518
          %v1166 = vpop.permute.xlu0 %1165
          %1168 = vset.pattern.permute.xlu0 3
          %1169 = vperm.xlu0 %1168, %v519
          %v1170 = vpop.permute.xlu0 %1169
          %1172 = vset.pattern.permute.xlu0 3
          %1173 = vperm.xlu0 %1172, %v520
          %v1174 = vpop.permute.xlu0 %1173
          %v1176 = vmul.f32 %v1114, %v521
          %v1177 = vmul.f32 %v1118, %v522
          %v1178 = vmul.f32 %v1122, %v523
          %v1179 = vmul.f32 %v1126, %v524
          %v1180 = vmul.f32 %v1130, %v525
          %v1181 = vmul.f32 %v1134, %v526
          %v1182 = vmul.f32 %v1138, %v527
          %v1183 = vmul.f32 %v1142, %v528
          %v1184 = vmul.f32 %v1146, %v529
          %v1185 = vmul.f32 %v1150, %v530
          %v1186 = vmul.f32 %v1154, %v531
          %v1187 = vmul.f32 %v1158, %v532
          %v1188 = vmul.f32 %v1162, %v533
          %v1189 = vmul.f32 %v1166, %v534
          %v1190 = vmul.f32 %v1170, %v535
          %v1191 = vmul.f32 %v1174, %v536
          %s1192 = scalar_lea.vmem [#allocation2], 96
          %v1193 = vld [vmem:[%s1192] sm:$0xff]
          %v1194 = vld [vmem:[%s1192 + $0x8] sm:$0xff]
          %v1195 = vld [vmem:[%s1192 + $0x10] sm:$0xff]
          %v1196 = vld [vmem:[%s1192 + $0x18] sm:$0xff]
          %1197 = vmatprep.subr.mxu0 0.0
          %1198 = vmatpush1.msra.mxu0 %v1191
          %1199 = vmatprep.subr.mxu0 0.0
          %1200 = vmatpush1.msra.mxu0 %v1190
          %1201 = vmatprep.subr.mxu0 0.0
          %1202 = vmatpush1.msra.mxu0 %v1189
          %1203 = vmatprep.subr.mxu0 0.0
          %1204 = vmatpush1.msra.mxu0 %v1188
          %1205 = vmatprep.subr.mxu0 0.0
          %1206 = vmatpush1.msra.mxu0 %v1187
          %1207 = vmatprep.subr.mxu0 0.0
          %1208 = vmatpush1.msra.mxu0 %v1186
          %1209 = vmatprep.subr.mxu0 0.0
          %1210 = vmatpush1.msra.mxu0 %v1185
          %1211 = vmatprep.subr.mxu0 0.0
          %1212 = vmatpush1.msra.mxu0 %v1184
          %1213 = vmatprep.subr.mxu0 0.0
          %1214 = vmatpush1.msra.mxu0 %v1183
          %1215 = vmatprep.subr.mxu0 0.0
          %1216 = vmatpush1.msra.mxu0 %v1182
          %1217 = vmatprep.subr.mxu0 0.0
          %1218 = vmatpush1.msra.mxu0 %v1181
          %1219 = vmatprep.subr.mxu0 0.0
          %1220 = vmatpush1.msra.mxu0 %v1180
          %1221 = vmatprep.subr.mxu0 0.0
          %1222 = vmatpush1.msra.mxu0 %v1179
          %1223 = vmatprep.subr.mxu0 0.0
          %1224 = vmatpush1.msra.mxu0 %v1178
          %1225 = vmatprep.subr.mxu0 0.0
          %1226 = vmatpush1.msra.mxu0 %v1177
          %1227 = vmatprep.subr.mxu0 0.0
          %1228 = vmatpush1.msra.mxu0 %v1176
          %1229 = vmatprep.subr.mxu0 0.0
          %1230 = vmatpush2.msra.mxu0 0.0
          %1231 = vmatprep.subr.mxu0 0.0
          %1232 = vmatpush2.msra.mxu0 0.0
          %1233 = vmatprep.subr.mxu0 0.0
          %1234 = vmatpush2.msra.mxu0 0.0
          %1235 = vmatprep.subr.mxu0 0.0
          %1236 = vmatpush2.msra.mxu0 0.0
          %1237 = vmatprep.subr.mxu0 0.0
          %1238 = vmatpush2.msra.mxu0 0.0
          %1239 = vmatprep.subr.mxu0 0.0
          %1240 = vmatpush2.msra.mxu0 0.0
          %1241 = vmatprep.subr.mxu0 0.0
          %1242 = vmatpush2.msra.mxu0 0.0
          %1243 = vmatprep.subr.mxu0 0.0
          %1244 = vmatpush2.msra.mxu0 0.0
          %1245 = vmatprep.subr.mxu0 0.0
          %1246 = vmatpush2.msra.mxu0 0.0
          %1247 = vmatprep.subr.mxu0 0.0
          %1248 = vmatpush2.msra.mxu0 0.0
          %1249 = vmatprep.subr.mxu0 0.0
          %1250 = vmatpush2.msra.mxu0 0.0
          %1251 = vmatprep.subr.mxu0 0.0
          %1252 = vmatpush2.msra.mxu0 0.0
          %1253 = vmatprep.subr.mxu0 0.0
          %1254 = vmatpush2.msra.mxu0 0.0
          %1255 = vmatprep.subr.mxu0 0.0
          %1256 = vmatpush2.msra.mxu0 0.0
          %1257 = vmatprep.subr.mxu0 0.0
          %1258 = vmatpush2.msra.mxu0 0.0
          %1259 = vmatprep.subr.mxu0 0.0
          %1260 = vmatpush2.msra.mxu0 0.0
          %1261 = vmatprep.mubr.f32.mxu0 0.0
          %1262 = vmatmul.mubr.f32.gmra.mxu0 %v558
          %v1263 = vpop.f32.mrf.mxu0
          %v1264 = vadd.f32 0.0, %v1263
          %v1265 = vpop.f32.mrf.mxu0
          %1266 = vmatprep.mubr.f32.mxu0 0.0
          %1267 = vmatmul.mubr.f32.gmra.mxu0 %v559
          %v1268 = vpop.f32.mrf.mxu0
          %v1269 = vadd.f32 0.0, %v1268
          %v1270 = vpop.f32.mrf.mxu0
          %1271 = vmatprep.mubr.f32.mxu0 0.0
          %1272 = vmatmul.mubr.f32.gmra.mxu0 %v560
          %v1273 = vpop.f32.mrf.mxu0
          %v1274 = vadd.f32 0.0, %v1273
          %v1275 = vpop.f32.mrf.mxu0
          %1276 = vmatprep.mubr.f32.mxu0 0.0
          %1277 = vmatmul.mubr.f32.gmra.mxu0 %v561
          %v1278 = vpop.f32.mrf.mxu0
          %v1279 = vadd.f32 0.0, %v1278
          %v1280 = vpop.f32.mrf.mxu0
          %1281 = vdwg.mxu0
          %v1282 = vadd.f32 %v1193, %v1264
          %v1283 = vadd.f32 %v1194, %v1269
          %v1284 = vadd.f32 %v1195, %v1274
          %v1285 = vadd.f32 %v1196, %v1279
          %1286 = vst.msk [vmem:[%s1192] sm:$0xff] %vm751, %v1282
          %1287 = vst.msk [vmem:[%s1192 + $0x8] sm:$0xff] %vm751, %v1283
          %1288 = vst.msk [vmem:[%s1192 + $0x10] sm:$0xff] %vm751, %v1284
          %1289 = vst.msk [vmem:[%s1192 + $0x18] sm:$0xff] %vm751, %v1285
          %v1290 = vld [vmem:[%s420 + $0x80] sm:$0xff]
          %v1291 = vld [vmem:[%s420 + $0x88] sm:$0xff]
          %v1292 = vld [vmem:[%s420 + $0x90] sm:$0xff]
          %v1293 = vld [vmem:[%s420 + $0x98] sm:$0xff]
          %v1294 = vld [vmem:[%s420 + $0xa0] sm:$0xff]
          %v1295 = vld [vmem:[%s420 + $0xa8] sm:$0xff]
          %v1296 = vld [vmem:[%s420 + $0xb0] sm:$0xff]
          %v1297 = vld [vmem:[%s420 + $0xb8] sm:$0xff]
          %v1298 = vld [vmem:[%s420 + $0xc0] sm:$0xff]
          %v1299 = vld [vmem:[%s420 + $0xc8] sm:$0xff]
          %v1300 = vld [vmem:[%s420 + $0xd0] sm:$0xff]
          %v1301 = vld [vmem:[%s420 + $0xd8] sm:$0xff]
          %v1302 = vld [vmem:[%s420 + $0xe0] sm:$0xff]
          %v1303 = vld [vmem:[%s420 + $0xe8] sm:$0xff]
          %v1304 = vld [vmem:[%s420 + $0xf0] sm:$0xff]
          %v1305 = vld [vmem:[%s420 + $0xf8] sm:$0xff]
          %v1306 = vld [vmem:[%s462 + $0x80] sm:$0xff]
          %v1307 = vld [vmem:[%s462 + $0x88] sm:$0xff]
          %v1308 = vld [vmem:[%s462 + $0x90] sm:$0xff]
          %v1309 = vld [vmem:[%s462 + $0x98] sm:$0xff]
          %v1310 = vld [vmem:[%s462 + $0xa0] sm:$0xff]
          %v1311 = vld [vmem:[%s462 + $0xa8] sm:$0xff]
          %v1312 = vld [vmem:[%s462 + $0xb0] sm:$0xff]
          %v1313 = vld [vmem:[%s462 + $0xb8] sm:$0xff]
          %v1314 = vld [vmem:[%s462 + $0xc0] sm:$0xff]
          %v1315 = vld [vmem:[%s462 + $0xc8] sm:$0xff]
          %v1316 = vld [vmem:[%s462 + $0xd0] sm:$0xff]
          %v1317 = vld [vmem:[%s462 + $0xd8] sm:$0xff]
          %v1318 = vld [vmem:[%s462 + $0xe0] sm:$0xff]
          %v1319 = vld [vmem:[%s462 + $0xe8] sm:$0xff]
          %v1320 = vld [vmem:[%s462 + $0xf0] sm:$0xff]
          %v1321 = vld [vmem:[%s462 + $0xf8] sm:$0xff]
          %v1322 = vld [vmem:[%s441 + $0x1] sm:$0x1]
          %v1323 = vsub.s32 %v1322, %v539
          %v1324 = vlaneseq
          %v1325 = vshrl.u32 %v1324, 7
          %v1326 = vsub.s32 0, %v1325
          %v1327 = vrot.slane %v1323, %v1326
          %vm1328 = vcmp.eq.s32.totalorder %v542, %v1327
          %vm1329 = vcmp.eq.s32.totalorder %v543, %v1327
          %vm1330 = vcmp.eq.s32.totalorder %v544, %v1327
          %vm1331 = vcmp.eq.s32.totalorder %v545, %v1327
          %v1332 = vsel %vm1328, 1, 0
          %v1333 = vsel %vm1329, 1, 0
          %v1334 = vsel %vm1330, 1, 0
          %v1335 = vsel %vm1331, 1, 0
          %v1336 = vcvt.s32.f32 %v1332
          %v1337 = vcvt.s32.f32 %v1333
          %v1338 = vcvt.s32.f32 %v1334
          %v1339 = vcvt.s32.f32 %v1335
          %1341 = vset.pattern.permute.xlu0 0
          %1342 = vperm.xlu0 %1341, %v1290
          %v1343 = vpop.permute.xlu0 %1342
          %1346 = vset.pattern.permute.xlu0 0
          %1347 = vperm.xlu0 %1346, %v1291
          %v1348 = vpop.permute.xlu0 %1347
          %1351 = vset.pattern.permute.xlu0 0
          %1352 = vperm.xlu0 %1351, %v1292
          %v1353 = vpop.permute.xlu0 %1352
          %1356 = vset.pattern.permute.xlu0 0
          %1357 = vperm.xlu0 %1356, %v1293
          %v1358 = vpop.permute.xlu0 %1357
          %1361 = vset.pattern.permute.xlu0 0
          %1362 = vperm.xlu0 %1361, %v1294
          %v1363 = vpop.permute.xlu0 %1362
          %1366 = vset.pattern.permute.xlu0 0
          %1367 = vperm.xlu0 %1366, %v1295
          %v1368 = vpop.permute.xlu0 %1367
          %1371 = vset.pattern.permute.xlu0 0
          %1372 = vperm.xlu0 %1371, %v1296
          %v1373 = vpop.permute.xlu0 %1372
          %1376 = vset.pattern.permute.xlu0 0
          %1377 = vperm.xlu0 %1376, %v1297
          %v1378 = vpop.permute.xlu0 %1377
          %1381 = vset.pattern.permute.xlu0 0
          %1382 = vperm.xlu0 %1381, %v1298
          %v1383 = vpop.permute.xlu0 %1382
          %1386 = vset.pattern.permute.xlu0 0
          %1387 = vperm.xlu0 %1386, %v1299
          %v1388 = vpop.permute.xlu0 %1387
          %1391 = vset.pattern.permute.xlu0 0
          %1392 = vperm.xlu0 %1391, %v1300
          %v1393 = vpop.permute.xlu0 %1392
          %1396 = vset.pattern.permute.xlu0 0
          %1397 = vperm.xlu0 %1396, %v1301
          %v1398 = vpop.permute.xlu0 %1397
          %1401 = vset.pattern.permute.xlu0 0
          %1402 = vperm.xlu0 %1401, %v1302
          %v1403 = vpop.permute.xlu0 %1402
          %1406 = vset.pattern.permute.xlu0 0
          %1407 = vperm.xlu0 %1406, %v1303
          %v1408 = vpop.permute.xlu0 %1407
          %1411 = vset.pattern.permute.xlu0 0
          %1412 = vperm.xlu0 %1411, %v1304
          %v1413 = vpop.permute.xlu0 %1412
          %1416 = vset.pattern.permute.xlu0 0
          %1417 = vperm.xlu0 %1416, %v1305
          %v1418 = vpop.permute.xlu0 %1417
          %v1420 = vmul.f32 %v1343, %v1306
          %v1421 = vmul.f32 %v1348, %v1307
          %v1422 = vmul.f32 %v1353, %v1308
          %v1423 = vmul.f32 %v1358, %v1309
          %v1424 = vmul.f32 %v1363, %v1310
          %v1425 = vmul.f32 %v1368, %v1311
          %v1426 = vmul.f32 %v1373, %v1312
          %v1427 = vmul.f32 %v1378, %v1313
          %v1428 = vmul.f32 %v1383, %v1314
          %v1429 = vmul.f32 %v1388, %v1315
          %v1430 = vmul.f32 %v1393, %v1316
          %v1431 = vmul.f32 %v1398, %v1317
          %v1432 = vmul.f32 %v1403, %v1318
          %v1433 = vmul.f32 %v1408, %v1319
          %v1434 = vmul.f32 %v1413, %v1320
          %v1435 = vmul.f32 %v1418, %v1321
          %v1436 = vld [vmem:[#allocation2] sm:$0xff]
          %v1437 = vld [vmem:[#allocation2 + $0x8] sm:$0xff]
          %v1438 = vld [vmem:[#allocation2 + $0x10] sm:$0xff]
          %v1439 = vld [vmem:[#allocation2 + $0x18] sm:$0xff]
          %1440 = vmatprep.subr.mxu0 0.0
          %1441 = vmatpush1.msra.mxu0 %v1435
          %1442 = vmatprep.subr.mxu0 0.0
          %1443 = vmatpush1.msra.mxu0 %v1434
          %1444 = vmatprep.subr.mxu0 0.0
          %1445 = vmatpush1.msra.mxu0 %v1433
          %1446 = vmatprep.subr.mxu0 0.0
          %1447 = vmatpush1.msra.mxu0 %v1432
          %1448 = vmatprep.subr.mxu0 0.0
          %1449 = vmatpush1.msra.mxu0 %v1431
          %1450 = vmatprep.subr.mxu0 0.0
          %1451 = vmatpush1.msra.mxu0 %v1430
          %1452 = vmatprep.subr.mxu0 0.0
          %1453 = vmatpush1.msra.mxu0 %v1429
          %1454 = vmatprep.subr.mxu0 0.0
          %1455 = vmatpush1.msra.mxu0 %v1428
          %1456 = vmatprep.subr.mxu0 0.0
          %1457 = vmatpush1.msra.mxu0 %v1427
          %1458 = vmatprep.subr.mxu0 0.0
          %1459 = vmatpush1.msra.mxu0 %v1426
          %1460 = vmatprep.subr.mxu0 0.0
          %1461 = vmatpush1.msra.mxu0 %v1425
          %1462 = vmatprep.subr.mxu0 0.0
          %1463 = vmatpush1.msra.mxu0 %v1424
          %1464 = vmatprep.subr.mxu0 0.0
          %1465 = vmatpush1.msra.mxu0 %v1423
          %1466 = vmatprep.subr.mxu0 0.0
          %1467 = vmatpush1.msra.mxu0 %v1422
          %1468 = vmatprep.subr.mxu0 0.0
          %1469 = vmatpush1.msra.mxu0 %v1421
          %1470 = vmatprep.subr.mxu0 0.0
          %1471 = vmatpush1.msra.mxu0 %v1420
          %1472 = vmatprep.subr.mxu0 0.0
          %1473 = vmatpush2.msra.mxu0 0.0
          %1474 = vmatprep.subr.mxu0 0.0
          %1475 = vmatpush2.msra.mxu0 0.0
          %1476 = vmatprep.subr.mxu0 0.0
          %1477 = vmatpush2.msra.mxu0 0.0
          %1478 = vmatprep.subr.mxu0 0.0
          %1479 = vmatpush2.msra.mxu0 0.0
          %1480 = vmatprep.subr.mxu0 0.0
          %1481 = vmatpush2.msra.mxu0 0.0
          %1482 = vmatprep.subr.mxu0 0.0
          %1483 = vmatpush2.msra.mxu0 0.0
          %1484 = vmatprep.subr.mxu0 0.0
          %1485 = vmatpush2.msra.mxu0 0.0
          %1486 = vmatprep.subr.mxu0 0.0
          %1487 = vmatpush2.msra.mxu0 0.0
          %1488 = vmatprep.subr.mxu0 0.0
          %1489 = vmatpush2.msra.mxu0 0.0
          %1490 = vmatprep.subr.mxu0 0.0
          %1491 = vmatpush2.msra.mxu0 0.0
          %1492 = vmatprep.subr.mxu0 0.0
          %1493 = vmatpush2.msra.mxu0 0.0
          %1494 = vmatprep.subr.mxu0 0.0
          %1495 = vmatpush2.msra.mxu0 0.0
          %1496 = vmatprep.subr.mxu0 0.0
          %1497 = vmatpush2.msra.mxu0 0.0
          %1498 = vmatprep.subr.mxu0 0.0
          %1499 = vmatpush2.msra.mxu0 0.0
          %1500 = vmatprep.subr.mxu0 0.0
          %1501 = vmatpush2.msra.mxu0 0.0
          %1502 = vmatprep.subr.mxu0 0.0
          %1503 = vmatpush2.msra.mxu0 0.0
          %1504 = vmatprep.mubr.f32.mxu0 0.0
          %1505 = vmatmul.mubr.f32.gmra.mxu0 %v1336
          %v1506 = vpop.f32.mrf.mxu0
          %v1507 = vadd.f32 0.0, %v1506
          %v1508 = vpop.f32.mrf.mxu0
          %1509 = vmatprep.mubr.f32.mxu0 0.0
          %1510 = vmatmul.mubr.f32.gmra.mxu0 %v1337
          %v1511 = vpop.f32.mrf.mxu0
          %v1512 = vadd.f32 0.0, %v1511
          %v1513 = vpop.f32.mrf.mxu0
          %1514 = vmatprep.mubr.f32.mxu0 0.0
          %1515 = vmatmul.mubr.f32.gmra.mxu0 %v1338
          %v1516 = vpop.f32.mrf.mxu0
          %v1517 = vadd.f32 0.0, %v1516
          %v1518 = vpop.f32.mrf.mxu0
          %1519 = vmatprep.mubr.f32.mxu0 0.0
          %1520 = vmatmul.mubr.f32.gmra.mxu0 %v1339
          %v1521 = vpop.f32.mrf.mxu0
          %v1522 = vadd.f32 0.0, %v1521
          %v1523 = vpop.f32.mrf.mxu0
          %1524 = vdwg.mxu0
          %v1525 = vadd.f32 %v1436, %v1507
          %v1526 = vadd.f32 %v1437, %v1512
          %v1527 = vadd.f32 %v1438, %v1517
          %v1528 = vadd.f32 %v1439, %v1522
          %1529 = vst.msk [vmem:[#allocation2] sm:$0xff] %vm751, %v1525
          %1530 = vst.msk [vmem:[#allocation2 + $0x8] sm:$0xff] %vm751, %v1526
          %1531 = vst.msk [vmem:[#allocation2 + $0x10] sm:$0xff] %vm751, %v1527
          %1532 = vst.msk [vmem:[#allocation2 + $0x18] sm:$0xff] %vm751, %v1528
          %1533 = vset.pattern.permute.xlu0 1
          %1534 = vperm.xlu0 %1533, %v1290
          %v1535 = vpop.permute.xlu0 %1534
          %1537 = vset.pattern.permute.xlu0 1
          %1538 = vperm.xlu0 %1537, %v1291
          %v1539 = vpop.permute.xlu0 %1538
          %1541 = vset.pattern.permute.xlu0 1
          %1542 = vperm.xlu0 %1541, %v1292
          %v1543 = vpop.permute.xlu0 %1542
          %1545 = vset.pattern.permute.xlu0 1
          %1546 = vperm.xlu0 %1545, %v1293
          %v1547 = vpop.permute.xlu0 %1546
          %1549 = vset.pattern.permute.xlu0 1
          %1550 = vperm.xlu0 %1549, %v1294
          %v1551 = vpop.permute.xlu0 %1550
          %1553 = vset.pattern.permute.xlu0 1
          %1554 = vperm.xlu0 %1553, %v1295
          %v1555 = vpop.permute.xlu0 %1554
          %1557 = vset.pattern.permute.xlu0 1
          %1558 = vperm.xlu0 %1557, %v1296
          %v1559 = vpop.permute.xlu0 %1558
          %1561 = vset.pattern.permute.xlu0 1
          %1562 = vperm.xlu0 %1561, %v1297
          %v1563 = vpop.permute.xlu0 %1562
          %1565 = vset.pattern.permute.xlu0 1
          %1566 = vperm.xlu0 %1565, %v1298
          %v1567 = vpop.permute.xlu0 %1566
          %1569 = vset.pattern.permute.xlu0 1
          %1570 = vperm.xlu0 %1569, %v1299
          %v1571 = vpop.permute.xlu0 %1570
          %1573 = vset.pattern.permute.xlu0 1
          %1574 = vperm.xlu0 %1573, %v1300
          %v1575 = vpop.permute.xlu0 %1574
          %1577 = vset.pattern.permute.xlu0 1
          %1578 = vperm.xlu0 %1577, %v1301
          %v1579 = vpop.permute.xlu0 %1578
          %1581 = vset.pattern.permute.xlu0 1
          %1582 = vperm.xlu0 %1581, %v1302
          %v1583 = vpop.permute.xlu0 %1582
          %1585 = vset.pattern.permute.xlu0 1
          %1586 = vperm.xlu0 %1585, %v1303
          %v1587 = vpop.permute.xlu0 %1586
          %1589 = vset.pattern.permute.xlu0 1
          %1590 = vperm.xlu0 %1589, %v1304
          %v1591 = vpop.permute.xlu0 %1590
          %1593 = vset.pattern.permute.xlu0 1
          %1594 = vperm.xlu0 %1593, %v1305
          %v1595 = vpop.permute.xlu0 %1594
          %v1597 = vmul.f32 %v1535, %v1306
          %v1598 = vmul.f32 %v1539, %v1307
          %v1599 = vmul.f32 %v1543, %v1308
          %v1600 = vmul.f32 %v1547, %v1309
          %v1601 = vmul.f32 %v1551, %v1310
          %v1602 = vmul.f32 %v1555, %v1311
          %v1603 = vmul.f32 %v1559, %v1312
          %v1604 = vmul.f32 %v1563, %v1313
          %v1605 = vmul.f32 %v1567, %v1314
          %v1606 = vmul.f32 %v1571, %v1315
          %v1607 = vmul.f32 %v1575, %v1316
          %v1608 = vmul.f32 %v1579, %v1317
          %v1609 = vmul.f32 %v1583, %v1318
          %v1610 = vmul.f32 %v1587, %v1319
          %v1611 = vmul.f32 %v1591, %v1320
          %v1612 = vmul.f32 %v1595, %v1321
          %v1613 = vld [vmem:[%s836] sm:$0xff]
          %v1614 = vld [vmem:[%s836 + $0x8] sm:$0xff]
          %v1615 = vld [vmem:[%s836 + $0x10] sm:$0xff]
          %v1616 = vld [vmem:[%s836 + $0x18] sm:$0xff]
          %1617 = vmatprep.subr.mxu0 0.0
          %1618 = vmatpush1.msra.mxu0 %v1612
          %1619 = vmatprep.subr.mxu0 0.0
          %1620 = vmatpush1.msra.mxu0 %v1611
          %1621 = vmatprep.subr.mxu0 0.0
          %1622 = vmatpush1.msra.mxu0 %v1610
          %1623 = vmatprep.subr.mxu0 0.0
          %1624 = vmatpush1.msra.mxu0 %v1609
          %1625 = vmatprep.subr.mxu0 0.0
          %1626 = vmatpush1.msra.mxu0 %v1608
          %1627 = vmatprep.subr.mxu0 0.0
          %1628 = vmatpush1.msra.mxu0 %v1607
          %1629 = vmatprep.subr.mxu0 0.0
          %1630 = vmatpush1.msra.mxu0 %v1606
          %1631 = vmatprep.subr.mxu0 0.0
          %1632 = vmatpush1.msra.mxu0 %v1605
          %1633 = vmatprep.subr.mxu0 0.0
          %1634 = vmatpush1.msra.mxu0 %v1604
          %1635 = vmatprep.subr.mxu0 0.0
          %1636 = vmatpush1.msra.mxu0 %v1603
          %1637 = vmatprep.subr.mxu0 0.0
          %1638 = vmatpush1.msra.mxu0 %v1602
          %1639 = vmatprep.subr.mxu0 0.0
          %1640 = vmatpush1.msra.mxu0 %v1601
          %1641 = vmatprep.subr.mxu0 0.0
          %1642 = vmatpush1.msra.mxu0 %v1600
          %1643 = vmatprep.subr.mxu0 0.0
          %1644 = vmatpush1.msra.mxu0 %v1599
          %1645 = vmatprep.subr.mxu0 0.0
          %1646 = vmatpush1.msra.mxu0 %v1598
          %1647 = vmatprep.subr.mxu0 0.0
          %1648 = vmatpush1.msra.mxu0 %v1597
          %1649 = vmatprep.subr.mxu0 0.0
          %1650 = vmatpush2.msra.mxu0 0.0
          %1651 = vmatprep.subr.mxu0 0.0
          %1652 = vmatpush2.msra.mxu0 0.0
          %1653 = vmatprep.subr.mxu0 0.0
          %1654 = vmatpush2.msra.mxu0 0.0
          %1655 = vmatprep.subr.mxu0 0.0
          %1656 = vmatpush2.msra.mxu0 0.0
          %1657 = vmatprep.subr.mxu0 0.0
          %1658 = vmatpush2.msra.mxu0 0.0
          %1659 = vmatprep.subr.mxu0 0.0
          %1660 = vmatpush2.msra.mxu0 0.0
          %1661 = vmatprep.subr.mxu0 0.0
          %1662 = vmatpush2.msra.mxu0 0.0
          %1663 = vmatprep.subr.mxu0 0.0
          %1664 = vmatpush2.msra.mxu0 0.0
          %1665 = vmatprep.subr.mxu0 0.0
          %1666 = vmatpush2.msra.mxu0 0.0
          %1667 = vmatprep.subr.mxu0 0.0
          %1668 = vmatpush2.msra.mxu0 0.0
          %1669 = vmatprep.subr.mxu0 0.0
          %1670 = vmatpush2.msra.mxu0 0.0
          %1671 = vmatprep.subr.mxu0 0.0
          %1672 = vmatpush2.msra.mxu0 0.0
          %1673 = vmatprep.subr.mxu0 0.0
          %1674 = vmatpush2.msra.mxu0 0.0
          %1675 = vmatprep.subr.mxu0 0.0
          %1676 = vmatpush2.msra.mxu0 0.0
          %1677 = vmatprep.subr.mxu0 0.0
          %1678 = vmatpush2.msra.mxu0 0.0
          %1679 = vmatprep.subr.mxu0 0.0
          %1680 = vmatpush2.msra.mxu0 0.0
          %1681 = vmatprep.mubr.f32.mxu0 0.0
          %1682 = vmatmul.mubr.f32.gmra.mxu0 %v1336
          %v1683 = vpop.f32.mrf.mxu0
          %v1684 = vadd.f32 0.0, %v1683
          %v1685 = vpop.f32.mrf.mxu0
          %1686 = vmatprep.mubr.f32.mxu0 0.0
          %1687 = vmatmul.mubr.f32.gmra.mxu0 %v1337
          %v1688 = vpop.f32.mrf.mxu0
          %v1689 = vadd.f32 0.0, %v1688
          %v1690 = vpop.f32.mrf.mxu0
          %1691 = vmatprep.mubr.f32.mxu0 0.0
          %1692 = vmatmul.mubr.f32.gmra.mxu0 %v1338
          %v1693 = vpop.f32.mrf.mxu0
          %v1694 = vadd.f32 0.0, %v1693
          %v1695 = vpop.f32.mrf.mxu0
          %1696 = vmatprep.mubr.f32.mxu0 0.0
          %1697 = vmatmul.mubr.f32.gmra.mxu0 %v1339
          %v1698 = vpop.f32.mrf.mxu0
          %v1699 = vadd.f32 0.0, %v1698
          %v1700 = vpop.f32.mrf.mxu0
          %1701 = vdwg.mxu0
          %v1702 = vadd.f32 %v1613, %v1684
          %v1703 = vadd.f32 %v1614, %v1689
          %v1704 = vadd.f32 %v1615, %v1694
          %v1705 = vadd.f32 %v1616, %v1699
          %1706 = vst.msk [vmem:[%s836] sm:$0xff] %vm751, %v1702
          %1707 = vst.msk [vmem:[%s836 + $0x8] sm:$0xff] %vm751, %v1703
          %1708 = vst.msk [vmem:[%s836 + $0x10] sm:$0xff] %vm751, %v1704
          %1709 = vst.msk [vmem:[%s836 + $0x18] sm:$0xff] %vm751, %v1705
          %1710 = vset.pattern.permute.xlu0 2
          %1711 = vperm.xlu0 %1710, %v1290
          %v1712 = vpop.permute.xlu0 %1711
          %1714 = vset.pattern.permute.xlu0 2
          %1715 = vperm.xlu0 %1714, %v1291
          %v1716 = vpop.permute.xlu0 %1715
          %1718 = vset.pattern.permute.xlu0 2
          %1719 = vperm.xlu0 %1718, %v1292
          %v1720 = vpop.permute.xlu0 %1719
          %1722 = vset.pattern.permute.xlu0 2
          %1723 = vperm.xlu0 %1722, %v1293
          %v1724 = vpop.permute.xlu0 %1723
          %1726 = vset.pattern.permute.xlu0 2
          %1727 = vperm.xlu0 %1726, %v1294
          %v1728 = vpop.permute.xlu0 %1727
          %1730 = vset.pattern.permute.xlu0 2
          %1731 = vperm.xlu0 %1730, %v1295
          %v1732 = vpop.permute.xlu0 %1731
          %1734 = vset.pattern.permute.xlu0 2
          %1735 = vperm.xlu0 %1734, %v1296
          %v1736 = vpop.permute.xlu0 %1735
          %1738 = vset.pattern.permute.xlu0 2
          %1739 = vperm.xlu0 %1738, %v1297
          %v1740 = vpop.permute.xlu0 %1739
          %1742 = vset.pattern.permute.xlu0 2
          %1743 = vperm.xlu0 %1742, %v1298
          %v1744 = vpop.permute.xlu0 %1743
          %1746 = vset.pattern.permute.xlu0 2
          %1747 = vperm.xlu0 %1746, %v1299
          %v1748 = vpop.permute.xlu0 %1747
          %1750 = vset.pattern.permute.xlu0 2
          %1751 = vperm.xlu0 %1750, %v1300
          %v1752 = vpop.permute.xlu0 %1751
          %1754 = vset.pattern.permute.xlu0 2
          %1755 = vperm.xlu0 %1754, %v1301
          %v1756 = vpop.permute.xlu0 %1755
          %1758 = vset.pattern.permute.xlu0 2
          %1759 = vperm.xlu0 %1758, %v1302
          %v1760 = vpop.permute.xlu0 %1759
          %1762 = vset.pattern.permute.xlu0 2
          %1763 = vperm.xlu0 %1762, %v1303
          %v1764 = vpop.permute.xlu0 %1763
          %1766 = vset.pattern.permute.xlu0 2
          %1767 = vperm.xlu0 %1766, %v1304
          %v1768 = vpop.permute.xlu0 %1767
          %1770 = vset.pattern.permute.xlu0 2
          %1771 = vperm.xlu0 %1770, %v1305
          %v1772 = vpop.permute.xlu0 %1771
          %v1774 = vmul.f32 %v1712, %v1306
          %v1775 = vmul.f32 %v1716, %v1307
          %v1776 = vmul.f32 %v1720, %v1308
          %v1777 = vmul.f32 %v1724, %v1309
          %v1778 = vmul.f32 %v1728, %v1310
          %v1779 = vmul.f32 %v1732, %v1311
          %v1780 = vmul.f32 %v1736, %v1312
          %v1781 = vmul.f32 %v1740, %v1313
          %v1782 = vmul.f32 %v1744, %v1314
          %v1783 = vmul.f32 %v1748, %v1315
          %v1784 = vmul.f32 %v1752, %v1316
          %v1785 = vmul.f32 %v1756, %v1317
          %v1786 = vmul.f32 %v1760, %v1318
          %v1787 = vmul.f32 %v1764, %v1319
          %v1788 = vmul.f32 %v1768, %v1320
          %v1789 = vmul.f32 %v1772, %v1321
          %v1790 = vld [vmem:[%s1014] sm:$0xff]
          %v1791 = vld [vmem:[%s1014 + $0x8] sm:$0xff]
          %v1792 = vld [vmem:[%s1014 + $0x10] sm:$0xff]
          %v1793 = vld [vmem:[%s1014 + $0x18] sm:$0xff]
          %1794 = vmatprep.subr.mxu0 0.0
          %1795 = vmatpush1.msra.mxu0 %v1789
          %1796 = vmatprep.subr.mxu0 0.0
          %1797 = vmatpush1.msra.mxu0 %v1788
          %1798 = vmatprep.subr.mxu0 0.0
          %1799 = vmatpush1.msra.mxu0 %v1787
          %1800 = vmatprep.subr.mxu0 0.0
          %1801 = vmatpush1.msra.mxu0 %v1786
          %1802 = vmatprep.subr.mxu0 0.0
          %1803 = vmatpush1.msra.mxu0 %v1785
          %1804 = vmatprep.subr.mxu0 0.0
          %1805 = vmatpush1.msra.mxu0 %v1784
          %1806 = vmatprep.subr.mxu0 0.0
          %1807 = vmatpush1.msra.mxu0 %v1783
          %1808 = vmatprep.subr.mxu0 0.0
          %1809 = vmatpush1.msra.mxu0 %v1782
          %1810 = vmatprep.subr.mxu0 0.0
          %1811 = vmatpush1.msra.mxu0 %v1781
          %1812 = vmatprep.subr.mxu0 0.0
          %1813 = vmatpush1.msra.mxu0 %v1780
          %1814 = vmatprep.subr.mxu0 0.0
          %1815 = vmatpush1.msra.mxu0 %v1779
          %1816 = vmatprep.subr.mxu0 0.0
          %1817 = vmatpush1.msra.mxu0 %v1778
          %1818 = vmatprep.subr.mxu0 0.0
          %1819 = vmatpush1.msra.mxu0 %v1777
          %1820 = vmatprep.subr.mxu0 0.0
          %1821 = vmatpush1.msra.mxu0 %v1776
          %1822 = vmatprep.subr.mxu0 0.0
          %1823 = vmatpush1.msra.mxu0 %v1775
          %1824 = vmatprep.subr.mxu0 0.0
          %1825 = vmatpush1.msra.mxu0 %v1774
          %1826 = vmatprep.subr.mxu0 0.0
          %1827 = vmatpush2.msra.mxu0 0.0
          %1828 = vmatprep.subr.mxu0 0.0
          %1829 = vmatpush2.msra.mxu0 0.0
          %1830 = vmatprep.subr.mxu0 0.0
          %1831 = vmatpush2.msra.mxu0 0.0
          %1832 = vmatprep.subr.mxu0 0.0
          %1833 = vmatpush2.msra.mxu0 0.0
          %1834 = vmatprep.subr.mxu0 0.0
          %1835 = vmatpush2.msra.mxu0 0.0
          %1836 = vmatprep.subr.mxu0 0.0
          %1837 = vmatpush2.msra.mxu0 0.0
          %1838 = vmatprep.subr.mxu0 0.0
          %1839 = vmatpush2.msra.mxu0 0.0
          %1840 = vmatprep.subr.mxu0 0.0
          %1841 = vmatpush2.msra.mxu0 0.0
          %1842 = vmatprep.subr.mxu0 0.0
          %1843 = vmatpush2.msra.mxu0 0.0
          %1844 = vmatprep.subr.mxu0 0.0
          %1845 = vmatpush2.msra.mxu0 0.0
          %1846 = vmatprep.subr.mxu0 0.0
          %1847 = vmatpush2.msra.mxu0 0.0
          %1848 = vmatprep.subr.mxu0 0.0
          %1849 = vmatpush2.msra.mxu0 0.0
          %1850 = vmatprep.subr.mxu0 0.0
          %1851 = vmatpush2.msra.mxu0 0.0
          %1852 = vmatprep.subr.mxu0 0.0
          %1853 = vmatpush2.msra.mxu0 0.0
          %1854 = vmatprep.subr.mxu0 0.0
          %1855 = vmatpush2.msra.mxu0 0.0
          %1856 = vmatprep.subr.mxu0 0.0
          %1857 = vmatpush2.msra.mxu0 0.0
          %1858 = vmatprep.mubr.f32.mxu0 0.0
          %1859 = vmatmul.mubr.f32.gmra.mxu0 %v1336
          %v1860 = vpop.f32.mrf.mxu0
          %v1861 = vadd.f32 0.0, %v1860
          %v1862 = vpop.f32.mrf.mxu0
          %1863 = vmatprep.mubr.f32.mxu0 0.0
          %1864 = vmatmul.mubr.f32.gmra.mxu0 %v1337
          %v1865 = vpop.f32.mrf.mxu0
          %v1866 = vadd.f32 0.0, %v1865
          %v1867 = vpop.f32.mrf.mxu0
          %1868 = vmatprep.mubr.f32.mxu0 0.0
          %1869 = vmatmul.mubr.f32.gmra.mxu0 %v1338
          %v1870 = vpop.f32.mrf.mxu0
          %v1871 = vadd.f32 0.0, %v1870
          %v1872 = vpop.f32.mrf.mxu0
          %1873 = vmatprep.mubr.f32.mxu0 0.0
          %1874 = vmatmul.mubr.f32.gmra.mxu0 %v1339
          %v1875 = vpop.f32.mrf.mxu0
          %v1876 = vadd.f32 0.0, %v1875
          %v1877 = vpop.f32.mrf.mxu0
          %1878 = vdwg.mxu0
          %v1879 = vadd.f32 %v1790, %v1861
          %v1880 = vadd.f32 %v1791, %v1866
          %v1881 = vadd.f32 %v1792, %v1871
          %v1882 = vadd.f32 %v1793, %v1876
          %1883 = vst.msk [vmem:[%s1014] sm:$0xff] %vm751, %v1879
          %1884 = vst.msk [vmem:[%s1014 + $0x8] sm:$0xff] %vm751, %v1880
          %1885 = vst.msk [vmem:[%s1014 + $0x10] sm:$0xff] %vm751, %v1881
          %1886 = vst.msk [vmem:[%s1014 + $0x18] sm:$0xff] %vm751, %v1882
          %1887 = vset.pattern.permute.xlu0 3
          %1888 = vperm.xlu0 %1887, %v1290
          %v1889 = vpop.permute.xlu0 %1888
          %1891 = vset.pattern.permute.xlu0 3
          %1892 = vperm.xlu0 %1891, %v1291
          %v1893 = vpop.permute.xlu0 %1892
          %1895 = vset.pattern.permute.xlu0 3
          %1896 = vperm.xlu0 %1895, %v1292
          %v1897 = vpop.permute.xlu0 %1896
          %1899 = vset.pattern.permute.xlu0 3
          %1900 = vperm.xlu0 %1899, %v1293
          %v1901 = vpop.permute.xlu0 %1900
          %1903 = vset.pattern.permute.xlu0 3
          %1904 = vperm.xlu0 %1903, %v1294
          %v1905 = vpop.permute.xlu0 %1904
          %1907 = vset.pattern.permute.xlu0 3
          %1908 = vperm.xlu0 %1907, %v1295
          %v1909 = vpop.permute.xlu0 %1908
          %1911 = vset.pattern.permute.xlu0 3
          %1912 = vperm.xlu0 %1911, %v1296
          %v1913 = vpop.permute.xlu0 %1912
          %1915 = vset.pattern.permute.xlu0 3
          %1916 = vperm.xlu0 %1915, %v1297
          %v1917 = vpop.permute.xlu0 %1916
          %1919 = vset.pattern.permute.xlu0 3
          %1920 = vperm.xlu0 %1919, %v1298
          %v1921 = vpop.permute.xlu0 %1920
          %1923 = vset.pattern.permute.xlu0 3
          %1924 = vperm.xlu0 %1923, %v1299
          %v1925 = vpop.permute.xlu0 %1924
          %1927 = vset.pattern.permute.xlu0 3
          %1928 = vperm.xlu0 %1927, %v1300
          %v1929 = vpop.permute.xlu0 %1928
          %1931 = vset.pattern.permute.xlu0 3
          %1932 = vperm.xlu0 %1931, %v1301
          %v1933 = vpop.permute.xlu0 %1932
          %1935 = vset.pattern.permute.xlu0 3
          %1936 = vperm.xlu0 %1935, %v1302
          %v1937 = vpop.permute.xlu0 %1936
          %1939 = vset.pattern.permute.xlu0 3
          %1940 = vperm.xlu0 %1939, %v1303
          %v1941 = vpop.permute.xlu0 %1940
          %1943 = vset.pattern.permute.xlu0 3
          %1944 = vperm.xlu0 %1943, %v1304
          %v1945 = vpop.permute.xlu0 %1944
          %1947 = vset.pattern.permute.xlu0 3
          %1948 = vperm.xlu0 %1947, %v1305
          %v1949 = vpop.permute.xlu0 %1948
          %v1951 = vmul.f32 %v1889, %v1306
          %v1952 = vmul.f32 %v1893, %v1307
          %v1953 = vmul.f32 %v1897, %v1308
          %v1954 = vmul.f32 %v1901, %v1309
          %v1955 = vmul.f32 %v1905, %v1310
          %v1956 = vmul.f32 %v1909, %v1311
          %v1957 = vmul.f32 %v1913, %v1312
          %v1958 = vmul.f32 %v1917, %v1313
          %v1959 = vmul.f32 %v1921, %v1314
          %v1960 = vmul.f32 %v1925, %v1315
          %v1961 = vmul.f32 %v1929, %v1316
          %v1962 = vmul.f32 %v1933, %v1317
          %v1963 = vmul.f32 %v1937, %v1318
          %v1964 = vmul.f32 %v1941, %v1319
          %v1965 = vmul.f32 %v1945, %v1320
          %v1966 = vmul.f32 %v1949, %v1321
          %v1967 = vld [vmem:[%s1192] sm:$0xff]
          %v1968 = vld [vmem:[%s1192 + $0x8] sm:$0xff]
          %v1969 = vld [vmem:[%s1192 + $0x10] sm:$0xff]
          %v1970 = vld [vmem:[%s1192 + $0x18] sm:$0xff]
          %1971 = vmatprep.subr.mxu0 0.0
          %1972 = vmatpush1.msra.mxu0 %v1966
          %1973 = vmatprep.subr.mxu0 0.0
          %1974 = vmatpush1.msra.mxu0 %v1965
          %1975 = vmatprep.subr.mxu0 0.0
          %1976 = vmatpush1.msra.mxu0 %v1964
          %1977 = vmatprep.subr.mxu0 0.0
          %1978 = vmatpush1.msra.mxu0 %v1963
          %1979 = vmatprep.subr.mxu0 0.0
          %1980 = vmatpush1.msra.mxu0 %v1962
          %1981 = vmatprep.subr.mxu0 0.0
          %1982 = vmatpush1.msra.mxu0 %v1961
          %1983 = vmatprep.subr.mxu0 0.0
          %1984 = vmatpush1.msra.mxu0 %v1960
          %1985 = vmatprep.subr.mxu0 0.0
          %1986 = vmatpush1.msra.mxu0 %v1959
          %1987 = vmatprep.subr.mxu0 0.0
          %1988 = vmatpush1.msra.mxu0 %v1958
          %1989 = vmatprep.subr.mxu0 0.0
          %1990 = vmatpush1.msra.mxu0 %v1957
          %1991 = vmatprep.subr.mxu0 0.0
          %1992 = vmatpush1.msra.mxu0 %v1956
          %1993 = vmatprep.subr.mxu0 0.0
          %1994 = vmatpush1.msra.mxu0 %v1955
          %1995 = vmatprep.subr.mxu0 0.0
          %1996 = vmatpush1.msra.mxu0 %v1954
          %1997 = vmatprep.subr.mxu0 0.0
          %1998 = vmatpush1.msra.mxu0 %v1953
          %1999 = vmatprep.subr.mxu0 0.0
          %2000 = vmatpush1.msra.mxu0 %v1952
          %2001 = vmatprep.subr.mxu0 0.0
          %2002 = vmatpush1.msra.mxu0 %v1951
          %2003 = vmatprep.subr.mxu0 0.0
          %2004 = vmatpush2.msra.mxu0 0.0
          %2005 = vmatprep.subr.mxu0 0.0
          %2006 = vmatpush2.msra.mxu0 0.0
          %2007 = vmatprep.subr.mxu0 0.0
          %2008 = vmatpush2.msra.mxu0 0.0
          %2009 = vmatprep.subr.mxu0 0.0
          %2010 = vmatpush2.msra.mxu0 0.0
          %2011 = vmatprep.subr.mxu0 0.0
          %2012 = vmatpush2.msra.mxu0 0.0
          %2013 = vmatprep.subr.mxu0 0.0
          %2014 = vmatpush2.msra.mxu0 0.0
          %2015 = vmatprep.subr.mxu0 0.0
          %2016 = vmatpush2.msra.mxu0 0.0
          %2017 = vmatprep.subr.mxu0 0.0
          %2018 = vmatpush2.msra.mxu0 0.0
          %2019 = vmatprep.subr.mxu0 0.0
          %2020 = vmatpush2.msra.mxu0 0.0
          %2021 = vmatprep.subr.mxu0 0.0
          %2022 = vmatpush2.msra.mxu0 0.0
          %2023 = vmatprep.subr.mxu0 0.0
          %2024 = vmatpush2.msra.mxu0 0.0
          %2025 = vmatprep.subr.mxu0 0.0
          %2026 = vmatpush2.msra.mxu0 0.0
          %2027 = vmatprep.subr.mxu0 0.0
          %2028 = vmatpush2.msra.mxu0 0.0
          %2029 = vmatprep.subr.mxu0 0.0
          %2030 = vmatpush2.msra.mxu0 0.0
          %2031 = vmatprep.subr.mxu0 0.0
          %2032 = vmatpush2.msra.mxu0 0.0
          %2033 = vmatprep.subr.mxu0 0.0
          %2034 = vmatpush2.msra.mxu0 0.0
          %2035 = vmatprep.mubr.f32.mxu0 0.0
          %2036 = vmatmul.mubr.f32.gmra.mxu0 %v1336
          %v2037 = vpop.f32.mrf.mxu0
          %v2038 = vadd.f32 0.0, %v2037
          %v2039 = vpop.f32.mrf.mxu0
          %2040 = vmatprep.mubr.f32.mxu0 0.0
          %2041 = vmatmul.mubr.f32.gmra.mxu0 %v1337
          %v2042 = vpop.f32.mrf.mxu0
          %v2043 = vadd.f32 0.0, %v2042
          %v2044 = vpop.f32.mrf.mxu0
          %2045 = vmatprep.mubr.f32.mxu0 0.0
          %2046 = vmatmul.mubr.f32.gmra.mxu0 %v1338
          %v2047 = vpop.f32.mrf.mxu0
          %v2048 = vadd.f32 0.0, %v2047
          %v2049 = vpop.f32.mrf.mxu0
          %2050 = vmatprep.mubr.f32.mxu0 0.0
          %2051 = vmatmul.mubr.f32.gmra.mxu0 %v1339
          %v2052 = vpop.f32.mrf.mxu0
          %v2053 = vadd.f32 0.0, %v2052
          %v2054 = vpop.f32.mrf.mxu0
          %2055 = vdwg.mxu0
          %v2056 = vadd.f32 %v1967, %v2038
          %v2057 = vadd.f32 %v1968, %v2043
          %v2058 = vadd.f32 %v1969, %v2048
          %v2059 = vadd.f32 %v1970, %v2053
          %2060 = vst.msk [vmem:[%s1192] sm:$0xff] %vm751, %v2056
          %2061 = vst.msk [vmem:[%s1192 + $0x8] sm:$0xff] %vm751, %v2057
          %2062 = vst.msk [vmem:[%s1192 + $0x10] sm:$0xff] %vm751, %v2058
          %2063 = vst.msk [vmem:[%s1192 + $0x18] sm:$0xff] %vm751, %v2059
          %v2064 = vld [vmem:[%s420 + $0x100] sm:$0xff]
          %v2065 = vld [vmem:[%s420 + $0x108] sm:$0xff]
          %v2066 = vld [vmem:[%s420 + $0x110] sm:$0xff]
          %v2067 = vld [vmem:[%s420 + $0x118] sm:$0xff]
          %v2068 = vld [vmem:[%s420 + $0x120] sm:$0xff]
          %v2069 = vld [vmem:[%s420 + $0x128] sm:$0xff]
          %v2070 = vld [vmem:[%s420 + $0x130] sm:$0xff]
          %v2071 = vld [vmem:[%s420 + $0x138] sm:$0xff]
          %v2072 = vld [vmem:[%s420 + $0x140] sm:$0xff]
          %v2073 = vld [vmem:[%s420 + $0x148] sm:$0xff]
          %v2074 = vld [vmem:[%s420 + $0x150] sm:$0xff]
          %v2075 = vld [vmem:[%s420 + $0x158] sm:$0xff]
          %v2076 = vld [vmem:[%s420 + $0x160] sm:$0xff]
          %v2077 = vld [vmem:[%s420 + $0x168] sm:$0xff]
          %v2078 = vld [vmem:[%s420 + $0x170] sm:$0xff]
          %v2079 = vld [vmem:[%s420 + $0x178] sm:$0xff]
          %v2080 = vld [vmem:[%s462 + $0x100] sm:$0xff]
          %v2081 = vld [vmem:[%s462 + $0x108] sm:$0xff]
          %v2082 = vld [vmem:[%s462 + $0x110] sm:$0xff]
          %v2083 = vld [vmem:[%s462 + $0x118] sm:$0xff]
          %v2084 = vld [vmem:[%s462 + $0x120] sm:$0xff]
          %v2085 = vld [vmem:[%s462 + $0x128] sm:$0xff]
          %v2086 = vld [vmem:[%s462 + $0x130] sm:$0xff]
          %v2087 = vld [vmem:[%s462 + $0x138] sm:$0xff]
          %v2088 = vld [vmem:[%s462 + $0x140] sm:$0xff]
          %v2089 = vld [vmem:[%s462 + $0x148] sm:$0xff]
          %v2090 = vld [vmem:[%s462 + $0x150] sm:$0xff]
          %v2091 = vld [vmem:[%s462 + $0x158] sm:$0xff]
          %v2092 = vld [vmem:[%s462 + $0x160] sm:$0xff]
          %v2093 = vld [vmem:[%s462 + $0x168] sm:$0xff]
          %v2094 = vld [vmem:[%s462 + $0x170] sm:$0xff]
          %v2095 = vld [vmem:[%s462 + $0x178] sm:$0xff]
          %v2096 = vld [vmem:[%s441 + $0x2] sm:$0x1]
          %v2097 = vsub.s32 %v2096, %v539
          %v2098 = vlaneseq
          %v2099 = vshrl.u32 %v2098, 7
          %v2100 = vsub.s32 0, %v2099
          %v2101 = vrot.slane %v2097, %v2100
          %vm2102 = vcmp.eq.s32.totalorder %v542, %v2101
          %vm2103 = vcmp.eq.s32.totalorder %v543, %v2101
          %vm2104 = vcmp.eq.s32.totalorder %v544, %v2101
          %vm2105 = vcmp.eq.s32.totalorder %v545, %v2101
          %v2106 = vsel %vm2102, 1, 0
          %v2107 = vsel %vm2103, 1, 0
          %v2108 = vsel %vm2104, 1, 0
          %v2109 = vsel %vm2105, 1, 0
          %v2110 = vcvt.s32.f32 %v2106
          %v2111 = vcvt.s32.f32 %v2107
          %v2112 = vcvt.s32.f32 %v2108
          %v2113 = vcvt.s32.f32 %v2109
          %2115 = vset.pattern.permute.xlu0 0
          %2116 = vperm.xlu0 %2115, %v2064
          %v2117 = vpop.permute.xlu0 %2116
          %2120 = vset.pattern.permute.xlu0 0
          %2121 = vperm.xlu0 %2120, %v2065
          %v2122 = vpop.permute.xlu0 %2121
          %2125 = vset.pattern.permute.xlu0 0
          %2126 = vperm.xlu0 %2125, %v2066
          %v2127 = vpop.permute.xlu0 %2126
          %2130 = vset.pattern.permute.xlu0 0
          %2131 = vperm.xlu0 %2130, %v2067
          %v2132 = vpop.permute.xlu0 %2131
          %2135 = vset.pattern.permute.xlu0 0
          %2136 = vperm.xlu0 %2135, %v2068
          %v2137 = vpop.permute.xlu0 %2136
          %2140 = vset.pattern.permute.xlu0 0
          %2141 = vperm.xlu0 %2140, %v2069
          %v2142 = vpop.permute.xlu0 %2141
          %2145 = vset.pattern.permute.xlu0 0
          %2146 = vperm.xlu0 %2145, %v2070
          %v2147 = vpop.permute.xlu0 %2146
          %2150 = vset.pattern.permute.xlu0 0
          %2151 = vperm.xlu0 %2150, %v2071
          %v2152 = vpop.permute.xlu0 %2151
          %2155 = vset.pattern.permute.xlu0 0
          %2156 = vperm.xlu0 %2155, %v2072
          %v2157 = vpop.permute.xlu0 %2156
          %2160 = vset.pattern.permute.xlu0 0
          %2161 = vperm.xlu0 %2160, %v2073
          %v2162 = vpop.permute.xlu0 %2161
          %2165 = vset.pattern.permute.xlu0 0
          %2166 = vperm.xlu0 %2165, %v2074
          %v2167 = vpop.permute.xlu0 %2166
          %2170 = vset.pattern.permute.xlu0 0
          %2171 = vperm.xlu0 %2170, %v2075
          %v2172 = vpop.permute.xlu0 %2171
          %2175 = vset.pattern.permute.xlu0 0
          %2176 = vperm.xlu0 %2175, %v2076
          %v2177 = vpop.permute.xlu0 %2176
          %2180 = vset.pattern.permute.xlu0 0
          %2181 = vperm.xlu0 %2180, %v2077
          %v2182 = vpop.permute.xlu0 %2181
          %2185 = vset.pattern.permute.xlu0 0
          %2186 = vperm.xlu0 %2185, %v2078
          %v2187 = vpop.permute.xlu0 %2186
          %2190 = vset.pattern.permute.xlu0 0
          %2191 = vperm.xlu0 %2190, %v2079
          %v2192 = vpop.permute.xlu0 %2191
          %v2194 = vmul.f32 %v2117, %v2080
          %v2195 = vmul.f32 %v2122, %v2081
          %v2196 = vmul.f32 %v2127, %v2082
          %v2197 = vmul.f32 %v2132, %v2083
          %v2198 = vmul.f32 %v2137, %v2084
          %v2199 = vmul.f32 %v2142, %v2085
          %v2200 = vmul.f32 %v2147, %v2086
          %v2201 = vmul.f32 %v2152, %v2087
          %v2202 = vmul.f32 %v2157, %v2088
          %v2203 = vmul.f32 %v2162, %v2089
          %v2204 = vmul.f32 %v2167, %v2090
          %v2205 = vmul.f32 %v2172, %v2091
          %v2206 = vmul.f32 %v2177, %v2092
          %v2207 = vmul.f32 %v2182, %v2093
          %v2208 = vmul.f32 %v2187, %v2094
          %v2209 = vmul.f32 %v2192, %v2095
          %v2210 = vld [vmem:[#allocation2] sm:$0xff]
          %v2211 = vld [vmem:[#allocation2 + $0x8] sm:$0xff]
          %v2212 = vld [vmem:[#allocation2 + $0x10] sm:$0xff]
          %v2213 = vld [vmem:[#allocation2 + $0x18] sm:$0xff]
          %2214 = vmatprep.subr.mxu0 0.0
          %2215 = vmatpush1.msra.mxu0 %v2209
          %2216 = vmatprep.subr.mxu0 0.0
          %2217 = vmatpush1.msra.mxu0 %v2208
          %2218 = vmatprep.subr.mxu0 0.0
          %2219 = vmatpush1.msra.mxu0 %v2207
          %2220 = vmatprep.subr.mxu0 0.0
          %2221 = vmatpush1.msra.mxu0 %v2206
          %2222 = vmatprep.subr.mxu0 0.0
          %2223 = vmatpush1.msra.mxu0 %v2205
          %2224 = vmatprep.subr.mxu0 0.0
          %2225 = vmatpush1.msra.mxu0 %v2204
          %2226 = vmatprep.subr.mxu0 0.0
          %2227 = vmatpush1.msra.mxu0 %v2203
          %2228 = vmatprep.subr.mxu0 0.0
          %2229 = vmatpush1.msra.mxu0 %v2202
          %2230 = vmatprep.subr.mxu0 0.0
          %2231 = vmatpush1.msra.mxu0 %v2201
          %2232 = vmatprep.subr.mxu0 0.0
          %2233 = vmatpush1.msra.mxu0 %v2200
          %2234 = vmatprep.subr.mxu0 0.0
          %2235 = vmatpush1.msra.mxu0 %v2199
          %2236 = vmatprep.subr.mxu0 0.0
          %2237 = vmatpush1.msra.mxu0 %v2198
          %2238 = vmatprep.subr.mxu0 0.0
          %2239 = vmatpush1.msra.mxu0 %v2197
          %2240 = vmatprep.subr.mxu0 0.0
          %2241 = vmatpush1.msra.mxu0 %v2196
          %2242 = vmatprep.subr.mxu0 0.0
          %2243 = vmatpush1.msra.mxu0 %v2195
          %2244 = vmatprep.subr.mxu0 0.0
          %2245 = vmatpush1.msra.mxu0 %v2194
          %2246 = vmatprep.subr.mxu0 0.0
          %2247 = vmatpush2.msra.mxu0 0.0
          %2248 = vmatprep.subr.mxu0 0.0
          %2249 = vmatpush2.msra.mxu0 0.0
          %2250 = vmatprep.subr.mxu0 0.0
          %2251 = vmatpush2.msra.mxu0 0.0
          %2252 = vmatprep.subr.mxu0 0.0
          %2253 = vmatpush2.msra.mxu0 0.0
          %2254 = vmatprep.subr.mxu0 0.0
          %2255 = vmatpush2.msra.mxu0 0.0
          %2256 = vmatprep.subr.mxu0 0.0
          %2257 = vmatpush2.msra.mxu0 0.0
          %2258 = vmatprep.subr.mxu0 0.0
          %2259 = vmatpush2.msra.mxu0 0.0
          %2260 = vmatprep.subr.mxu0 0.0
          %2261 = vmatpush2.msra.mxu0 0.0
          %2262 = vmatprep.subr.mxu0 0.0
          %2263 = vmatpush2.msra.mxu0 0.0
          %2264 = vmatprep.subr.mxu0 0.0
          %2265 = vmatpush2.msra.mxu0 0.0
          %2266 = vmatprep.subr.mxu0 0.0
          %2267 = vmatpush2.msra.mxu0 0.0
          %2268 = vmatprep.subr.mxu0 0.0
          %2269 = vmatpush2.msra.mxu0 0.0
          %2270 = vmatprep.subr.mxu0 0.0
          %2271 = vmatpush2.msra.mxu0 0.0
          %2272 = vmatprep.subr.mxu0 0.0
          %2273 = vmatpush2.msra.mxu0 0.0
          %2274 = vmatprep.subr.mxu0 0.0
          %2275 = vmatpush2.msra.mxu0 0.0
          %2276 = vmatprep.subr.mxu0 0.0
          %2277 = vmatpush2.msra.mxu0 0.0
          %2278 = vmatprep.mubr.f32.mxu0 0.0
          %2279 = vmatmul.mubr.f32.gmra.mxu0 %v2110
          %v2280 = vpop.f32.mrf.mxu0
          %v2281 = vadd.f32 0.0, %v2280
          %v2282 = vpop.f32.mrf.mxu0
          %2283 = vmatprep.mubr.f32.mxu0 0.0
          %2284 = vmatmul.mubr.f32.gmra.mxu0 %v2111
          %v2285 = vpop.f32.mrf.mxu0
          %v2286 = vadd.f32 0.0, %v2285
          %v2287 = vpop.f32.mrf.mxu0
          %2288 = vmatprep.mubr.f32.mxu0 0.0
          %2289 = vmatmul.mubr.f32.gmra.mxu0 %v2112
          %v2290 = vpop.f32.mrf.mxu0
          %v2291 = vadd.f32 0.0, %v2290
          %v2292 = vpop.f32.mrf.mxu0
          %2293 = vmatprep.mubr.f32.mxu0 0.0
          %2294 = vmatmul.mubr.f32.gmra.mxu0 %v2113
          %v2295 = vpop.f32.mrf.mxu0
          %v2296 = vadd.f32 0.0, %v2295
          %v2297 = vpop.f32.mrf.mxu0
          %2298 = vdwg.mxu0
          %v2299 = vadd.f32 %v2210, %v2281
          %v2300 = vadd.f32 %v2211, %v2286
          %v2301 = vadd.f32 %v2212, %v2291
          %v2302 = vadd.f32 %v2213, %v2296
          %2303 = vst.msk [vmem:[#allocation2] sm:$0xff] %vm751, %v2299
          %2304 = vst.msk [vmem:[#allocation2 + $0x8] sm:$0xff] %vm751, %v2300
          %2305 = vst.msk [vmem:[#allocation2 + $0x10] sm:$0xff] %vm751, %v2301
          %2306 = vst.msk [vmem:[#allocation2 + $0x18] sm:$0xff] %vm751, %v2302
          %2307 = vset.pattern.permute.xlu0 1
          %2308 = vperm.xlu0 %2307, %v2064
          %v2309 = vpop.permute.xlu0 %2308
          %2311 = vset.pattern.permute.xlu0 1
          %2312 = vperm.xlu0 %2311, %v2065
          %v2313 = vpop.permute.xlu0 %2312
          %2315 = vset.pattern.permute.xlu0 1
          %2316 = vperm.xlu0 %2315, %v2066
          %v2317 = vpop.permute.xlu0 %2316
          %2319 = vset.pattern.permute.xlu0 1
          %2320 = vperm.xlu0 %2319, %v2067
          %v2321 = vpop.permute.xlu0 %2320
          %2323 = vset.pattern.permute.xlu0 1
          %2324 = vperm.xlu0 %2323, %v2068
          %v2325 = vpop.permute.xlu0 %2324
          %2327 = vset.pattern.permute.xlu0 1
          %2328 = vperm.xlu0 %2327, %v2069
          %v2329 = vpop.permute.xlu0 %2328
          %2331 = vset.pattern.permute.xlu0 1
          %2332 = vperm.xlu0 %2331, %v2070
          %v2333 = vpop.permute.xlu0 %2332
          %2335 = vset.pattern.permute.xlu0 1
          %2336 = vperm.xlu0 %2335, %v2071
          %v2337 = vpop.permute.xlu0 %2336
          %2339 = vset.pattern.permute.xlu0 1
          %2340 = vperm.xlu0 %2339, %v2072
          %v2341 = vpop.permute.xlu0 %2340
          %2343 = vset.pattern.permute.xlu0 1
          %2344 = vperm.xlu0 %2343, %v2073
          %v2345 = vpop.permute.xlu0 %2344
          %2347 = vset.pattern.permute.xlu0 1
          %2348 = vperm.xlu0 %2347, %v2074
          %v2349 = vpop.permute.xlu0 %2348
          %2351 = vset.pattern.permute.xlu0 1
          %2352 = vperm.xlu0 %2351, %v2075
          %v2353 = vpop.permute.xlu0 %2352
          %2355 = vset.pattern.permute.xlu0 1
          %2356 = vperm.xlu0 %2355, %v2076
          %v2357 = vpop.permute.xlu0 %2356
          %2359 = vset.pattern.permute.xlu0 1
          %2360 = vperm.xlu0 %2359, %v2077
          %v2361 = vpop.permute.xlu0 %2360
          %2363 = vset.pattern.permute.xlu0 1
          %2364 = vperm.xlu0 %2363, %v2078
          %v2365 = vpop.permute.xlu0 %2364
          %2367 = vset.pattern.permute.xlu0 1
          %2368 = vperm.xlu0 %2367, %v2079
          %v2369 = vpop.permute.xlu0 %2368
          %v2371 = vmul.f32 %v2309, %v2080
          %v2372 = vmul.f32 %v2313, %v2081
          %v2373 = vmul.f32 %v2317, %v2082
          %v2374 = vmul.f32 %v2321, %v2083
          %v2375 = vmul.f32 %v2325, %v2084
          %v2376 = vmul.f32 %v2329, %v2085
          %v2377 = vmul.f32 %v2333, %v2086
          %v2378 = vmul.f32 %v2337, %v2087
          %v2379 = vmul.f32 %v2341, %v2088
          %v2380 = vmul.f32 %v2345, %v2089
          %v2381 = vmul.f32 %v2349, %v2090
          %v2382 = vmul.f32 %v2353, %v2091
          %v2383 = vmul.f32 %v2357, %v2092
          %v2384 = vmul.f32 %v2361, %v2093
          %v2385 = vmul.f32 %v2365, %v2094
          %v2386 = vmul.f32 %v2369, %v2095
          %v2387 = vld [vmem:[%s836] sm:$0xff]
          %v2388 = vld [vmem:[%s836 + $0x8] sm:$0xff]
          %v2389 = vld [vmem:[%s836 + $0x10] sm:$0xff]
          %v2390 = vld [vmem:[%s836 + $0x18] sm:$0xff]
          %2391 = vmatprep.subr.mxu0 0.0
          %2392 = vmatpush1.msra.mxu0 %v2386
          %2393 = vmatprep.subr.mxu0 0.0
          %2394 = vmatpush1.msra.mxu0 %v2385
          %2395 = vmatprep.subr.mxu0 0.0
          %2396 = vmatpush1.msra.mxu0 %v2384
          %2397 = vmatprep.subr.mxu0 0.0
          %2398 = vmatpush1.msra.mxu0 %v2383
          %2399 = vmatprep.subr.mxu0 0.0
          %2400 = vmatpush1.msra.mxu0 %v2382
          %2401 = vmatprep.subr.mxu0 0.0
          %2402 = vmatpush1.msra.mxu0 %v2381
          %2403 = vmatprep.subr.mxu0 0.0
          %2404 = vmatpush1.msra.mxu0 %v2380
          %2405 = vmatprep.subr.mxu0 0.0
          %2406 = vmatpush1.msra.mxu0 %v2379
          %2407 = vmatprep.subr.mxu0 0.0
          %2408 = vmatpush1.msra.mxu0 %v2378
          %2409 = vmatprep.subr.mxu0 0.0
          %2410 = vmatpush1.msra.mxu0 %v2377
          %2411 = vmatprep.subr.mxu0 0.0
          %2412 = vmatpush1.msra.mxu0 %v2376
          %2413 = vmatprep.subr.mxu0 0.0
          %2414 = vmatpush1.msra.mxu0 %v2375
          %2415 = vmatprep.subr.mxu0 0.0
          %2416 = vmatpush1.msra.mxu0 %v2374
          %2417 = vmatprep.subr.mxu0 0.0
          %2418 = vmatpush1.msra.mxu0 %v2373
          %2419 = vmatprep.subr.mxu0 0.0
          %2420 = vmatpush1.msra.mxu0 %v2372
          %2421 = vmatprep.subr.mxu0 0.0
          %2422 = vmatpush1.msra.mxu0 %v2371
          %2423 = vmatprep.subr.mxu0 0.0
          %2424 = vmatpush2.msra.mxu0 0.0
          %2425 = vmatprep.subr.mxu0 0.0
          %2426 = vmatpush2.msra.mxu0 0.0
          %2427 = vmatprep.subr.mxu0 0.0
          %2428 = vmatpush2.msra.mxu0 0.0
          %2429 = vmatprep.subr.mxu0 0.0
          %2430 = vmatpush2.msra.mxu0 0.0
          %2431 = vmatprep.subr.mxu0 0.0
          %2432 = vmatpush2.msra.mxu0 0.0
          %2433 = vmatprep.subr.mxu0 0.0
          %2434 = vmatpush2.msra.mxu0 0.0
          %2435 = vmatprep.subr.mxu0 0.0
          %2436 = vmatpush2.msra.mxu0 0.0
          %2437 = vmatprep.subr.mxu0 0.0
          %2438 = vmatpush2.msra.mxu0 0.0
          %2439 = vmatprep.subr.mxu0 0.0
          %2440 = vmatpush2.msra.mxu0 0.0
          %2441 = vmatprep.subr.mxu0 0.0
          %2442 = vmatpush2.msra.mxu0 0.0
          %2443 = vmatprep.subr.mxu0 0.0
          %2444 = vmatpush2.msra.mxu0 0.0
          %2445 = vmatprep.subr.mxu0 0.0
          %2446 = vmatpush2.msra.mxu0 0.0
          %2447 = vmatprep.subr.mxu0 0.0
          %2448 = vmatpush2.msra.mxu0 0.0
          %2449 = vmatprep.subr.mxu0 0.0
          %2450 = vmatpush2.msra.mxu0 0.0
          %2451 = vmatprep.subr.mxu0 0.0
          %2452 = vmatpush2.msra.mxu0 0.0
          %2453 = vmatprep.subr.mxu0 0.0
          %2454 = vmatpush2.msra.mxu0 0.0
          %2455 = vmatprep.mubr.f32.mxu0 0.0
          %2456 = vmatmul.mubr.f32.gmra.mxu0 %v2110
          %v2457 = vpop.f32.mrf.mxu0
          %v2458 = vadd.f32 0.0, %v2457
          %v2459 = vpop.f32.mrf.mxu0
          %2460 = vmatprep.mubr.f32.mxu0 0.0
          %2461 = vmatmul.mubr.f32.gmra.mxu0 %v2111
          %v2462 = vpop.f32.mrf.mxu0
          %v2463 = vadd.f32 0.0, %v2462
          %v2464 = vpop.f32.mrf.mxu0
          %2465 = vmatprep.mubr.f32.mxu0 0.0
          %2466 = vmatmul.mubr.f32.gmra.mxu0 %v2112
          %v2467 = vpop.f32.mrf.mxu0
          %v2468 = vadd.f32 0.0, %v2467
          %v2469 = vpop.f32.mrf.mxu0
          %2470 = vmatprep.mubr.f32.mxu0 0.0
          %2471 = vmatmul.mubr.f32.gmra.mxu0 %v2113
          %v2472 = vpop.f32.mrf.mxu0
          %v2473 = vadd.f32 0.0, %v2472
          %v2474 = vpop.f32.mrf.mxu0
          %2475 = vdwg.mxu0
          %v2476 = vadd.f32 %v2387, %v2458
          %v2477 = vadd.f32 %v2388, %v2463
          %v2478 = vadd.f32 %v2389, %v2468
          %v2479 = vadd.f32 %v2390, %v2473
          %2480 = vst.msk [vmem:[%s836] sm:$0xff] %vm751, %v2476
          %2481 = vst.msk [vmem:[%s836 + $0x8] sm:$0xff] %vm751, %v2477
          %2482 = vst.msk [vmem:[%s836 + $0x10] sm:$0xff] %vm751, %v2478
          %2483 = vst.msk [vmem:[%s836 + $0x18] sm:$0xff] %vm751, %v2479
          %2484 = vset.pattern.permute.xlu0 2
          %2485 = vperm.xlu0 %2484, %v2064
          %v2486 = vpop.permute.xlu0 %2485
          %2488 = vset.pattern.permute.xlu0 2
          %2489 = vperm.xlu0 %2488, %v2065
          %v2490 = vpop.permute.xlu0 %2489
          %2492 = vset.pattern.permute.xlu0 2
          %2493 = vperm.xlu0 %2492, %v2066
          %v2494 = vpop.permute.xlu0 %2493
          %2496 = vset.pattern.permute.xlu0 2
          %2497 = vperm.xlu0 %2496, %v2067
          %v2498 = vpop.permute.xlu0 %2497
          %2500 = vset.pattern.permute.xlu0 2
          %2501 = vperm.xlu0 %2500, %v2068
          %v2502 = vpop.permute.xlu0 %2501
          %2504 = vset.pattern.permute.xlu0 2
          %2505 = vperm.xlu0 %2504, %v2069
          %v2506 = vpop.permute.xlu0 %2505
          %2508 = vset.pattern.permute.xlu0 2
          %2509 = vperm.xlu0 %2508, %v2070
          %v2510 = vpop.permute.xlu0 %2509
          %2512 = vset.pattern.permute.xlu0 2
          %2513 = vperm.xlu0 %2512, %v2071
          %v2514 = vpop.permute.xlu0 %2513
          %2516 = vset.pattern.permute.xlu0 2
          %2517 = vperm.xlu0 %2516, %v2072
          %v2518 = vpop.permute.xlu0 %2517
          %2520 = vset.pattern.permute.xlu0 2
          %2521 = vperm.xlu0 %2520, %v2073
          %v2522 = vpop.permute.xlu0 %2521
          %2524 = vset.pattern.permute.xlu0 2
          %2525 = vperm.xlu0 %2524, %v2074
          %v2526 = vpop.permute.xlu0 %2525
          %2528 = vset.pattern.permute.xlu0 2
          %2529 = vperm.xlu0 %2528, %v2075
          %v2530 = vpop.permute.xlu0 %2529
          %2532 = vset.pattern.permute.xlu0 2
          %2533 = vperm.xlu0 %2532, %v2076
          %v2534 = vpop.permute.xlu0 %2533
          %2536 = vset.pattern.permute.xlu0 2
          %2537 = vperm.xlu0 %2536, %v2077
          %v2538 = vpop.permute.xlu0 %2537
          %2540 = vset.pattern.permute.xlu0 2
          %2541 = vperm.xlu0 %2540, %v2078
          %v2542 = vpop.permute.xlu0 %2541
          %2544 = vset.pattern.permute.xlu0 2
          %2545 = vperm.xlu0 %2544, %v2079
          %v2546 = vpop.permute.xlu0 %2545
          %v2548 = vmul.f32 %v2486, %v2080
          %v2549 = vmul.f32 %v2490, %v2081
          %v2550 = vmul.f32 %v2494, %v2082
          %v2551 = vmul.f32 %v2498, %v2083
          %v2552 = vmul.f32 %v2502, %v2084
          %v2553 = vmul.f32 %v2506, %v2085
          %v2554 = vmul.f32 %v2510, %v2086
          %v2555 = vmul.f32 %v2514, %v2087
          %v2556 = vmul.f32 %v2518, %v2088
          %v2557 = vmul.f32 %v2522, %v2089
          %v2558 = vmul.f32 %v2526, %v2090
          %v2559 = vmul.f32 %v2530, %v2091
          %v2560 = vmul.f32 %v2534, %v2092
          %v2561 = vmul.f32 %v2538, %v2093
          %v2562 = vmul.f32 %v2542, %v2094
          %v2563 = vmul.f32 %v2546, %v2095
          %v2564 = vld [vmem:[%s1014] sm:$0xff]
          %v2565 = vld [vmem:[%s1014 + $0x8] sm:$0xff]
          %v2566 = vld [vmem:[%s1014 + $0x10] sm:$0xff]
          %v2567 = vld [vmem:[%s1014 + $0x18] sm:$0xff]
          %2568 = vmatprep.subr.mxu0 0.0
          %2569 = vmatpush1.msra.mxu0 %v2563
          %2570 = vmatprep.subr.mxu0 0.0
          %2571 = vmatpush1.msra.mxu0 %v2562
          %2572 = vmatprep.subr.mxu0 0.0
          %2573 = vmatpush1.msra.mxu0 %v2561
          %2574 = vmatprep.subr.mxu0 0.0
          %2575 = vmatpush1.msra.mxu0 %v2560
          %2576 = vmatprep.subr.mxu0 0.0
          %2577 = vmatpush1.msra.mxu0 %v2559
          %2578 = vmatprep.subr.mxu0 0.0
          %2579 = vmatpush1.msra.mxu0 %v2558
          %2580 = vmatprep.subr.mxu0 0.0
          %2581 = vmatpush1.msra.mxu0 %v2557
          %2582 = vmatprep.subr.mxu0 0.0
          %2583 = vmatpush1.msra.mxu0 %v2556
          %2584 = vmatprep.subr.mxu0 0.0
          %2585 = vmatpush1.msra.mxu0 %v2555
          %2586 = vmatprep.subr.mxu0 0.0
          %2587 = vmatpush1.msra.mxu0 %v2554
          %2588 = vmatprep.subr.mxu0 0.0
          %2589 = vmatpush1.msra.mxu0 %v2553
          %2590 = vmatprep.subr.mxu0 0.0
          %2591 = vmatpush1.msra.mxu0 %v2552
          %2592 = vmatprep.subr.mxu0 0.0
          %2593 = vmatpush1.msra.mxu0 %v2551
          %2594 = vmatprep.subr.mxu0 0.0
          %2595 = vmatpush1.msra.mxu0 %v2550
          %2596 = vmatprep.subr.mxu0 0.0
          %2597 = vmatpush1.msra.mxu0 %v2549
          %2598 = vmatprep.subr.mxu0 0.0
          %2599 = vmatpush1.msra.mxu0 %v2548
          %2600 = vmatprep.subr.mxu0 0.0
          %2601 = vmatpush2.msra.mxu0 0.0
          %2602 = vmatprep.subr.mxu0 0.0
          %2603 = vmatpush2.msra.mxu0 0.0
          %2604 = vmatprep.subr.mxu0 0.0
          %2605 = vmatpush2.msra.mxu0 0.0
          %2606 = vmatprep.subr.mxu0 0.0
          %2607 = vmatpush2.msra.mxu0 0.0
          %2608 = vmatprep.subr.mxu0 0.0
          %2609 = vmatpush2.msra.mxu0 0.0
          %2610 = vmatprep.subr.mxu0 0.0
          %2611 = vmatpush2.msra.mxu0 0.0
          %2612 = vmatprep.subr.mxu0 0.0
          %2613 = vmatpush2.msra.mxu0 0.0
          %2614 = vmatprep.subr.mxu0 0.0
          %2615 = vmatpush2.msra.mxu0 0.0
          %2616 = vmatprep.subr.mxu0 0.0
          %2617 = vmatpush2.msra.mxu0 0.0
          %2618 = vmatprep.subr.mxu0 0.0
          %2619 = vmatpush2.msra.mxu0 0.0
          %2620 = vmatprep.subr.mxu0 0.0
          %2621 = vmatpush2.msra.mxu0 0.0
          %2622 = vmatprep.subr.mxu0 0.0
          %2623 = vmatpush2.msra.mxu0 0.0
          %2624 = vmatprep.subr.mxu0 0.0
          %2625 = vmatpush2.msra.mxu0 0.0
          %2626 = vmatprep.subr.mxu0 0.0
          %2627 = vmatpush2.msra.mxu0 0.0
          %2628 = vmatprep.subr.mxu0 0.0
          %2629 = vmatpush2.msra.mxu0 0.0
          %2630 = vmatprep.subr.mxu0 0.0
          %2631 = vmatpush2.msra.mxu0 0.0
          %2632 = vmatprep.mubr.f32.mxu0 0.0
          %2633 = vmatmul.mubr.f32.gmra.mxu0 %v2110
          %v2634 = vpop.f32.mrf.mxu0
          %v2635 = vadd.f32 0.0, %v2634
          %v2636 = vpop.f32.mrf.mxu0
          %2637 = vmatprep.mubr.f32.mxu0 0.0
          %2638 = vmatmul.mubr.f32.gmra.mxu0 %v2111
          %v2639 = vpop.f32.mrf.mxu0
          %v2640 = vadd.f32 0.0, %v2639
          %v2641 = vpop.f32.mrf.mxu0
          %2642 = vmatprep.mubr.f32.mxu0 0.0
          %2643 = vmatmul.mubr.f32.gmra.mxu0 %v2112
          %v2644 = vpop.f32.mrf.mxu0
          %v2645 = vadd.f32 0.0, %v2644
          %v2646 = vpop.f32.mrf.mxu0
          %2647 = vmatprep.mubr.f32.mxu0 0.0
          %2648 = vmatmul.mubr.f32.gmra.mxu0 %v2113
          %v2649 = vpop.f32.mrf.mxu0
          %v2650 = vadd.f32 0.0, %v2649
          %v2651 = vpop.f32.mrf.mxu0
          %2652 = vdwg.mxu0
          %v2653 = vadd.f32 %v2564, %v2635
          %v2654 = vadd.f32 %v2565, %v2640
          %v2655 = vadd.f32 %v2566, %v2645
          %v2656 = vadd.f32 %v2567, %v2650
          %2657 = vst.msk [vmem:[%s1014] sm:$0xff] %vm751, %v2653
          %2658 = vst.msk [vmem:[%s1014 + $0x8] sm:$0xff] %vm751, %v2654
          %2659 = vst.msk [vmem:[%s1014 + $0x10] sm:$0xff] %vm751, %v2655
          %2660 = vst.msk [vmem:[%s1014 + $0x18] sm:$0xff] %vm751, %v2656
          %2661 = vset.pattern.permute.xlu0 3
          %2662 = vperm.xlu0 %2661, %v2064
          %v2663 = vpop.permute.xlu0 %2662
          %2665 = vset.pattern.permute.xlu0 3
          %2666 = vperm.xlu0 %2665, %v2065
          %v2667 = vpop.permute.xlu0 %2666
          %2669 = vset.pattern.permute.xlu0 3
          %2670 = vperm.xlu0 %2669, %v2066
          %v2671 = vpop.permute.xlu0 %2670
          %2673 = vset.pattern.permute.xlu0 3
          %2674 = vperm.xlu0 %2673, %v2067
          %v2675 = vpop.permute.xlu0 %2674
          %2677 = vset.pattern.permute.xlu0 3
          %2678 = vperm.xlu0 %2677, %v2068
          %v2679 = vpop.permute.xlu0 %2678
          %2681 = vset.pattern.permute.xlu0 3
          %2682 = vperm.xlu0 %2681, %v2069
          %v2683 = vpop.permute.xlu0 %2682
          %2685 = vset.pattern.permute.xlu0 3
          %2686 = vperm.xlu0 %2685, %v2070
          %v2687 = vpop.permute.xlu0 %2686
          %2689 = vset.pattern.permute.xlu0 3
          %2690 = vperm.xlu0 %2689, %v2071
          %v2691 = vpop.permute.xlu0 %2690
          %2693 = vset.pattern.permute.xlu0 3
          %2694 = vperm.xlu0 %2693, %v2072
          %v2695 = vpop.permute.xlu0 %2694
          %2697 = vset.pattern.permute.xlu0 3
          %2698 = vperm.xlu0 %2697, %v2073
          %v2699 = vpop.permute.xlu0 %2698
          %2701 = vset.pattern.permute.xlu0 3
          %2702 = vperm.xlu0 %2701, %v2074
          %v2703 = vpop.permute.xlu0 %2702
          %2705 = vset.pattern.permute.xlu0 3
          %2706 = vperm.xlu0 %2705, %v2075
          %v2707 = vpop.permute.xlu0 %2706
          %2709 = vset.pattern.permute.xlu0 3
          %2710 = vperm.xlu0 %2709, %v2076
          %v2711 = vpop.permute.xlu0 %2710
          %2713 = vset.pattern.permute.xlu0 3
          %2714 = vperm.xlu0 %2713, %v2077
          %v2715 = vpop.permute.xlu0 %2714
          %2717 = vset.pattern.permute.xlu0 3
          %2718 = vperm.xlu0 %2717, %v2078
          %v2719 = vpop.permute.xlu0 %2718
          %2721 = vset.pattern.permute.xlu0 3
          %2722 = vperm.xlu0 %2721, %v2079
          %v2723 = vpop.permute.xlu0 %2722
          %v2725 = vmul.f32 %v2663, %v2080
          %v2726 = vmul.f32 %v2667, %v2081
          %v2727 = vmul.f32 %v2671, %v2082
          %v2728 = vmul.f32 %v2675, %v2083
          %v2729 = vmul.f32 %v2679, %v2084
          %v2730 = vmul.f32 %v2683, %v2085
          %v2731 = vmul.f32 %v2687, %v2086
          %v2732 = vmul.f32 %v2691, %v2087
          %v2733 = vmul.f32 %v2695, %v2088
          %v2734 = vmul.f32 %v2699, %v2089
          %v2735 = vmul.f32 %v2703, %v2090
          %v2736 = vmul.f32 %v2707, %v2091
          %v2737 = vmul.f32 %v2711, %v2092
          %v2738 = vmul.f32 %v2715, %v2093
          %v2739 = vmul.f32 %v2719, %v2094
          %v2740 = vmul.f32 %v2723, %v2095
          %v2741 = vld [vmem:[%s1192] sm:$0xff]
          %v2742 = vld [vmem:[%s1192 + $0x8] sm:$0xff]
          %v2743 = vld [vmem:[%s1192 + $0x10] sm:$0xff]
          %v2744 = vld [vmem:[%s1192 + $0x18] sm:$0xff]
          %2745 = vmatprep.subr.mxu0 0.0
          %2746 = vmatpush1.msra.mxu0 %v2740
          %2747 = vmatprep.subr.mxu0 0.0
          %2748 = vmatpush1.msra.mxu0 %v2739
          %2749 = vmatprep.subr.mxu0 0.0
          %2750 = vmatpush1.msra.mxu0 %v2738
          %2751 = vmatprep.subr.mxu0 0.0
          %2752 = vmatpush1.msra.mxu0 %v2737
          %2753 = vmatprep.subr.mxu0 0.0
          %2754 = vmatpush1.msra.mxu0 %v2736
          %2755 = vmatprep.subr.mxu0 0.0
          %2756 = vmatpush1.msra.mxu0 %v2735
          %2757 = vmatprep.subr.mxu0 0.0
          %2758 = vmatpush1.msra.mxu0 %v2734
          %2759 = vmatprep.subr.mxu0 0.0
          %2760 = vmatpush1.msra.mxu0 %v2733
          %2761 = vmatprep.subr.mxu0 0.0
          %2762 = vmatpush1.msra.mxu0 %v2732
          %2763 = vmatprep.subr.mxu0 0.0
          %2764 = vmatpush1.msra.mxu0 %v2731
          %2765 = vmatprep.subr.mxu0 0.0
          %2766 = vmatpush1.msra.mxu0 %v2730
          %2767 = vmatprep.subr.mxu0 0.0
          %2768 = vmatpush1.msra.mxu0 %v2729
          %2769 = vmatprep.subr.mxu0 0.0
          %2770 = vmatpush1.msra.mxu0 %v2728
          %2771 = vmatprep.subr.mxu0 0.0
          %2772 = vmatpush1.msra.mxu0 %v2727
          %2773 = vmatprep.subr.mxu0 0.0
          %2774 = vmatpush1.msra.mxu0 %v2726
          %2775 = vmatprep.subr.mxu0 0.0
          %2776 = vmatpush1.msra.mxu0 %v2725
          %2777 = vmatprep.subr.mxu0 0.0
          %2778 = vmatpush2.msra.mxu0 0.0
          %2779 = vmatprep.subr.mxu0 0.0
          %2780 = vmatpush2.msra.mxu0 0.0
          %2781 = vmatprep.subr.mxu0 0.0
          %2782 = vmatpush2.msra.mxu0 0.0
          %2783 = vmatprep.subr.mxu0 0.0
          %2784 = vmatpush2.msra.mxu0 0.0
          %2785 = vmatprep.subr.mxu0 0.0
          %2786 = vmatpush2.msra.mxu0 0.0
          %2787 = vmatprep.subr.mxu0 0.0
          %2788 = vmatpush2.msra.mxu0 0.0
          %2789 = vmatprep.subr.mxu0 0.0
          %2790 = vmatpush2.msra.mxu0 0.0
          %2791 = vmatprep.subr.mxu0 0.0
          %2792 = vmatpush2.msra.mxu0 0.0
          %2793 = vmatprep.subr.mxu0 0.0
          %2794 = vmatpush2.msra.mxu0 0.0
          %2795 = vmatprep.subr.mxu0 0.0
          %2796 = vmatpush2.msra.mxu0 0.0
          %2797 = vmatprep.subr.mxu0 0.0
          %2798 = vmatpush2.msra.mxu0 0.0
          %2799 = vmatprep.subr.mxu0 0.0
          %2800 = vmatpush2.msra.mxu0 0.0
          %2801 = vmatprep.subr.mxu0 0.0
          %2802 = vmatpush2.msra.mxu0 0.0
          %2803 = vmatprep.subr.mxu0 0.0
          %2804 = vmatpush2.msra.mxu0 0.0
          %2805 = vmatprep.subr.mxu0 0.0
          %2806 = vmatpush2.msra.mxu0 0.0
          %2807 = vmatprep.subr.mxu0 0.0
          %2808 = vmatpush2.msra.mxu0 0.0
          %2809 = vmatprep.mubr.f32.mxu0 0.0
          %2810 = vmatmul.mubr.f32.gmra.mxu0 %v2110
          %v2811 = vpop.f32.mrf.mxu0
          %v2812 = vadd.f32 0.0, %v2811
          %v2813 = vpop.f32.mrf.mxu0
          %2814 = vmatprep.mubr.f32.mxu0 0.0
          %2815 = vmatmul.mubr.f32.gmra.mxu0 %v2111
          %v2816 = vpop.f32.mrf.mxu0
          %v2817 = vadd.f32 0.0, %v2816
          %v2818 = vpop.f32.mrf.mxu0
          %2819 = vmatprep.mubr.f32.mxu0 0.0
          %2820 = vmatmul.mubr.f32.gmra.mxu0 %v2112
          %v2821 = vpop.f32.mrf.mxu0
          %v2822 = vadd.f32 0.0, %v2821
          %v2823 = vpop.f32.mrf.mxu0
          %2824 = vmatprep.mubr.f32.mxu0 0.0
          %2825 = vmatmul.mubr.f32.gmra.mxu0 %v2113
          %v2826 = vpop.f32.mrf.mxu0
          %v2827 = vadd.f32 0.0, %v2826
          %v2828 = vpop.f32.mrf.mxu0
          %2829 = vdwg.mxu0
          %v2830 = vadd.f32 %v2741, %v2812
          %v2831 = vadd.f32 %v2742, %v2817
          %v2832 = vadd.f32 %v2743, %v2822
          %v2833 = vadd.f32 %v2744, %v2827
          %2834 = vst.msk [vmem:[%s1192] sm:$0xff] %vm751, %v2830
          %2835 = vst.msk [vmem:[%s1192 + $0x8] sm:$0xff] %vm751, %v2831
          %2836 = vst.msk [vmem:[%s1192 + $0x10] sm:$0xff] %vm751, %v2832
          %2837 = vst.msk [vmem:[%s1192 + $0x18] sm:$0xff] %vm751, %v2833
          %v2838 = vld [vmem:[%s420 + $0x180] sm:$0xff]
          %v2839 = vld [vmem:[%s420 + $0x188] sm:$0xff]
          %v2840 = vld [vmem:[%s420 + $0x190] sm:$0xff]
          %v2841 = vld [vmem:[%s420 + $0x198] sm:$0xff]
          %v2842 = vld [vmem:[%s420 + $0x1a0] sm:$0xff]
          %v2843 = vld [vmem:[%s420 + $0x1a8] sm:$0xff]
          %v2844 = vld [vmem:[%s420 + $0x1b0] sm:$0xff]
          %v2845 = vld [vmem:[%s420 + $0x1b8] sm:$0xff]
          %v2846 = vld [vmem:[%s420 + $0x1c0] sm:$0xff]
          %v2847 = vld [vmem:[%s420 + $0x1c8] sm:$0xff]
          %v2848 = vld [vmem:[%s420 + $0x1d0] sm:$0xff]
          %v2849 = vld [vmem:[%s420 + $0x1d8] sm:$0xff]
          %v2850 = vld [vmem:[%s420 + $0x1e0] sm:$0xff]
          %v2851 = vld [vmem:[%s420 + $0x1e8] sm:$0xff]
          %v2852 = vld [vmem:[%s420 + $0x1f0] sm:$0xff]
          %v2853 = vld [vmem:[%s420 + $0x1f8] sm:$0xff]
          %v2854 = vld [vmem:[%s462 + $0x180] sm:$0xff]
          %v2855 = vld [vmem:[%s462 + $0x188] sm:$0xff]
          %v2856 = vld [vmem:[%s462 + $0x190] sm:$0xff]
          %v2857 = vld [vmem:[%s462 + $0x198] sm:$0xff]
          %v2858 = vld [vmem:[%s462 + $0x1a0] sm:$0xff]
          %v2859 = vld [vmem:[%s462 + $0x1a8] sm:$0xff]
          %v2860 = vld [vmem:[%s462 + $0x1b0] sm:$0xff]
          %v2861 = vld [vmem:[%s462 + $0x1b8] sm:$0xff]
          %v2862 = vld [vmem:[%s462 + $0x1c0] sm:$0xff]
          %v2863 = vld [vmem:[%s462 + $0x1c8] sm:$0xff]
          %v2864 = vld [vmem:[%s462 + $0x1d0] sm:$0xff]
          %v2865 = vld [vmem:[%s462 + $0x1d8] sm:$0xff]
          %v2866 = vld [vmem:[%s462 + $0x1e0] sm:$0xff]
          %v2867 = vld [vmem:[%s462 + $0x1e8] sm:$0xff]
          %v2868 = vld [vmem:[%s462 + $0x1f0] sm:$0xff]
          %v2869 = vld [vmem:[%s462 + $0x1f8] sm:$0xff]
          %v2870 = vld [vmem:[%s441 + $0x3] sm:$0x1]
          %v2871 = vsub.s32 %v2870, %v539
          %v2872 = vlaneseq
          %v2873 = vshrl.u32 %v2872, 7
          %v2874 = vsub.s32 0, %v2873
          %v2875 = vrot.slane %v2871, %v2874
          %vm2876 = vcmp.eq.s32.totalorder %v542, %v2875
          %vm2877 = vcmp.eq.s32.totalorder %v543, %v2875
          %vm2878 = vcmp.eq.s32.totalorder %v544, %v2875
          %vm2879 = vcmp.eq.s32.totalorder %v545, %v2875
          %v2880 = vsel %vm2876, 1, 0
          %v2881 = vsel %vm2877, 1, 0
          %v2882 = vsel %vm2878, 1, 0
          %v2883 = vsel %vm2879, 1, 0
          %v2884 = vcvt.s32.f32 %v2880
          %v2885 = vcvt.s32.f32 %v2881
          %v2886 = vcvt.s32.f32 %v2882
          %v2887 = vcvt.s32.f32 %v2883
          %2889 = vset.pattern.permute.xlu0 0
          %2890 = vperm.xlu0 %2889, %v2838
          %v2891 = vpop.permute.xlu0 %2890
          %2894 = vset.pattern.permute.xlu0 0
          %2895 = vperm.xlu0 %2894, %v2839
          %v2896 = vpop.permute.xlu0 %2895
          %2899 = vset.pattern.permute.xlu0 0
          %2900 = vperm.xlu0 %2899, %v2840
          %v2901 = vpop.permute.xlu0 %2900
          %2904 = vset.pattern.permute.xlu0 0
          %2905 = vperm.xlu0 %2904, %v2841
          %v2906 = vpop.permute.xlu0 %2905
          %2909 = vset.pattern.permute.xlu0 0
          %2910 = vperm.xlu0 %2909, %v2842
          %v2911 = vpop.permute.xlu0 %2910
          %2914 = vset.pattern.permute.xlu0 0
          %2915 = vperm.xlu0 %2914, %v2843
          %v2916 = vpop.permute.xlu0 %2915
          %2919 = vset.pattern.permute.xlu0 0
          %2920 = vperm.xlu0 %2919, %v2844
          %v2921 = vpop.permute.xlu0 %2920
          %2924 = vset.pattern.permute.xlu0 0
          %2925 = vperm.xlu0 %2924, %v2845
          %v2926 = vpop.permute.xlu0 %2925
          %2929 = vset.pattern.permute.xlu0 0
          %2930 = vperm.xlu0 %2929, %v2846
          %v2931 = vpop.permute.xlu0 %2930
          %2934 = vset.pattern.permute.xlu0 0
          %2935 = vperm.xlu0 %2934, %v2847
          %v2936 = vpop.permute.xlu0 %2935
          %2939 = vset.pattern.permute.xlu0 0
          %2940 = vperm.xlu0 %2939, %v2848
          %v2941 = vpop.permute.xlu0 %2940
          %2944 = vset.pattern.permute.xlu0 0
          %2945 = vperm.xlu0 %2944, %v2849
          %v2946 = vpop.permute.xlu0 %2945
          %2949 = vset.pattern.permute.xlu0 0
          %2950 = vperm.xlu0 %2949, %v2850
          %v2951 = vpop.permute.xlu0 %2950
          %2954 = vset.pattern.permute.xlu0 0
          %2955 = vperm.xlu0 %2954, %v2851
          %v2956 = vpop.permute.xlu0 %2955
          %2959 = vset.pattern.permute.xlu0 0
          %2960 = vperm.xlu0 %2959, %v2852
          %v2961 = vpop.permute.xlu0 %2960
          %2964 = vset.pattern.permute.xlu0 0
          %2965 = vperm.xlu0 %2964, %v2853
          %v2966 = vpop.permute.xlu0 %2965
          %v2968 = vmul.f32 %v2891, %v2854
          %v2969 = vmul.f32 %v2896, %v2855
          %v2970 = vmul.f32 %v2901, %v2856
          %v2971 = vmul.f32 %v2906, %v2857
          %v2972 = vmul.f32 %v2911, %v2858
          %v2973 = vmul.f32 %v2916, %v2859
          %v2974 = vmul.f32 %v2921, %v2860
          %v2975 = vmul.f32 %v2926, %v2861
          %v2976 = vmul.f32 %v2931, %v2862
          %v2977 = vmul.f32 %v2936, %v2863
          %v2978 = vmul.f32 %v2941, %v2864
          %v2979 = vmul.f32 %v2946, %v2865
          %v2980 = vmul.f32 %v2951, %v2866
          %v2981 = vmul.f32 %v2956, %v2867
          %v2982 = vmul.f32 %v2961, %v2868
          %v2983 = vmul.f32 %v2966, %v2869
          %v2984 = vld [vmem:[#allocation2] sm:$0xff]
          %v2985 = vld [vmem:[#allocation2 + $0x8] sm:$0xff]
          %v2986 = vld [vmem:[#allocation2 + $0x10] sm:$0xff]
          %v2987 = vld [vmem:[#allocation2 + $0x18] sm:$0xff]
          %2988 = vmatprep.subr.mxu0 0.0
          %2989 = vmatpush1.msra.mxu0 %v2983
          %2990 = vmatprep.subr.mxu0 0.0
          %2991 = vmatpush1.msra.mxu0 %v2982
          %2992 = vmatprep.subr.mxu0 0.0
          %2993 = vmatpush1.msra.mxu0 %v2981
          %2994 = vmatprep.subr.mxu0 0.0
          %2995 = vmatpush1.msra.mxu0 %v2980
          %2996 = vmatprep.subr.mxu0 0.0
          %2997 = vmatpush1.msra.mxu0 %v2979
          %2998 = vmatprep.subr.mxu0 0.0
          %2999 = vmatpush1.msra.mxu0 %v2978
          %3000 = vmatprep.subr.mxu0 0.0
          %3001 = vmatpush1.msra.mxu0 %v2977
          %3002 = vmatprep.subr.mxu0 0.0
          %3003 = vmatpush1.msra.mxu0 %v2976
          %3004 = vmatprep.subr.mxu0 0.0
          %3005 = vmatpush1.msra.mxu0 %v2975
          %3006 = vmatprep.subr.mxu0 0.0
          %3007 = vmatpush1.msra.mxu0 %v2974
          %3008 = vmatprep.subr.mxu0 0.0
          %3009 = vmatpush1.msra.mxu0 %v2973
          %3010 = vmatprep.subr.mxu0 0.0
          %3011 = vmatpush1.msra.mxu0 %v2972
          %3012 = vmatprep.subr.mxu0 0.0
          %3013 = vmatpush1.msra.mxu0 %v2971
          %3014 = vmatprep.subr.mxu0 0.0
          %3015 = vmatpush1.msra.mxu0 %v2970
          %3016 = vmatprep.subr.mxu0 0.0
          %3017 = vmatpush1.msra.mxu0 %v2969
          %3018 = vmatprep.subr.mxu0 0.0
          %3019 = vmatpush1.msra.mxu0 %v2968
          %3020 = vmatprep.subr.mxu0 0.0
          %3021 = vmatpush2.msra.mxu0 0.0
          %3022 = vmatprep.subr.mxu0 0.0
          %3023 = vmatpush2.msra.mxu0 0.0
          %3024 = vmatprep.subr.mxu0 0.0
          %3025 = vmatpush2.msra.mxu0 0.0
          %3026 = vmatprep.subr.mxu0 0.0
          %3027 = vmatpush2.msra.mxu0 0.0
          %3028 = vmatprep.subr.mxu0 0.0
          %3029 = vmatpush2.msra.mxu0 0.0
          %3030 = vmatprep.subr.mxu0 0.0
          %3031 = vmatpush2.msra.mxu0 0.0
          %3032 = vmatprep.subr.mxu0 0.0
          %3033 = vmatpush2.msra.mxu0 0.0
          %3034 = vmatprep.subr.mxu0 0.0
          %3035 = vmatpush2.msra.mxu0 0.0
          %3036 = vmatprep.subr.mxu0 0.0
          %3037 = vmatpush2.msra.mxu0 0.0
          %3038 = vmatprep.subr.mxu0 0.0
          %3039 = vmatpush2.msra.mxu0 0.0
          %3040 = vmatprep.subr.mxu0 0.0
          %3041 = vmatpush2.msra.mxu0 0.0
          %3042 = vmatprep.subr.mxu0 0.0
          %3043 = vmatpush2.msra.mxu0 0.0
          %3044 = vmatprep.subr.mxu0 0.0
          %3045 = vmatpush2.msra.mxu0 0.0
          %3046 = vmatprep.subr.mxu0 0.0
          %3047 = vmatpush2.msra.mxu0 0.0
          %3048 = vmatprep.subr.mxu0 0.0
          %3049 = vmatpush2.msra.mxu0 0.0
          %3050 = vmatprep.subr.mxu0 0.0
          %3051 = vmatpush2.msra.mxu0 0.0
          %3052 = vmatprep.mubr.f32.mxu0 0.0
          %3053 = vmatmul.mubr.f32.gmra.mxu0 %v2884
          %v3054 = vpop.f32.mrf.mxu0
          %v3055 = vadd.f32 0.0, %v3054
          %v3056 = vpop.f32.mrf.mxu0
          %3057 = vmatprep.mubr.f32.mxu0 0.0
          %3058 = vmatmul.mubr.f32.gmra.mxu0 %v2885
          %v3059 = vpop.f32.mrf.mxu0
          %v3060 = vadd.f32 0.0, %v3059
          %v3061 = vpop.f32.mrf.mxu0
          %3062 = vmatprep.mubr.f32.mxu0 0.0
          %3063 = vmatmul.mubr.f32.gmra.mxu0 %v2886
          %v3064 = vpop.f32.mrf.mxu0
          %v3065 = vadd.f32 0.0, %v3064
          %v3066 = vpop.f32.mrf.mxu0
          %3067 = vmatprep.mubr.f32.mxu0 0.0
          %3068 = vmatmul.mubr.f32.gmra.mxu0 %v2887
          %v3069 = vpop.f32.mrf.mxu0
          %v3070 = vadd.f32 0.0, %v3069
          %v3071 = vpop.f32.mrf.mxu0
          %3072 = vdwg.mxu0
          %v3073 = vadd.f32 %v2984, %v3055
          %v3074 = vadd.f32 %v2985, %v3060
          %v3075 = vadd.f32 %v2986, %v3065
          %v3076 = vadd.f32 %v2987, %v3070
          %3077 = vst.msk [vmem:[#allocation2] sm:$0xff] %vm751, %v3073
          %3078 = vst.msk [vmem:[#allocation2 + $0x8] sm:$0xff] %vm751, %v3074
          %3079 = vst.msk [vmem:[#allocation2 + $0x10] sm:$0xff] %vm751, %v3075
          %3080 = vst.msk [vmem:[#allocation2 + $0x18] sm:$0xff] %vm751, %v3076
          %3081 = vset.pattern.permute.xlu0 1
          %3082 = vperm.xlu0 %3081, %v2838
          %v3083 = vpop.permute.xlu0 %3082
          %3085 = vset.pattern.permute.xlu0 1
          %3086 = vperm.xlu0 %3085, %v2839
          %v3087 = vpop.permute.xlu0 %3086
          %3089 = vset.pattern.permute.xlu0 1
          %3090 = vperm.xlu0 %3089, %v2840
          %v3091 = vpop.permute.xlu0 %3090
          %3093 = vset.pattern.permute.xlu0 1
          %3094 = vperm.xlu0 %3093, %v2841
          %v3095 = vpop.permute.xlu0 %3094
          %3097 = vset.pattern.permute.xlu0 1
          %3098 = vperm.xlu0 %3097, %v2842
          %v3099 = vpop.permute.xlu0 %3098
          %3101 = vset.pattern.permute.xlu0 1
          %3102 = vperm.xlu0 %3101, %v2843
          %v3103 = vpop.permute.xlu0 %3102
          %3105 = vset.pattern.permute.xlu0 1
          %3106 = vperm.xlu0 %3105, %v2844
          %v3107 = vpop.permute.xlu0 %3106
          %3109 = vset.pattern.permute.xlu0 1
          %3110 = vperm.xlu0 %3109, %v2845
          %v3111 = vpop.permute.xlu0 %3110
          %3113 = vset.pattern.permute.xlu0 1
          %3114 = vperm.xlu0 %3113, %v2846
          %v3115 = vpop.permute.xlu0 %3114
          %3117 = vset.pattern.permute.xlu0 1
          %3118 = vperm.xlu0 %3117, %v2847
          %v3119 = vpop.permute.xlu0 %3118
          %3121 = vset.pattern.permute.xlu0 1
          %3122 = vperm.xlu0 %3121, %v2848
          %v3123 = vpop.permute.xlu0 %3122
          %3125 = vset.pattern.permute.xlu0 1
          %3126 = vperm.xlu0 %3125, %v2849
          %v3127 = vpop.permute.xlu0 %3126
          %3129 = vset.pattern.permute.xlu0 1
          %3130 = vperm.xlu0 %3129, %v2850
          %v3131 = vpop.permute.xlu0 %3130
          %3133 = vset.pattern.permute.xlu0 1
          %3134 = vperm.xlu0 %3133, %v2851
          %v3135 = vpop.permute.xlu0 %3134
          %3137 = vset.pattern.permute.xlu0 1
          %3138 = vperm.xlu0 %3137, %v2852
          %v3139 = vpop.permute.xlu0 %3138
          %3141 = vset.pattern.permute.xlu0 1
          %3142 = vperm.xlu0 %3141, %v2853
          %v3143 = vpop.permute.xlu0 %3142
          %v3145 = vmul.f32 %v3083, %v2854
          %v3146 = vmul.f32 %v3087, %v2855
          %v3147 = vmul.f32 %v3091, %v2856
          %v3148 = vmul.f32 %v3095, %v2857
          %v3149 = vmul.f32 %v3099, %v2858
          %v3150 = vmul.f32 %v3103, %v2859
          %v3151 = vmul.f32 %v3107, %v2860
          %v3152 = vmul.f32 %v3111, %v2861
          %v3153 = vmul.f32 %v3115, %v2862
          %v3154 = vmul.f32 %v3119, %v2863
          %v3155 = vmul.f32 %v3123, %v2864
          %v3156 = vmul.f32 %v3127, %v2865
          %v3157 = vmul.f32 %v3131, %v2866
          %v3158 = vmul.f32 %v3135, %v2867
          %v3159 = vmul.f32 %v3139, %v2868
          %v3160 = vmul.f32 %v3143, %v2869
          %v3161 = vld [vmem:[%s836] sm:$0xff]
          %v3162 = vld [vmem:[%s836 + $0x8] sm:$0xff]
          %v3163 = vld [vmem:[%s836 + $0x10] sm:$0xff]
          %v3164 = vld [vmem:[%s836 + $0x18] sm:$0xff]
          %3165 = vmatprep.subr.mxu0 0.0
          %3166 = vmatpush1.msra.mxu0 %v3160
          %3167 = vmatprep.subr.mxu0 0.0
          %3168 = vmatpush1.msra.mxu0 %v3159
          %3169 = vmatprep.subr.mxu0 0.0
          %3170 = vmatpush1.msra.mxu0 %v3158
          %3171 = vmatprep.subr.mxu0 0.0
          %3172 = vmatpush1.msra.mxu0 %v3157
          %3173 = vmatprep.subr.mxu0 0.0
          %3174 = vmatpush1.msra.mxu0 %v3156
          %3175 = vmatprep.subr.mxu0 0.0
          %3176 = vmatpush1.msra.mxu0 %v3155
          %3177 = vmatprep.subr.mxu0 0.0
          %3178 = vmatpush1.msra.mxu0 %v3154
          %3179 = vmatprep.subr.mxu0 0.0
          %3180 = vmatpush1.msra.mxu0 %v3153
          %3181 = vmatprep.subr.mxu0 0.0
          %3182 = vmatpush1.msra.mxu0 %v3152
          %3183 = vmatprep.subr.mxu0 0.0
          %3184 = vmatpush1.msra.mxu0 %v3151
          %3185 = vmatprep.subr.mxu0 0.0
          %3186 = vmatpush1.msra.mxu0 %v3150
          %3187 = vmatprep.subr.mxu0 0.0
          %3188 = vmatpush1.msra.mxu0 %v3149
          %3189 = vmatprep.subr.mxu0 0.0
          %3190 = vmatpush1.msra.mxu0 %v3148
          %3191 = vmatprep.subr.mxu0 0.0
          %3192 = vmatpush1.msra.mxu0 %v3147
          %3193 = vmatprep.subr.mxu0 0.0
          %3194 = vmatpush1.msra.mxu0 %v3146
          %3195 = vmatprep.subr.mxu0 0.0
          %3196 = vmatpush1.msra.mxu0 %v3145
          %3197 = vmatprep.subr.mxu0 0.0
          %3198 = vmatpush2.msra.mxu0 0.0
          %3199 = vmatprep.subr.mxu0 0.0
          %3200 = vmatpush2.msra.mxu0 0.0
          %3201 = vmatprep.subr.mxu0 0.0
          %3202 = vmatpush2.msra.mxu0 0.0
          %3203 = vmatprep.subr.mxu0 0.0
          %3204 = vmatpush2.msra.mxu0 0.0
          %3205 = vmatprep.subr.mxu0 0.0
          %3206 = vmatpush2.msra.mxu0 0.0
          %3207 = vmatprep.subr.mxu0 0.0
          %3208 = vmatpush2.msra.mxu0 0.0
          %3209 = vmatprep.subr.mxu0 0.0
          %3210 = vmatpush2.msra.mxu0 0.0
          %3211 = vmatprep.subr.mxu0 0.0
          %3212 = vmatpush2.msra.mxu0 0.0
          %3213 = vmatprep.subr.mxu0 0.0
          %3214 = vmatpush2.msra.mxu0 0.0
          %3215 = vmatprep.subr.mxu0 0.0
          %3216 = vmatpush2.msra.mxu0 0.0
          %3217 = vmatprep.subr.mxu0 0.0
          %3218 = vmatpush2.msra.mxu0 0.0
          %3219 = vmatprep.subr.mxu0 0.0
          %3220 = vmatpush2.msra.mxu0 0.0
          %3221 = vmatprep.subr.mxu0 0.0
          %3222 = vmatpush2.msra.mxu0 0.0
          %3223 = vmatprep.subr.mxu0 0.0
          %3224 = vmatpush2.msra.mxu0 0.0
          %3225 = vmatprep.subr.mxu0 0.0
          %3226 = vmatpush2.msra.mxu0 0.0
          %3227 = vmatprep.subr.mxu0 0.0
          %3228 = vmatpush2.msra.mxu0 0.0
          %3229 = vmatprep.mubr.f32.mxu0 0.0
          %3230 = vmatmul.mubr.f32.gmra.mxu0 %v2884
          %v3231 = vpop.f32.mrf.mxu0
          %v3232 = vadd.f32 0.0, %v3231
          %v3233 = vpop.f32.mrf.mxu0
          %3234 = vmatprep.mubr.f32.mxu0 0.0
          %3235 = vmatmul.mubr.f32.gmra.mxu0 %v2885
          %v3236 = vpop.f32.mrf.mxu0
          %v3237 = vadd.f32 0.0, %v3236
          %v3238 = vpop.f32.mrf.mxu0
          %3239 = vmatprep.mubr.f32.mxu0 0.0
          %3240 = vmatmul.mubr.f32.gmra.mxu0 %v2886
          %v3241 = vpop.f32.mrf.mxu0
          %v3242 = vadd.f32 0.0, %v3241
          %v3243 = vpop.f32.mrf.mxu0
          %3244 = vmatprep.mubr.f32.mxu0 0.0
          %3245 = vmatmul.mubr.f32.gmra.mxu0 %v2887
          %v3246 = vpop.f32.mrf.mxu0
          %v3247 = vadd.f32 0.0, %v3246
          %v3248 = vpop.f32.mrf.mxu0
          %3249 = vdwg.mxu0
          %v3250 = vadd.f32 %v3161, %v3232
          %v3251 = vadd.f32 %v3162, %v3237
          %v3252 = vadd.f32 %v3163, %v3242
          %v3253 = vadd.f32 %v3164, %v3247
          %3254 = vst.msk [vmem:[%s836] sm:$0xff] %vm751, %v3250
          %3255 = vst.msk [vmem:[%s836 + $0x8] sm:$0xff] %vm751, %v3251
          %3256 = vst.msk [vmem:[%s836 + $0x10] sm:$0xff] %vm751, %v3252
          %3257 = vst.msk [vmem:[%s836 + $0x18] sm:$0xff] %vm751, %v3253
          %3258 = vset.pattern.permute.xlu0 2
          %3259 = vperm.xlu0 %3258, %v2838
          %v3260 = vpop.permute.xlu0 %3259
          %3262 = vset.pattern.permute.xlu0 2
          %3263 = vperm.xlu0 %3262, %v2839
          %v3264 = vpop.permute.xlu0 %3263
          %3266 = vset.pattern.permute.xlu0 2
          %3267 = vperm.xlu0 %3266, %v2840
          %v3268 = vpop.permute.xlu0 %3267
          %3270 = vset.pattern.permute.xlu0 2
          %3271 = vperm.xlu0 %3270, %v2841
          %v3272 = vpop.permute.xlu0 %3271
          %3274 = vset.pattern.permute.xlu0 2
          %3275 = vperm.xlu0 %3274, %v2842
          %v3276 = vpop.permute.xlu0 %3275
          %3278 = vset.pattern.permute.xlu0 2
          %3279 = vperm.xlu0 %3278, %v2843
          %v3280 = vpop.permute.xlu0 %3279
          %3282 = vset.pattern.permute.xlu0 2
          %3283 = vperm.xlu0 %3282, %v2844
          %v3284 = vpop.permute.xlu0 %3283
          %3286 = vset.pattern.permute.xlu0 2
          %3287 = vperm.xlu0 %3286, %v2845
          %v3288 = vpop.permute.xlu0 %3287
          %3290 = vset.pattern.permute.xlu0 2
          %3291 = vperm.xlu0 %3290, %v2846
          %v3292 = vpop.permute.xlu0 %3291
          %3294 = vset.pattern.permute.xlu0 2
          %3295 = vperm.xlu0 %3294, %v2847
          %v3296 = vpop.permute.xlu0 %3295
          %3298 = vset.pattern.permute.xlu0 2
          %3299 = vperm.xlu0 %3298, %v2848
          %v3300 = vpop.permute.xlu0 %3299
          %3302 = vset.pattern.permute.xlu0 2
          %3303 = vperm.xlu0 %3302, %v2849
          %v3304 = vpop.permute.xlu0 %3303
          %3306 = vset.pattern.permute.xlu0 2
          %3307 = vperm.xlu0 %3306, %v2850
          %v3308 = vpop.permute.xlu0 %3307
          %3310 = vset.pattern.permute.xlu0 2
          %3311 = vperm.xlu0 %3310, %v2851
          %v3312 = vpop.permute.xlu0 %3311
          %3314 = vset.pattern.permute.xlu0 2
          %3315 = vperm.xlu0 %3314, %v2852
          %v3316 = vpop.permute.xlu0 %3315
          %3318 = vset.pattern.permute.xlu0 2
          %3319 = vperm.xlu0 %3318, %v2853
          %v3320 = vpop.permute.xlu0 %3319
          %v3322 = vmul.f32 %v3260, %v2854
          %v3323 = vmul.f32 %v3264, %v2855
          %v3324 = vmul.f32 %v3268, %v2856
          %v3325 = vmul.f32 %v3272, %v2857
          %v3326 = vmul.f32 %v3276, %v2858
          %v3327 = vmul.f32 %v3280, %v2859
          %v3328 = vmul.f32 %v3284, %v2860
          %v3329 = vmul.f32 %v3288, %v2861
          %v3330 = vmul.f32 %v3292, %v2862
          %v3331 = vmul.f32 %v3296, %v2863
          %v3332 = vmul.f32 %v3300, %v2864
          %v3333 = vmul.f32 %v3304, %v2865
          %v3334 = vmul.f32 %v3308, %v2866
          %v3335 = vmul.f32 %v3312, %v2867
          %v3336 = vmul.f32 %v3316, %v2868
          %v3337 = vmul.f32 %v3320, %v2869
          %v3338 = vld [vmem:[%s1014] sm:$0xff]
          %v3339 = vld [vmem:[%s1014 + $0x8] sm:$0xff]
          %v3340 = vld [vmem:[%s1014 + $0x10] sm:$0xff]
          %v3341 = vld [vmem:[%s1014 + $0x18] sm:$0xff]
          %3342 = vmatprep.subr.mxu0 0.0
          %3343 = vmatpush1.msra.mxu0 %v3337
          %3344 = vmatprep.subr.mxu0 0.0
          %3345 = vmatpush1.msra.mxu0 %v3336
          %3346 = vmatprep.subr.mxu0 0.0
          %3347 = vmatpush1.msra.mxu0 %v3335
          %3348 = vmatprep.subr.mxu0 0.0
          %3349 = vmatpush1.msra.mxu0 %v3334
          %3350 = vmatprep.subr.mxu0 0.0
          %3351 = vmatpush1.msra.mxu0 %v3333
          %3352 = vmatprep.subr.mxu0 0.0
          %3353 = vmatpush1.msra.mxu0 %v3332
          %3354 = vmatprep.subr.mxu0 0.0
          %3355 = vmatpush1.msra.mxu0 %v3331
          %3356 = vmatprep.subr.mxu0 0.0
          %3357 = vmatpush1.msra.mxu0 %v3330
          %3358 = vmatprep.subr.mxu0 0.0
          %3359 = vmatpush1.msra.mxu0 %v3329
          %3360 = vmatprep.subr.mxu0 0.0
          %3361 = vmatpush1.msra.mxu0 %v3328
          %3362 = vmatprep.subr.mxu0 0.0
          %3363 = vmatpush1.msra.mxu0 %v3327
          %3364 = vmatprep.subr.mxu0 0.0
          %3365 = vmatpush1.msra.mxu0 %v3326
          %3366 = vmatprep.subr.mxu0 0.0
          %3367 = vmatpush1.msra.mxu0 %v3325
          %3368 = vmatprep.subr.mxu0 0.0
          %3369 = vmatpush1.msra.mxu0 %v3324
          %3370 = vmatprep.subr.mxu0 0.0
          %3371 = vmatpush1.msra.mxu0 %v3323
          %3372 = vmatprep.subr.mxu0 0.0
          %3373 = vmatpush1.msra.mxu0 %v3322
          %3374 = vmatprep.subr.mxu0 0.0
          %3375 = vmatpush2.msra.mxu0 0.0
          %3376 = vmatprep.subr.mxu0 0.0
          %3377 = vmatpush2.msra.mxu0 0.0
          %3378 = vmatprep.subr.mxu0 0.0
          %3379 = vmatpush2.msra.mxu0 0.0
          %3380 = vmatprep.subr.mxu0 0.0
          %3381 = vmatpush2.msra.mxu0 0.0
          %3382 = vmatprep.subr.mxu0 0.0
          %3383 = vmatpush2.msra.mxu0 0.0
          %3384 = vmatprep.subr.mxu0 0.0
          %3385 = vmatpush2.msra.mxu0 0.0
          %3386 = vmatprep.subr.mxu0 0.0
          %3387 = vmatpush2.msra.mxu0 0.0
          %3388 = vmatprep.subr.mxu0 0.0
          %3389 = vmatpush2.msra.mxu0 0.0
          %3390 = vmatprep.subr.mxu0 0.0
          %3391 = vmatpush2.msra.mxu0 0.0
          %3392 = vmatprep.subr.mxu0 0.0
          %3393 = vmatpush2.msra.mxu0 0.0
          %3394 = vmatprep.subr.mxu0 0.0
          %3395 = vmatpush2.msra.mxu0 0.0
          %3396 = vmatprep.subr.mxu0 0.0
          %3397 = vmatpush2.msra.mxu0 0.0
          %3398 = vmatprep.subr.mxu0 0.0
          %3399 = vmatpush2.msra.mxu0 0.0
          %3400 = vmatprep.subr.mxu0 0.0
          %3401 = vmatpush2.msra.mxu0 0.0
          %3402 = vmatprep.subr.mxu0 0.0
          %3403 = vmatpush2.msra.mxu0 0.0
          %3404 = vmatprep.subr.mxu0 0.0
          %3405 = vmatpush2.msra.mxu0 0.0
          %3406 = vmatprep.mubr.f32.mxu0 0.0
          %3407 = vmatmul.mubr.f32.gmra.mxu0 %v2884
          %v3408 = vpop.f32.mrf.mxu0
          %v3409 = vadd.f32 0.0, %v3408
          %v3410 = vpop.f32.mrf.mxu0
          %3411 = vmatprep.mubr.f32.mxu0 0.0
          %3412 = vmatmul.mubr.f32.gmra.mxu0 %v2885
          %v3413 = vpop.f32.mrf.mxu0
          %v3414 = vadd.f32 0.0, %v3413
          %v3415 = vpop.f32.mrf.mxu0
          %3416 = vmatprep.mubr.f32.mxu0 0.0
          %3417 = vmatmul.mubr.f32.gmra.mxu0 %v2886
          %v3418 = vpop.f32.mrf.mxu0
          %v3419 = vadd.f32 0.0, %v3418
          %v3420 = vpop.f32.mrf.mxu0
          %3421 = vmatprep.mubr.f32.mxu0 0.0
          %3422 = vmatmul.mubr.f32.gmra.mxu0 %v2887
          %v3423 = vpop.f32.mrf.mxu0
          %v3424 = vadd.f32 0.0, %v3423
          %v3425 = vpop.f32.mrf.mxu0
          %3426 = vdwg.mxu0
          %v3427 = vadd.f32 %v3338, %v3409
          %v3428 = vadd.f32 %v3339, %v3414
          %v3429 = vadd.f32 %v3340, %v3419
          %v3430 = vadd.f32 %v3341, %v3424
          %3431 = vst.msk [vmem:[%s1014] sm:$0xff] %vm751, %v3427
          %3432 = vst.msk [vmem:[%s1014 + $0x8] sm:$0xff] %vm751, %v3428
          %3433 = vst.msk [vmem:[%s1014 + $0x10] sm:$0xff] %vm751, %v3429
          %3434 = vst.msk [vmem:[%s1014 + $0x18] sm:$0xff] %vm751, %v3430
          %3435 = vset.pattern.permute.xlu0 3
          %3436 = vperm.xlu0 %3435, %v2838
          %v3437 = vpop.permute.xlu0 %3436
          %3439 = vset.pattern.permute.xlu0 3
          %3440 = vperm.xlu0 %3439, %v2839
          %v3441 = vpop.permute.xlu0 %3440
          %3443 = vset.pattern.permute.xlu0 3
          %3444 = vperm.xlu0 %3443, %v2840
          %v3445 = vpop.permute.xlu0 %3444
          %3447 = vset.pattern.permute.xlu0 3
          %3448 = vperm.xlu0 %3447, %v2841
          %v3449 = vpop.permute.xlu0 %3448
          %3451 = vset.pattern.permute.xlu0 3
          %3452 = vperm.xlu0 %3451, %v2842
          %v3453 = vpop.permute.xlu0 %3452
          %3455 = vset.pattern.permute.xlu0 3
          %3456 = vperm.xlu0 %3455, %v2843
          %v3457 = vpop.permute.xlu0 %3456
          %3459 = vset.pattern.permute.xlu0 3
          %3460 = vperm.xlu0 %3459, %v2844
          %v3461 = vpop.permute.xlu0 %3460
          %3463 = vset.pattern.permute.xlu0 3
          %3464 = vperm.xlu0 %3463, %v2845
          %v3465 = vpop.permute.xlu0 %3464
          %3467 = vset.pattern.permute.xlu0 3
          %3468 = vperm.xlu0 %3467, %v2846
          %v3469 = vpop.permute.xlu0 %3468
          %3471 = vset.pattern.permute.xlu0 3
          %3472 = vperm.xlu0 %3471, %v2847
          %v3473 = vpop.permute.xlu0 %3472
          %3475 = vset.pattern.permute.xlu0 3
          %3476 = vperm.xlu0 %3475, %v2848
          %v3477 = vpop.permute.xlu0 %3476
          %3479 = vset.pattern.permute.xlu0 3
          %3480 = vperm.xlu0 %3479, %v2849
          %v3481 = vpop.permute.xlu0 %3480
          %3483 = vset.pattern.permute.xlu0 3
          %3484 = vperm.xlu0 %3483, %v2850
          %v3485 = vpop.permute.xlu0 %3484
          %3487 = vset.pattern.permute.xlu0 3
          %3488 = vperm.xlu0 %3487, %v2851
          %v3489 = vpop.permute.xlu0 %3488
          %3491 = vset.pattern.permute.xlu0 3
          %3492 = vperm.xlu0 %3491, %v2852
          %v3493 = vpop.permute.xlu0 %3492
          %3495 = vset.pattern.permute.xlu0 3
          %3496 = vperm.xlu0 %3495, %v2853
          %v3497 = vpop.permute.xlu0 %3496
          %v3499 = vmul.f32 %v3437, %v2854
          %v3500 = vmul.f32 %v3441, %v2855
          %v3501 = vmul.f32 %v3445, %v2856
          %v3502 = vmul.f32 %v3449, %v2857
          %v3503 = vmul.f32 %v3453, %v2858
          %v3504 = vmul.f32 %v3457, %v2859
          %v3505 = vmul.f32 %v3461, %v2860
          %v3506 = vmul.f32 %v3465, %v2861
          %v3507 = vmul.f32 %v3469, %v2862
          %v3508 = vmul.f32 %v3473, %v2863
          %v3509 = vmul.f32 %v3477, %v2864
          %v3510 = vmul.f32 %v3481, %v2865
          %v3511 = vmul.f32 %v3485, %v2866
          %v3512 = vmul.f32 %v3489, %v2867
          %v3513 = vmul.f32 %v3493, %v2868
          %v3514 = vmul.f32 %v3497, %v2869
          %v3515 = vld [vmem:[%s1192] sm:$0xff]
          %v3516 = vld [vmem:[%s1192 + $0x8] sm:$0xff]
          %v3517 = vld [vmem:[%s1192 + $0x10] sm:$0xff]
          %v3518 = vld [vmem:[%s1192 + $0x18] sm:$0xff]
          %3519 = vmatprep.subr.mxu0 0.0
          %3520 = vmatpush1.msra.mxu0 %v3514
          %3521 = vmatprep.subr.mxu0 0.0
          %3522 = vmatpush1.msra.mxu0 %v3513
          %3523 = vmatprep.subr.mxu0 0.0
          %3524 = vmatpush1.msra.mxu0 %v3512
          %3525 = vmatprep.subr.mxu0 0.0
          %3526 = vmatpush1.msra.mxu0 %v3511
          %3527 = vmatprep.subr.mxu0 0.0
          %3528 = vmatpush1.msra.mxu0 %v3510
          %3529 = vmatprep.subr.mxu0 0.0
          %3530 = vmatpush1.msra.mxu0 %v3509
          %3531 = vmatprep.subr.mxu0 0.0
          %3532 = vmatpush1.msra.mxu0 %v3508
          %3533 = vmatprep.subr.mxu0 0.0
          %3534 = vmatpush1.msra.mxu0 %v3507
          %3535 = vmatprep.subr.mxu0 0.0
          %3536 = vmatpush1.msra.mxu0 %v3506
          %3537 = vmatprep.subr.mxu0 0.0
          %3538 = vmatpush1.msra.mxu0 %v3505
          %3539 = vmatprep.subr.mxu0 0.0
          %3540 = vmatpush1.msra.mxu0 %v3504
          %3541 = vmatprep.subr.mxu0 0.0
          %3542 = vmatpush1.msra.mxu0 %v3503
          %3543 = vmatprep.subr.mxu0 0.0
          %3544 = vmatpush1.msra.mxu0 %v3502
          %3545 = vmatprep.subr.mxu0 0.0
          %3546 = vmatpush1.msra.mxu0 %v3501
          %3547 = vmatprep.subr.mxu0 0.0
          %3548 = vmatpush1.msra.mxu0 %v3500
          %3549 = vmatprep.subr.mxu0 0.0
          %3550 = vmatpush1.msra.mxu0 %v3499
          %3551 = vmatprep.subr.mxu0 0.0
          %3552 = vmatpush2.msra.mxu0 0.0
          %3553 = vmatprep.subr.mxu0 0.0
          %3554 = vmatpush2.msra.mxu0 0.0
          %3555 = vmatprep.subr.mxu0 0.0
          %3556 = vmatpush2.msra.mxu0 0.0
          %3557 = vmatprep.subr.mxu0 0.0
          %3558 = vmatpush2.msra.mxu0 0.0
          %3559 = vmatprep.subr.mxu0 0.0
          %3560 = vmatpush2.msra.mxu0 0.0
          %3561 = vmatprep.subr.mxu0 0.0
          %3562 = vmatpush2.msra.mxu0 0.0
          %3563 = vmatprep.subr.mxu0 0.0
          %3564 = vmatpush2.msra.mxu0 0.0
          %3565 = vmatprep.subr.mxu0 0.0
          %3566 = vmatpush2.msra.mxu0 0.0
          %3567 = vmatprep.subr.mxu0 0.0
          %3568 = vmatpush2.msra.mxu0 0.0
          %3569 = vmatprep.subr.mxu0 0.0
          %3570 = vmatpush2.msra.mxu0 0.0
          %3571 = vmatprep.subr.mxu0 0.0
          %3572 = vmatpush2.msra.mxu0 0.0
          %3573 = vmatprep.subr.mxu0 0.0
          %3574 = vmatpush2.msra.mxu0 0.0
          %3575 = vmatprep.subr.mxu0 0.0
          %3576 = vmatpush2.msra.mxu0 0.0
          %3577 = vmatprep.subr.mxu0 0.0
          %3578 = vmatpush2.msra.mxu0 0.0
          %3579 = vmatprep.subr.mxu0 0.0
          %3580 = vmatpush2.msra.mxu0 0.0
          %3581 = vmatprep.subr.mxu0 0.0
          %3582 = vmatpush2.msra.mxu0 0.0
          %3583 = vmatprep.mubr.f32.mxu0 0.0
          %3584 = vmatmul.mubr.f32.gmra.mxu0 %v2884
          %v3585 = vpop.f32.mrf.mxu0
          %v3586 = vadd.f32 0.0, %v3585
          %v3587 = vpop.f32.mrf.mxu0
          %3588 = vmatprep.mubr.f32.mxu0 0.0
          %3589 = vmatmul.mubr.f32.gmra.mxu0 %v2885
          %v3590 = vpop.f32.mrf.mxu0
          %v3591 = vadd.f32 0.0, %v3590
          %v3592 = vpop.f32.mrf.mxu0
          %3593 = vmatprep.mubr.f32.mxu0 0.0
          %3594 = vmatmul.mubr.f32.gmra.mxu0 %v2886
          %v3595 = vpop.f32.mrf.mxu0
          %v3596 = vadd.f32 0.0, %v3595
          %v3597 = vpop.f32.mrf.mxu0
          %3598 = vmatprep.mubr.f32.mxu0 0.0
          %3599 = vmatmul.mubr.f32.gmra.mxu0 %v2887
          %v3600 = vpop.f32.mrf.mxu0
          %v3601 = vadd.f32 0.0, %v3600
          %v3602 = vpop.f32.mrf.mxu0
          %3603 = vdwg.mxu0
          %v3604 = vadd.f32 %v3515, %v3586
          %v3605 = vadd.f32 %v3516, %v3591
          %v3606 = vadd.f32 %v3517, %v3596
          %v3607 = vadd.f32 %v3518, %v3601
          %3608 = vst.msk [vmem:[%s1192] sm:$0xff] %vm751, %v3604
          %3609 = vst.msk [vmem:[%s1192 + $0x8] sm:$0xff] %vm751, %v3605
          %3610 = vst.msk [vmem:[%s1192 + $0x10] sm:$0xff] %vm751, %v3606
          %3611 = vst.msk [vmem:[%s1192 + $0x18] sm:$0xff] %vm751, %v3607
        $region48: #{tpu_custom_call.1} parent=39 // pred_fallthru
          _
        // Predicated region
        $region49: #{tpu_custom_call.1} parent=39 // pred_check
          %p3612 = pneg %p479
        $region50: #{tpu_custom_call.1} parent=39 // pred_check_branch
          %3614 = sbr.rel (%p3612) target = $region52
        $region51: #{tpu_custom_call.1} parent=39 // pred_region
          %v3615 = vld [vmem:[#allocation2] sm:$0xff]
          %v3616 = vld [vmem:[#allocation2 + $0x8] sm:$0xff]
          %v3617 = vld [vmem:[#allocation2 + $0x10] sm:$0xff]
          %v3618 = vld [vmem:[#allocation2 + $0x18] sm:$0xff]
          %v3619 = vld [vmem:[%s5] sm:$0x3f]
          %s3620 = scalar_lea.vmem [#allocation2], 32
          %v3621 = vld [vmem:[%s3620] sm:$0xff]
          %v3622 = vld [vmem:[%s3620 + $0x8] sm:$0xff]
          %v3623 = vld [vmem:[%s3620 + $0x10] sm:$0xff]
          %v3624 = vld [vmem:[%s3620 + $0x18] sm:$0xff]
          %s3625 = scalar_lea.vmem %s5, 8
          %v3626 = vld [vmem:[%s3625] sm:$0x3f]
          %vm3627 = vcmask 48128
          %v3629 = vsel %vm3627, %v3621, 0
          %v3632 = vsel %vm3627, %v3622, 0
          %v3635 = vsel %vm3627, %v3623, 0
          %v3638 = vsel %vm3627, %v3624, 0
          %vm3640 = vcmask 1045504
          %v3642 = vsel %vm3640, %v3626, 0
          %3644 = vmatprep.subr.mxu0 0.0
          %3645 = vmatpush1.msra.mxu0 0.0
          %3646 = vmatprep.subr.mxu0 0.0
          %3647 = vmatpush1.msra.mxu0 0.0
          %3648 = vmatprep.subr.mxu0 0.0
          %3649 = vmatpush1.msra.mxu0 0.0
          %3650 = vmatprep.subr.mxu0 0.0
          %3651 = vmatpush1.msra.mxu0 0.0
          %3652 = vmatprep.subr.mxu0 0.0
          %3653 = vmatpush1.msra.mxu0 0.0
          %3654 = vmatprep.subr.mxu0 0.0
          %3655 = vmatpush1.msra.mxu0 0.0
          %3656 = vmatprep.subr.mxu0 0.0
          %3657 = vmatpush1.msra.mxu0 0.0
          %3658 = vmatprep.subr.mxu0 0.0
          %3659 = vmatpush1.msra.mxu0 0.0
          %3660 = vmatprep.subr.mxu0 0.0
          %3661 = vmatpush1.msra.mxu0 0.0
          %3662 = vmatprep.subr.mxu0 0.0
          %3663 = vmatpush1.msra.mxu0 0.0
          %3664 = vmatprep.subr.mxu0 0.0
          %3665 = vmatpush1.msra.mxu0 0.0
          %3666 = vmatprep.subr.mxu0 0.0
          %3667 = vmatpush1.msra.mxu0 0.0
          %3668 = vmatprep.subr.mxu0 0.0
          %3669 = vmatpush1.msra.mxu0 0.0
          %3670 = vmatprep.subr.mxu0 0.0
          %3671 = vmatpush1.msra.mxu0 0.0
          %3672 = vmatprep.subr.mxu0 0.0
          %3673 = vmatpush1.msra.mxu0 0.0
          %3674 = vmatprep.subr.mxu0 0.0
          %3675 = vmatpush1.msra.mxu0 %v3642
          %3676 = vmatprep.subr.mxu0 0.0
          %3677 = vmatpush2.msra.mxu0 0.0
          %3678 = vmatprep.subr.mxu0 0.0
          %3679 = vmatpush2.msra.mxu0 0.0
          %3680 = vmatprep.subr.mxu0 0.0
          %3681 = vmatpush2.msra.mxu0 0.0
          %3682 = vmatprep.subr.mxu0 0.0
          %3683 = vmatpush2.msra.mxu0 0.0
          %3684 = vmatprep.subr.mxu0 0.0
          %3685 = vmatpush2.msra.mxu0 0.0
          %3686 = vmatprep.subr.mxu0 0.0
          %3687 = vmatpush2.msra.mxu0 0.0
          %3688 = vmatprep.subr.mxu0 0.0
          %3689 = vmatpush2.msra.mxu0 0.0
          %3690 = vmatprep.subr.mxu0 0.0
          %3691 = vmatpush2.msra.mxu0 0.0
          %3692 = vmatprep.subr.mxu0 0.0
          %3693 = vmatpush2.msra.mxu0 0.0
          %3694 = vmatprep.subr.mxu0 0.0
          %3695 = vmatpush2.msra.mxu0 0.0
          %3696 = vmatprep.subr.mxu0 0.0
          %3697 = vmatpush2.msra.mxu0 0.0
          %3698 = vmatprep.subr.mxu0 0.0
          %3699 = vmatpush2.msra.mxu0 0.0
          %3700 = vmatprep.subr.mxu0 0.0
          %3701 = vmatpush2.msra.mxu0 0.0
          %3702 = vmatprep.subr.mxu0 0.0
          %3703 = vmatpush2.msra.mxu0 0.0
          %3704 = vmatprep.subr.mxu0 0.0
          %3705 = vmatpush2.msra.mxu0 0.0
          %3706 = vmatprep.subr.mxu0 0.0
          %3707 = vmatpush2.msra.mxu0 0.0
          %3708 = vmatprep.mubr.f32.mxu0 0.0
          %3709 = vmatmul.mubr.f32.gmra.mxu0 %v3629
          %v3710 = vpop.f32.mrf.mxu0
          %v3711 = vadd.f32 0.0, %v3710
          %v3712 = vpop.f32.mrf.mxu0
          %3713 = vmatprep.mubr.f32.mxu0 0.0
          %3714 = vmatmul.mubr.f32.gmra.mxu0 %v3632
          %v3715 = vpop.f32.mrf.mxu0
          %v3716 = vadd.f32 0.0, %v3715
          %v3717 = vpop.f32.mrf.mxu0
          %3718 = vmatprep.mubr.f32.mxu0 0.0
          %3719 = vmatmul.mubr.f32.gmra.mxu0 %v3635
          %v3720 = vpop.f32.mrf.mxu0
          %v3721 = vadd.f32 0.0, %v3720
          %v3722 = vpop.f32.mrf.mxu0
          %3723 = vmatprep.mubr.f32.mxu0 0.0
          %3724 = vmatmul.mubr.f32.gmra.mxu0 %v3638
          %v3725 = vpop.f32.mrf.mxu0
          %v3726 = vadd.f32 0.0, %v3725
          %v3727 = vpop.f32.mrf.mxu0
          %3728 = vdwg.mxu0
          %v3730 = vsel %vm3627, %v3615, 0
          %v3733 = vsel %vm3627, %v3616, 0
          %v3736 = vsel %vm3627, %v3617, 0
          %v3739 = vsel %vm3627, %v3618, 0
          %v3742 = vsel %vm3640, %v3619, 0
          %3744 = vmatprep.subr.mxu0 0.0
          %3745 = vmatpush1.msra.mxu0 0.0
          %3746 = vmatprep.subr.mxu0 0.0
          %3747 = vmatpush1.msra.mxu0 0.0
          %3748 = vmatprep.subr.mxu0 0.0
          %3749 = vmatpush1.msra.mxu0 0.0
          %3750 = vmatprep.subr.mxu0 0.0
          %3751 = vmatpush1.msra.mxu0 0.0
          %3752 = vmatprep.subr.mxu0 0.0
          %3753 = vmatpush1.msra.mxu0 0.0
          %3754 = vmatprep.subr.mxu0 0.0
          %3755 = vmatpush1.msra.mxu0 0.0
          %3756 = vmatprep.subr.mxu0 0.0
          %3757 = vmatpush1.msra.mxu0 0.0
          %3758 = vmatprep.subr.mxu0 0.0
          %3759 = vmatpush1.msra.mxu0 0.0
          %3760 = vmatprep.subr.mxu0 0.0
          %3761 = vmatpush1.msra.mxu0 0.0
          %3762 = vmatprep.subr.mxu0 0.0
          %3763 = vmatpush1.msra.mxu0 0.0
          %3764 = vmatprep.subr.mxu0 0.0
          %3765 = vmatpush1.msra.mxu0 0.0
          %3766 = vmatprep.subr.mxu0 0.0
          %3767 = vmatpush1.msra.mxu0 0.0
          %3768 = vmatprep.subr.mxu0 0.0
          %3769 = vmatpush1.msra.mxu0 0.0
          %3770 = vmatprep.subr.mxu0 0.0
          %3771 = vmatpush1.msra.mxu0 0.0
          %3772 = vmatprep.subr.mxu0 0.0
          %3773 = vmatpush1.msra.mxu0 0.0
          %3774 = vmatprep.subr.mxu0 0.0
          %3775 = vmatpush1.msra.mxu0 %v3742
          %3776 = vmatprep.subr.mxu0 0.0
          %3777 = vmatpush2.msra.mxu0 0.0
          %3778 = vmatprep.subr.mxu0 0.0
          %3779 = vmatpush2.msra.mxu0 0.0
          %3780 = vmatprep.subr.mxu0 0.0
          %3781 = vmatpush2.msra.mxu0 0.0
          %3782 = vmatprep.subr.mxu0 0.0
          %3783 = vmatpush2.msra.mxu0 0.0
          %3784 = vmatprep.subr.mxu0 0.0
          %3785 = vmatpush2.msra.mxu0 0.0
          %3786 = vmatprep.subr.mxu0 0.0
          %3787 = vmatpush2.msra.mxu0 0.0
          %3788 = vmatprep.subr.mxu0 0.0
          %3789 = vmatpush2.msra.mxu0 0.0
          %3790 = vmatprep.subr.mxu0 0.0
          %3791 = vmatpush2.msra.mxu0 0.0
          %3792 = vmatprep.subr.mxu0 0.0
          %3793 = vmatpush2.msra.mxu0 0.0
          %3794 = vmatprep.subr.mxu0 0.0
          %3795 = vmatpush2.msra.mxu0 0.0
          %3796 = vmatprep.subr.mxu0 0.0
          %3797 = vmatpush2.msra.mxu0 0.0
          %3798 = vmatprep.subr.mxu0 0.0
          %3799 = vmatpush2.msra.mxu0 0.0
          %3800 = vmatprep.subr.mxu0 0.0
          %3801 = vmatpush2.msra.mxu0 0.0
          %3802 = vmatprep.subr.mxu0 0.0
          %3803 = vmatpush2.msra.mxu0 0.0
          %3804 = vmatprep.subr.mxu0 0.0
          %3805 = vmatpush2.msra.mxu0 0.0
          %3806 = vmatprep.subr.mxu0 0.0
          %3807 = vmatpush2.msra.mxu0 0.0
          %3808 = vmatprep.mubr.f32.mxu0 0.0
          %3809 = vmatmul.mubr.f32.gmra.mxu0 %v3730
          %v3810 = vpop.f32.mrf.mxu0
          %v3811 = vadd.f32 %v3711, %v3810
          %v3812 = vpop.f32.mrf.mxu0
          %3813 = vmatprep.mubr.f32.mxu0 0.0
          %3814 = vmatmul.mubr.f32.gmra.mxu0 %v3733
          %v3815 = vpop.f32.mrf.mxu0
          %v3816 = vadd.f32 %v3716, %v3815
          %v3817 = vpop.f32.mrf.mxu0
          %3818 = vmatprep.mubr.f32.mxu0 0.0
          %3819 = vmatmul.mubr.f32.gmra.mxu0 %v3736
          %v3820 = vpop.f32.mrf.mxu0
          %v3821 = vadd.f32 %v3721, %v3820
          %v3822 = vpop.f32.mrf.mxu0
          %3823 = vmatprep.mubr.f32.mxu0 0.0
          %3824 = vmatmul.mubr.f32.gmra.mxu0 %v3739
          %v3825 = vpop.f32.mrf.mxu0
          %v3826 = vadd.f32 %v3726, %v3825
          %v3827 = vpop.f32.mrf.mxu0
          %3828 = vdwg.mxu0
          %s3829 = scalar_lea.vmem [#allocation2], 64
          %v3830 = vld [vmem:[%s3829] sm:$0xff]
          %v3831 = vld [vmem:[%s3829 + $0x8] sm:$0xff]
          %v3832 = vld [vmem:[%s3829 + $0x10] sm:$0xff]
          %v3833 = vld [vmem:[%s3829 + $0x18] sm:$0xff]
          %s3834 = scalar_lea.vmem %s5, 16
          %v3835 = vld [vmem:[%s3834] sm:$0x3f]
          %v3837 = vsel %vm3627, %v3830, 0
          %v3840 = vsel %vm3627, %v3831, 0
          %v3843 = vsel %vm3627, %v3832, 0
          %v3846 = vsel %vm3627, %v3833, 0
          %v3849 = vsel %vm3640, %v3835, 0
          %3851 = vmatprep.subr.mxu0 0.0
          %3852 = vmatpush1.msra.mxu0 0.0
          %3853 = vmatprep.subr.mxu0 0.0
          %3854 = vmatpush1.msra.mxu0 0.0
          %3855 = vmatprep.subr.mxu0 0.0
          %3856 = vmatpush1.msra.mxu0 0.0
          %3857 = vmatprep.subr.mxu0 0.0
          %3858 = vmatpush1.msra.mxu0 0.0
          %3859 = vmatprep.subr.mxu0 0.0
          %3860 = vmatpush1.msra.mxu0 0.0
          %3861 = vmatprep.subr.mxu0 0.0
          %3862 = vmatpush1.msra.mxu0 0.0
          %3863 = vmatprep.subr.mxu0 0.0
          %3864 = vmatpush1.msra.mxu0 0.0
          %3865 = vmatprep.subr.mxu0 0.0
          %3866 = vmatpush1.msra.mxu0 0.0
          %3867 = vmatprep.subr.mxu0 0.0
          %3868 = vmatpush1.msra.mxu0 0.0
          %3869 = vmatprep.subr.mxu0 0.0
          %3870 = vmatpush1.msra.mxu0 0.0
          %3871 = vmatprep.subr.mxu0 0.0
          %3872 = vmatpush1.msra.mxu0 0.0
          %3873 = vmatprep.subr.mxu0 0.0
          %3874 = vmatpush1.msra.mxu0 0.0
          %3875 = vmatprep.subr.mxu0 0.0
          %3876 = vmatpush1.msra.mxu0 0.0
          %3877 = vmatprep.subr.mxu0 0.0
          %3878 = vmatpush1.msra.mxu0 0.0
          %3879 = vmatprep.subr.mxu0 0.0
          %3880 = vmatpush1.msra.mxu0 0.0
          %3881 = vmatprep.subr.mxu0 0.0
          %3882 = vmatpush1.msra.mxu0 %v3849
          %3883 = vmatprep.subr.mxu0 0.0
          %3884 = vmatpush2.msra.mxu0 0.0
          %3885 = vmatprep.subr.mxu0 0.0
          %3886 = vmatpush2.msra.mxu0 0.0
          %3887 = vmatprep.subr.mxu0 0.0
          %3888 = vmatpush2.msra.mxu0 0.0
          %3889 = vmatprep.subr.mxu0 0.0
          %3890 = vmatpush2.msra.mxu0 0.0
          %3891 = vmatprep.subr.mxu0 0.0
          %3892 = vmatpush2.msra.mxu0 0.0
          %3893 = vmatprep.subr.mxu0 0.0
          %3894 = vmatpush2.msra.mxu0 0.0
          %3895 = vmatprep.subr.mxu0 0.0
          %3896 = vmatpush2.msra.mxu0 0.0
          %3897 = vmatprep.subr.mxu0 0.0
          %3898 = vmatpush2.msra.mxu0 0.0
          %3899 = vmatprep.subr.mxu0 0.0
          %3900 = vmatpush2.msra.mxu0 0.0
          %3901 = vmatprep.subr.mxu0 0.0
          %3902 = vmatpush2.msra.mxu0 0.0
          %3903 = vmatprep.subr.mxu0 0.0
          %3904 = vmatpush2.msra.mxu0 0.0
          %3905 = vmatprep.subr.mxu0 0.0
          %3906 = vmatpush2.msra.mxu0 0.0
          %3907 = vmatprep.subr.mxu0 0.0
          %3908 = vmatpush2.msra.mxu0 0.0
          %3909 = vmatprep.subr.mxu0 0.0
          %3910 = vmatpush2.msra.mxu0 0.0
          %3911 = vmatprep.subr.mxu0 0.0
          %3912 = vmatpush2.msra.mxu0 0.0
          %3913 = vmatprep.subr.mxu0 0.0
          %3914 = vmatpush2.msra.mxu0 0.0
          %3915 = vmatprep.mubr.f32.mxu0 0.0
          %3916 = vmatmul.mubr.f32.gmra.mxu0 %v3837
          %v3917 = vpop.f32.mrf.mxu0
          %v3918 = vadd.f32 0.0, %v3917
          %v3919 = vpop.f32.mrf.mxu0
          %3920 = vmatprep.mubr.f32.mxu0 0.0
          %3921 = vmatmul.mubr.f32.gmra.mxu0 %v3840
          %v3922 = vpop.f32.mrf.mxu0
          %v3923 = vadd.f32 0.0, %v3922
          %v3924 = vpop.f32.mrf.mxu0
          %3925 = vmatprep.mubr.f32.mxu0 0.0
          %3926 = vmatmul.mubr.f32.gmra.mxu0 %v3843
          %v3927 = vpop.f32.mrf.mxu0
          %v3928 = vadd.f32 0.0, %v3927
          %v3929 = vpop.f32.mrf.mxu0
          %3930 = vmatprep.mubr.f32.mxu0 0.0
          %3931 = vmatmul.mubr.f32.gmra.mxu0 %v3846
          %v3932 = vpop.f32.mrf.mxu0
          %v3933 = vadd.f32 0.0, %v3932
          %v3934 = vpop.f32.mrf.mxu0
          %3935 = vdwg.mxu0
          %v3936 = vadd.f32 %v3811, %v3918
          %v3937 = vadd.f32 %v3816, %v3923
          %v3938 = vadd.f32 %v3821, %v3928
          %v3939 = vadd.f32 %v3826, %v3933
          %s3940 = scalar_lea.vmem [#allocation2], 96
          %v3941 = vld [vmem:[%s3940] sm:$0xff]
          %v3942 = vld [vmem:[%s3940 + $0x8] sm:$0xff]
          %v3943 = vld [vmem:[%s3940 + $0x10] sm:$0xff]
          %v3944 = vld [vmem:[%s3940 + $0x18] sm:$0xff]
          %s3945 = scalar_lea.vmem %s5, 24
          %v3946 = vld [vmem:[%s3945] sm:$0x3f]
          %v3948 = vsel %vm3627, %v3941, 0
          %v3951 = vsel %vm3627, %v3942, 0
          %v3954 = vsel %vm3627, %v3943, 0
          %v3957 = vsel %vm3627, %v3944, 0
          %v3960 = vsel %vm3640, %v3946, 0
          %3962 = vmatprep.subr.mxu0 0.0
          %3963 = vmatpush1.msra.mxu0 0.0
          %3964 = vmatprep.subr.mxu0 0.0
          %3965 = vmatpush1.msra.mxu0 0.0
          %3966 = vmatprep.subr.mxu0 0.0
          %3967 = vmatpush1.msra.mxu0 0.0
          %3968 = vmatprep.subr.mxu0 0.0
          %3969 = vmatpush1.msra.mxu0 0.0
          %3970 = vmatprep.subr.mxu0 0.0
          %3971 = vmatpush1.msra.mxu0 0.0
          %3972 = vmatprep.subr.mxu0 0.0
          %3973 = vmatpush1.msra.mxu0 0.0
          %3974 = vmatprep.subr.mxu0 0.0
          %3975 = vmatpush1.msra.mxu0 0.0
          %3976 = vmatprep.subr.mxu0 0.0
          %3977 = vmatpush1.msra.mxu0 0.0
          %3978 = vmatprep.subr.mxu0 0.0
          %3979 = vmatpush1.msra.mxu0 0.0
          %3980 = vmatprep.subr.mxu0 0.0
          %3981 = vmatpush1.msra.mxu0 0.0
          %3982 = vmatprep.subr.mxu0 0.0
          %3983 = vmatpush1.msra.mxu0 0.0
          %3984 = vmatprep.subr.mxu0 0.0
          %3985 = vmatpush1.msra.mxu0 0.0
          %3986 = vmatprep.subr.mxu0 0.0
          %3987 = vmatpush1.msra.mxu0 0.0
          %3988 = vmatprep.subr.mxu0 0.0
          %3989 = vmatpush1.msra.mxu0 0.0
          %3990 = vmatprep.subr.mxu0 0.0
          %3991 = vmatpush1.msra.mxu0 0.0
          %3992 = vmatprep.subr.mxu0 0.0
          %3993 = vmatpush1.msra.mxu0 %v3960
          %3994 = vmatprep.subr.mxu0 0.0
          %3995 = vmatpush2.msra.mxu0 0.0
          %3996 = vmatprep.subr.mxu0 0.0
          %3997 = vmatpush2.msra.mxu0 0.0
          %3998 = vmatprep.subr.mxu0 0.0
          %3999 = vmatpush2.msra.mxu0 0.0
          %4000 = vmatprep.subr.mxu0 0.0
          %4001 = vmatpush2.msra.mxu0 0.0
          %4002 = vmatprep.subr.mxu0 0.0
          %4003 = vmatpush2.msra.mxu0 0.0
          %4004 = vmatprep.subr.mxu0 0.0
          %4005 = vmatpush2.msra.mxu0 0.0
          %4006 = vmatprep.subr.mxu0 0.0
          %4007 = vmatpush2.msra.mxu0 0.0
          %4008 = vmatprep.subr.mxu0 0.0
          %4009 = vmatpush2.msra.mxu0 0.0
          %4010 = vmatprep.subr.mxu0 0.0
          %4011 = vmatpush2.msra.mxu0 0.0
          %4012 = vmatprep.subr.mxu0 0.0
          %4013 = vmatpush2.msra.mxu0 0.0
          %4014 = vmatprep.subr.mxu0 0.0
          %4015 = vmatpush2.msra.mxu0 0.0
          %4016 = vmatprep.subr.mxu0 0.0
          %4017 = vmatpush2.msra.mxu0 0.0
          %4018 = vmatprep.subr.mxu0 0.0
          %4019 = vmatpush2.msra.mxu0 0.0
          %4020 = vmatprep.subr.mxu0 0.0
          %4021 = vmatpush2.msra.mxu0 0.0
          %4022 = vmatprep.subr.mxu0 0.0
          %4023 = vmatpush2.msra.mxu0 0.0
          %4024 = vmatprep.subr.mxu0 0.0
          %4025 = vmatpush2.msra.mxu0 0.0
          %4026 = vmatprep.mubr.f32.mxu0 0.0
          %4027 = vmatmul.mubr.f32.gmra.mxu0 %v3948
          %v4028 = vpop.f32.mrf.mxu0
          %v4029 = vadd.f32 0.0, %v4028
          %v4030 = vpop.f32.mrf.mxu0
          %4031 = vmatprep.mubr.f32.mxu0 0.0
          %4032 = vmatmul.mubr.f32.gmra.mxu0 %v3951
          %v4033 = vpop.f32.mrf.mxu0
          %v4034 = vadd.f32 0.0, %v4033
          %v4035 = vpop.f32.mrf.mxu0
          %4036 = vmatprep.mubr.f32.mxu0 0.0
          %4037 = vmatmul.mubr.f32.gmra.mxu0 %v3954
          %v4038 = vpop.f32.mrf.mxu0
          %v4039 = vadd.f32 0.0, %v4038
          %v4040 = vpop.f32.mrf.mxu0
          %4041 = vmatprep.mubr.f32.mxu0 0.0
          %4042 = vmatmul.mubr.f32.gmra.mxu0 %v3957
          %v4043 = vpop.f32.mrf.mxu0
          %v4044 = vadd.f32 0.0, %v4043
          %v4045 = vpop.f32.mrf.mxu0
          %4046 = vdwg.mxu0
          %v4047 = vadd.f32 %v3936, %v4029
          %v4048 = vadd.f32 %v3937, %v4034
          %v4049 = vadd.f32 %v3938, %v4039
          %v4050 = vadd.f32 %v3939, %v4044
          %v4051 = vld [vmem:[%s476] sm:$0xff]
          %v4052 = vld [vmem:[%s476 + $0x8] sm:$0xff]
          %v4053 = vld [vmem:[%s476 + $0x10] sm:$0xff]
          %v4054 = vld [vmem:[%s476 + $0x18] sm:$0xff]
          %4056 = vset.pattern.permute.xlu0 0
          %4057 = vperm.xlu0 %4056, %v4051
          %v4058 = vpop.permute.xlu0 %4057
          %4061 = vset.pattern.permute.xlu0 0
          %4062 = vperm.xlu0 %4061, %v4052
          %v4063 = vpop.permute.xlu0 %4062
          %4066 = vset.pattern.permute.xlu0 0
          %4067 = vperm.xlu0 %4066, %v4053
          %v4068 = vpop.permute.xlu0 %4067
          %4071 = vset.pattern.permute.xlu0 0
          %4072 = vperm.xlu0 %4071, %v4054
          %v4073 = vpop.permute.xlu0 %4072
          %v4075 = vmul.f32 %v4047, %v4058
          %v4076 = vmul.f32 %v4048, %v4063
          %v4077 = vmul.f32 %v4049, %v4068
          %v4078 = vmul.f32 %v4050, %v4073
          %4079 = vst [vmem:[%s407] sm:$0xff] %v4075
          %4080 = vst [vmem:[%s407 + $0x8] sm:$0xff] %v4076
          %4081 = vst [vmem:[%s407 + $0x10] sm:$0xff] %v4077
          %4082 = vst [vmem:[%s407 + $0x18] sm:$0xff] %v4078
        $region52: #{tpu_custom_call.1} parent=39 // pred_fallthru
          _
        %s4083 = sand.u32 %s224, 1
        %s4084 = scalar_lea.sflag [#allocation7], %s4083
        %s4085 = sand.u32 %s224, 1
        %s4086 = smul.addr %s4085, 32
        %s4087 = scalar_lea.vmem [#allocation6], %s4086
        // Predicated region
        $region53: #{tpu_custom_call.1} parent=39 // pred_check
          %p4088 = pneg %p234
        $region54: #{tpu_custom_call.1} parent=39 // pred_check_branch
          %4090 = sbr.rel (%p4088) target = $region56
        $region55: #{tpu_custom_call.1} parent=39 // pred_region
          %s4091 = smul.u32 4, %s35
          %s4093 = ssub.s32 512, 512
          %4094 = vsyncadd %s4084, %s4093
          %s4095 = smul.addr %s4091, 128
          %s4096 = scalar_lea.hbm %s7, %s4095
          %s4097 = sshll.u32 %s4087, 4
          %s4098 = int_to_ptr.vmem [resolvable:$true] %s4097
          %4103 = dma.vmem_to_hbm [thread:$0]  %s4098, 512, %s4096, %s4084, 128, 128, 8
        $region56: #{tpu_custom_call.1} parent=39 // pred_fallthru
          _
      $region40: #{tpu_custom_call.1} parent=5 // pred_fallthru
        _
      %p4104 = scmp.le.s32.totalorder 2, %s26
      // Predicated region
      $region57: #{tpu_custom_call.1} parent=5 // pred_check
        %p4105 = pneg %p4104
      $region58: #{tpu_custom_call.1} parent=5 // pred_check_branch
        %4107 = sbr.rel (%p4105) target = $region60
      $region59: #{tpu_custom_call.1} parent=5 // pred_region
        %s4108 = ssub.s32 %s26, 2
        // Predicated region
        $region61: #{tpu_custom_call.1} parent=59 // pred_check
          %p4109 = pneg %p240
        $region62: #{tpu_custom_call.1} parent=59 // pred_check_branch
          %4111 = sbr.rel (%p4109) target = $region64
        $region63: #{tpu_custom_call.1} parent=59 // pred_region
          %s4112 = sand.u32 %s225, 1
          %s4113 = scalar_lea.sflag [#allocation7], %s4112
          %s4114 = sand.u32 %s225, 1
          %s4115 = smul.addr %s4114, 32
          %s4116 = scalar_lea.vmem [#allocation6], %s4115
          %4117 = dma.done %s4113, 512
        $region64: #{tpu_custom_call.1} parent=59 // pred_fallthru
          _
      $region60: #{tpu_custom_call.1} parent=5 // pred_fallthru
        _
    $region6: #{tpu_custom_call.1} parent=1 // loop_footer
      %s30 = sadd.s32 1, %s26
    $region7: #{tpu_custom_call.1} parent=1 // loop_footer_branch
      %25 = sbr.rel target = $region3
    $region8: #{tpu_custom_call.1} parent=1 // loop_exit
      _
    %4118 = vsyncpa [#allocation7], 1
    %s4119 = scalar_lea.sflag [#allocation7], 1
    %4120 = vsyncpa %s4119, 1

</llo_original>
